<compile_context>
chip_gen: v5e
topology: v5e:2x2
jax: 0.10.0
libtpu: 0.0.40
codegen_flags: <defaults>
</compile_context>

<pallas_src>
import jax
import jax.numpy as jnp
import numpy as np
from jax import lax
from jax.experimental import pallas as pl
from jax.experimental.pallas import tpu as pltpu

GROUPS = 32        # nn.GroupNorm(32, 1280)
CH = 1280
EPS = 1e-5         # torch GroupNorm default


def disc_head_kernel(x_ref, wmask_ref, gmask_ref, gwsum_ref, bias_ref, o_ref):
    """Fused, folded GroupNorm(32, 1280) + Linear(1280 -> 1) over one batch block.

    x_ref:     (BB, C, HW) bf16 features, native NCHW layout (HW on lanes)
    wmask_ref: (2G, C)     bf16: rows [0:G)  = group-mask * bf16_hi(gamma*w)
                                 rows [G:2G) = group-mask * bf16_lo(gamma*w)
    gmask_ref: (G, C)      f32 one-hot group membership
    gwsum_ref: (G, 1)      f32 per-group sum of gamma*w (host precomputed)
    bias_ref:  (1, 1)      f32 in SMEM: sum_c beta_c*w_c + fc_bias
    o_ref:     (BB, 1, HW) f32 logits per spatial location (lane-dense)
    """
    g = GROUPS
    bb, c, hw = x_ref.shape
    inv_cnt = 1.0 / float(hw * (c // g))   # NOTE: assumes the block covers full HW
    bias0 = bias_ref[0, 0]

    wmask = wmask_ref[...]                 # (2G, C) bf16
    gmask = gmask_ref[...]                 # (G, C)  f32
    gwsum = gwsum_ref[...]                 # (G, 1)  f32

    def body(i, carry):
        xb = x_ref[i]                                              # (C, HW) bf16
        xf = xb.astype(jnp.float32)
        # Statistics off the MXU: VPU square + XLU lane reductions over HW.
        ch_sum = jnp.sum(xf, axis=-1, keepdims=True)               # (C, 1)
        ch_sq = jnp.sum(xf * xf, axis=-1, keepdims=True)           # (C, 1)
        # Tiny per-group matvecs (negligible MXU work).
        s_g = jnp.dot(gmask, ch_sum, preferred_element_type=jnp.float32)   # (G, 1)
        ss_g = jnp.dot(gmask, ch_sq, preferred_element_type=jnp.float32)   # (G, 1)

        mean_g = s_g * inv_cnt
        var_g = jnp.maximum(ss_g * inv_cnt - mean_g * mean_g, 0.0)  # clamp cancellation
        inv_g = lax.rsqrt(var_g + EPS)                              # (G, 1)

        # Weighted projection: single bf16 MXU pass (hi/lo stacked), f32 accum.
        r = jnp.dot(wmask, xb, preferred_element_type=jnp.float32)  # (2G, HW)
        p = r[:g, :] + r[g:, :]                                     # (G, HW)

        y = jnp.sum(inv_g * p, axis=0, keepdims=True)               # (1, HW)
        corr = jnp.sum(inv_g * mean_g * gwsum)                      # scalar
        o_ref[i] = y + (bias0 - corr)                               # lane-dense store
        return carry

    lax.fori_loop(0, bb, body, 0)


def _round_up(n, m):
    return ((n + m - 1) // m) * m


def discriminator_head(feats_nchw, gamma, beta, fc_w, fc_b, batch_block=None):
    """GroupNorm + per-pixel Linear head. feats_nchw: (B, 1280, H, W) -> (B, H, W)."""
    B, C, H, W = feats_nchw.shape
    assert C == CH
    HW = H * W

    # bf16 on the wire (half the HBM bytes, native NCHW, no transpose).
    # NOTE: relies on this convert fusing into the encoder's final elementwise op;
    # feed f32 directly if it ever materializes as a standalone convert.
    x = feats_nchw.reshape(B, C, HW).astype(jnp.bfloat16)

    cpg = C // GROUPS
    gid = jnp.arange(C) // cpg
    gmask = (gid[None, :] == jnp.arange(GROUPS)[:, None]).astype(jnp.float32)  # (G, C)

    gw = gamma.astype(jnp.float32) * fc_w.astype(jnp.float32)                  # (C,)
    gw_hi = gw.astype(jnp.bfloat16)
    gw_lo = (gw - gw_hi.astype(jnp.float32)).astype(jnp.bfloat16)
    # (2G, C) bf16 stacked hi/lo weighted masks (exact: one-hot * bf16 value).
    wmask = jnp.concatenate(
        [gmask * gw_hi.astype(jnp.float32)[None, :],
         gmask * gw_lo.astype(jnp.float32)[None, :]], axis=0).astype(jnp.bfloat16)

    gw_eff = gw_hi.astype(jnp.float32) + gw_lo.astype(jnp.float32)
    gwsum = gw_eff.reshape(GROUPS, cpg).sum(axis=1).reshape(GROUPS, 1)          # (G, 1)

    bias0 = (jnp.sum(beta.astype(jnp.float32) * fc_w.astype(jnp.float32))
             + fc_b.astype(jnp.float32)[0]).reshape(1, 1)                       # (1, 1)

    if batch_block is None:
        # VMEM-aware batch block: double-buffered input/output blocks + constant
        # operands + per-iteration f32 temporaries against an explicit budget.
        vmem_budget = 24 * 1024 * 1024
        hw_pad = _round_up(HW, 128)
        fixed = (2 * (2 * GROUPS * C * 2)      # wmask bf16, double-buffered
                 + 2 * (GROUPS * C * 4)        # gmask f32, double-buffered
                 + 64 * 1024)                  # gwsum / bias / slack

        def footprint(bb):
            in_b = 2 * bb * C * HW * 2                         # dbl-buffered bf16 input
            out_b = 2 * bb * 8 * hw_pad * 4                    # dbl-buffered padded output
            temps = C * hw_pad * 4 + 2 * GROUPS * hw_pad * 4 + 256 * 1024
            return fixed + in_b + out_b + temps

        bb_cap = max(1, B // 2)    # keep >= 2 grid steps so both v7x TCs get work
        bb = 1
        for cand in range(1, bb_cap + 1):
            if B % cand == 0 and footprint(cand) <= vmem_budget:
                bb = cand
        batch_block = bb
    BB = batch_block
    assert B % BB == 0

    out = pl.pallas_call(
        disc_head_kernel,
        out_shape=jax.ShapeDtypeStruct((B, 1, HW), jnp.float32),
        grid=(B // BB,),
        in_specs=[
            pl.BlockSpec((BB, C, HW), lambda b: (b, 0, 0)),
            pl.BlockSpec((2 * GROUPS, C), lambda b: (0, 0)),
            pl.BlockSpec((GROUPS, C), lambda b: (0, 0)),
            pl.BlockSpec((GROUPS, 1), lambda b: (0, 0)),
            pl.BlockSpec(memory_space=pltpu.MemorySpace.SMEM),
        ],
        out_specs=pl.BlockSpec((BB, 1, HW), lambda b: (b, 0, 0)),
        compiler_params=pltpu.CompilerParams(
            dimension_semantics=("parallel",),
            vmem_limit_bytes=32 * 1024 * 1024,
        ),
    )(x, wmask, gmask, gwsum, bias0)

    return out.reshape(B, H, W)


def unet_encoder_stub(x, t, conv_w, time_w):
    """Deterministic stand-in for unet_encoder_forward: produces (B, 1280, H/2, W/2).

    TODO(synk): the real UNet encoder (conv_in + down_blocks + mid_block with
    cross-attention) is not translated; this stub only mimics its interface/shape.
    """
    B, Cin, H, W = x.shape
    xp = x.reshape(B, Cin, H // 2, 2, W // 2, 2).mean(axis=(3, 5))          # (B, Cin, H/2, W/2)
    feats = jnp.einsum('bchw,co->bohw', xp, conv_w)                          # 1x1 conv Cin -> 1280
    half = CH // 2
    freqs = jnp.exp(-jnp.log(10000.0) * jnp.arange(half, dtype=jnp.float32) / half)
    args = t.astype(jnp.float32)[:, None] * freqs[None, :]
    t_emb = jnp.concatenate([jnp.sin(args), jnp.cos(args)], axis=-1)         # (B, 1280)
    t_emb = jax.nn.silu(t_emb @ time_w)                                      # (B, 1280)
    feats = feats + t_emb[:, :, None, None]
    return jax.nn.silu(feats)


def groupnorm_linear_reference(feats_nchw, gamma, beta, fc_w, fc_b):
    """Pure-JAX reference of the Discriminator head (matches torch GroupNorm + Linear)."""
    B, C, H, W = feats_nchw.shape
    xg = feats_nchw.reshape(B, GROUPS, C // GROUPS, H, W).astype(jnp.float32)
    mean = xg.mean(axis=(2, 3, 4), keepdims=True)
    var = xg.var(axis=(2, 3, 4), keepdims=True)
    xn = ((xg - mean) / jnp.sqrt(var + EPS)).reshape(B, C, H, W)
    xn = xn * gamma[None, :, None, None] + beta[None, :, None, None]
    # elementwise multiply + f32 reduce (avoids default-precision matmul in the ref)
    return jnp.sum(xn * fc_w[None, :, None, None], axis=1) + fc_b


if __name__ == "__main__":
    key = jax.random.PRNGKey(0)
    k_x, k_conv, k_time, k_gamma, k_beta, k_fc = jax.random.split(key, 6)

    # Small shapes consistent with the module: latent input (B, 4, 16, 16), timestep (B,)
    B, Cin, H, W = 2, 4, 16, 16
    x = jax.random.normal(k_x, (B, Cin, H, W), dtype=jnp.float32)
    t = jnp.array([10.0, 500.0], dtype=jnp.float32)

    # Deterministic parameters.
    conv_w = jax.random.normal(k_conv, (Cin, CH), dtype=jnp.float32) * 0.1   # stub 1x1 conv
    time_w = jax.random.normal(k_time, (CH, CH), dtype=jnp.float32) * (1.0 / np.sqrt(CH))

    gamma = 1.0 + 0.1 * jax.random.normal(k_gamma, (CH,), dtype=jnp.float32)  # GroupNorm weight
    beta = 0.1 * jax.random.normal(k_beta, (CH,), dtype=jnp.float32)          # GroupNorm bias
    # fc_out: Linear(1280, 1), xavier_uniform weight, zero bias
    limit = float(np.sqrt(6.0 / (CH + 1)))
    fc_w = jax.random.uniform(k_fc, (CH,), minval=-limit, maxval=limit, dtype=jnp.float32)
    fc_b = jnp.zeros((1,), dtype=jnp.float32)

    # Forward: encoder stub (plain JAX glue) -> fused, folded GroupNorm + fc head (Pallas).
    feats = unet_encoder_stub(x, t, conv_w, time_w)                 # (B, 1280, 8, 8)
    pred = discriminator_head(feats, gamma, beta, fc_w, fc_b)       # (B, 8, 8)
    pred = jax.block_until_ready(pred)

    # Reference on the same bf16-rounded features the kernel consumes (bf16 on the
    # wire is the intended contract; all kernel arithmetic is f32 / f32-accumulated).
    feats_q = feats.astype(jnp.bfloat16).astype(jnp.float32)
    ref = jax.block_until_ready(
        groupnorm_linear_reference(feats_q, gamma, beta, fc_w, fc_b[0]))

    np.testing.assert_allclose(np.asarray(pred), np.asarray(ref), rtol=2e-4, atol=2e-4)
    print("KERNEL_OK")
</pallas_src>

<mosaic_0001>
module attributes {stable_mosaic.version = 11 : i64} {
  func.func @disc_head_kernel(%arg0: i32, %arg1: memref<1x1280x64xbf16, #tpu.memory_space<vmem>>, %arg2: memref<64x1280xbf16, #tpu.memory_space<vmem>>, %arg3: memref<32x1280xf32, #tpu.memory_space<vmem>>, %arg4: memref<32x1xf32, #tpu.memory_space<vmem>>, %arg5: memref<1x1xf32, #tpu.memory_space<smem>>, %arg6: memref<1x1x64xf32, #tpu.memory_space<vmem>>) attributes {dimension_semantics = [#tpu.dimension_semantics<parallel>], iteration_bounds = array<i64: 2>, scalar_prefetch = 0 : i64, scratch_operands = 0 : i64, tpu.core_type = #tpu.core_type<tc>, window_params = [{transform_indices = @transform_0, window_bounds = array<i64: 1, 1280, 64>}, {pipeline_mode = #tpu.pipeline_mode<synchronous>, transform_indices = @transform_1, window_bounds = array<i64: 64, 1280>}, {pipeline_mode = #tpu.pipeline_mode<synchronous>, transform_indices = @transform_2, window_bounds = array<i64: 32, 1280>}, {pipeline_mode = #tpu.pipeline_mode<synchronous>, transform_indices = @transform_3, window_bounds = array<i64: 32, 1>}, {transform_indices = @transform_4, window_bounds = array<i64: 1, 1>}, {transform_indices = @transform_5, window_bounds = array<i64: 1, 1, 64>}]} {
    %c0 = arith.constant 0 : index
    %c0_0 = arith.constant 0 : index
    %0 = memref.load %arg5[%c0, %c0_0] : memref<1x1xf32, #tpu.memory_space<smem>>
    %c0_1 = arith.constant 0 : index
    %c0_2 = arith.constant 0 : index
    %1 = vector.load %arg2[%c0_1, %c0_2] : memref<64x1280xbf16, #tpu.memory_space<vmem>>, vector<64x1280xbf16>
    %c0_3 = arith.constant 0 : index
    %c0_4 = arith.constant 0 : index
    %2 = vector.load %arg3[%c0_3, %c0_4] : memref<32x1280xf32, #tpu.memory_space<vmem>>, vector<32x1280xf32>
    %c0_5 = arith.constant 0 : index
    %c0_6 = arith.constant 0 : index
    %3 = vector.load %arg4[%c0_5, %c0_6] : memref<32x1xf32, #tpu.memory_space<vmem>>, vector<32x1xf32>
    %c0_i32 = arith.constant 0 : i32
    %4 = arith.index_cast %c0_i32 : i32 to index
    %c0_7 = arith.constant 0 : index
    %c0_8 = arith.constant 0 : index
    %5 = vector.load %arg1[%4, %c0_7, %c0_8] : memref<1x1280x64xbf16, #tpu.memory_space<vmem>>, vector<1x1280x64xbf16>
    %6 = vector.shape_cast %5 : vector<1x1280x64xbf16> to vector<1280x64xbf16>
    %7 = arith.extf %6 : vector<1280x64xbf16> to vector<1280x64xf32>
    %cst = arith.constant dense<0.000000e+00> : vector<1280xf32>
    %8 = vector.multi_reduction <add>, %7, %cst [1] : vector<1280x64xf32> to vector<1280xf32>
    %9 = vector.shape_cast %8 : vector<1280xf32> to vector<1280x1xf32>
    %10 = arith.mulf %7, %7 : vector<1280x64xf32>
    %cst_9 = arith.constant dense<0.000000e+00> : vector<1280xf32>
    %11 = vector.multi_reduction <add>, %10, %cst_9 [1] : vector<1280x64xf32> to vector<1280xf32>
    %12 = vector.shape_cast %11 : vector<1280xf32> to vector<1280x1xf32>
    %cst_10 = arith.constant dense<0.000000e+00> : vector<32x1xf32>
    %13 = tpu.matmul %2, %9, %cst_10 {dimension_numbers = #tpu.dot_dimension_numbers<[1], [0], [0], [1], [0, 0, 1, 1], [], []>} : vector<32x1280xf32>, vector<1280x1xf32>, vector<32x1xf32> -> vector<32x1xf32>
    %cst_11 = arith.constant dense<0.000000e+00> : vector<32x1xf32>
    %14 = tpu.matmul %2, %12, %cst_11 {dimension_numbers = #tpu.dot_dimension_numbers<[1], [0], [0], [1], [0, 0, 1, 1], [], []>} : vector<32x1280xf32>, vector<1280x1xf32>, vector<32x1xf32> -> vector<32x1xf32>
    %cst_12 = arith.constant 3.906250e-04 : f32
    %15 = vector.broadcast %cst_12 : f32 to vector<32x1xf32>
    %16 = arith.mulf %13, %15 : vector<32x1xf32>
    %cst_13 = arith.constant 3.906250e-04 : f32
    %17 = vector.broadcast %cst_13 : f32 to vector<32x1xf32>
    %18 = arith.mulf %14, %17 : vector<32x1xf32>
    %19 = arith.mulf %16, %16 : vector<32x1xf32>
    %20 = arith.subf %18, %19 : vector<32x1xf32>
    %cst_14 = arith.constant 0.000000e+00 : f32
    %21 = vector.broadcast %cst_14 : f32 to vector<32x1xf32>
    %22 = arith.maximumf %20, %21 : vector<32x1xf32>
    %cst_15 = arith.constant 9.99999974E-6 : f32
    %23 = vector.broadcast %cst_15 : f32 to vector<32x1xf32>
    %24 = arith.addf %22, %23 : vector<32x1xf32>
    %25 = math.rsqrt %24 : vector<32x1xf32>
    %cst_16 = arith.constant dense<0.000000e+00> : vector<64x64xf32>
    %26 = tpu.matmul %1, %6, %cst_16 {dimension_numbers = #tpu.dot_dimension_numbers<[1], [0], [0], [1], [0, 0, 1, 1], [], []>} : vector<64x1280xbf16>, vector<1280x64xbf16>, vector<64x64xf32> -> vector<64x64xf32>
    %27 = vector.extract_strided_slice %26 {offsets = [0, 0], sizes = [32, 64], strides = [1, 1]} : vector<64x64xf32> to vector<32x64xf32>
    %28 = vector.extract_strided_slice %26 {offsets = [32, 0], sizes = [32, 64], strides = [1, 1]} : vector<64x64xf32> to vector<32x64xf32>
    %29 = arith.addf %27, %28 : vector<32x64xf32>
    %30 = vector.broadcast %25 : vector<32x1xf32> to vector<32x64xf32>
    %31 = arith.mulf %30, %29 : vector<32x64xf32>
    %cst_17 = arith.constant dense<0.000000e+00> : vector<64xf32>
    %32 = vector.multi_reduction <add>, %31, %cst_17 [0] : vector<32x64xf32> to vector<64xf32>
    %33 = vector.shape_cast %32 : vector<64xf32> to vector<1x64xf32>
    %34 = arith.mulf %25, %16 : vector<32x1xf32>
    %35 = arith.mulf %34, %3 : vector<32x1xf32>
    %36 = vector.shape_cast %35 : vector<32x1xf32> to vector<1x32x1xf32>
    %cst_18 = arith.constant dense<0.000000e+00> : vector<1xf32>
    %37 = vector.multi_reduction <add>, %36, %cst_18 [1, 2] : vector<1x32x1xf32> to vector<1xf32>
    %38 = vector.shape_cast %37 : vector<1xf32> to vector<1x1x1xf32>
    %39 = vector.extract %38[0, 0, 0] : f32 from vector<1x1x1xf32>
    %40 = arith.subf %0, %39 : f32
    %41 = vector.broadcast %40 : f32 to vector<1x64xf32>
    %42 = arith.addf %33, %41 : vector<1x64xf32>
    %43 = arith.index_cast %c0_i32 : i32 to index
    %c0_19 = arith.constant 0 : index
    %c0_20 = arith.constant 0 : index
    %44 = vector.load %arg6[%43, %c0_19, %c0_20] : memref<1x1x64xf32, #tpu.memory_space<vmem>>, vector<1x1x64xf32>
    %45 = vector.shape_cast %44 : vector<1x1x64xf32> to vector<1x64xf32>
    %46 = vector.shape_cast %42 : vector<1x64xf32> to vector<1x1x64xf32>
    tpu.vector_store %arg6[%43, %c0_19, %c0_20], %46 {strides = array<i32>} : memref<1x1x64xf32, #tpu.memory_space<vmem>>, vector<1x1x64xf32>,
    %c1_i32 = arith.constant 1 : i32
    return
  }
  func.func @transform_0(%arg0: i32) -> (i32, i32, i32) {
    %c0_i32 = arith.constant 0 : i32
    %c0_i32_0 = arith.constant 0 : i32
    %c0_i32_1 = arith.constant 0 : i32
    return %arg0, %c0_i32, %c0_i32_0 : i32, i32, i32
  }
  func.func @transform_1(%arg0: i32) -> (i32, i32) {
    %c0_i32 = arith.constant 0 : i32
    %c0_i32_0 = arith.constant 0 : i32
    %c0_i32_1 = arith.constant 0 : i32
    return %c0_i32, %c0_i32_0 : i32, i32
  }
  func.func @transform_2(%arg0: i32) -> (i32, i32) {
    %c0_i32 = arith.constant 0 : i32
    %c0_i32_0 = arith.constant 0 : i32
    %c0_i32_1 = arith.constant 0 : i32
    return %c0_i32, %c0_i32_0 : i32, i32
  }
  func.func @transform_3(%arg0: i32) -> (i32, i32) {
    %c0_i32 = arith.constant 0 : i32
    %c0_i32_0 = arith.constant 0 : i32
    %c0_i32_1 = arith.constant 0 : i32
    return %c0_i32, %c0_i32_0 : i32, i32
  }
  func.func @transform_4(%arg0: i32) -> (i32, i32) {
    %c0_i32 = arith.constant 0 : i32
    %c0_i32_0 = arith.constant 0 : i32
    %c0_i32_1 = arith.constant 0 : i32
    return %c0_i32, %c0_i32_0 : i32, i32
  }
  func.func @transform_5(%arg0: i32) -> (i32, i32, i32) {
    %c0_i32 = arith.constant 0 : i32
    %c0_i32_0 = arith.constant 0 : i32
    %c0_i32_1 = arith.constant 0 : i32
    return %arg0, %c0_i32, %c0_i32_0 : i32, i32, i32
  }
}

</mosaic_0001>

<llo_original>
// kernel: tpu_custom_call.1
$region0: #{tpu_custom_call.1}
  #allocation0 [shape = 'u32[]', space=smem, size = 0x4, offset = 0x4, fixed_abs, tag = 'smem constant byte address 0x4 - core index']
  #allocation1 [shape = 'u32[72,128]{1,0:T(1,128)}', space=vmem, size = 0x9000, scoped, tag = 'internal scratch']
  #allocation2 [shape = 'f32[1,1]{1,0:T(1,128)S(6)}', space=smem, size = 0x200, scoped, tag = 'scoped memory for tpu_custom_call.1']
  %s0 = inlined_call_operand.vmem [shape: bf16[2,1280,64], index: 0, kind: input, shape index: {}]
  %s1 = inlined_call_operand.vmem [shape: bf16[64,1280], index: 1, kind: input, shape index: {}]
  %s2 = inlined_call_operand.vmem [shape: f32[32,1280], index: 2, kind: input, shape index: {}]
  %s3 = inlined_call_operand.vmem [shape: f32[32,1], index: 3, kind: input, shape index: {}]
  %s4 = inlined_call_operand.<no memory space> [shape: f32[1,1], index: 4, kind: input, shape index: {}]
  %s5 = inlined_call_operand.hbm [shape: f32[2,1,64], index: 5, kind: output, shape index: {}]
  %s6 = sld [smem:[#allocation0]]
  $region53: #{tpu_custom_call.1} parent=0
    _
  %s8 = ssub.s32 1, %s6
  %s9 = scalar_select 0, %s8, %s6
  %10 = sst [smem:[#allocation2]] %s4
  $region1: #{tpu_custom_call.1} parent=0
    #allocation3 [shape = 'u8[1024]{0}', space=vmem, size = 0x400, scoped, tag = 'output window, operand 0']
    #allocation4 [shape = 's32[2]{0}', space=sflag, size = 0x8, scoped, tag = 'scoped memory for tpu_custom_call.1']
    %11 = vsyncpa [#allocation4], 0
    %s12 = scalar_lea.sflag [#allocation4], 1
    %13 = vsyncpa %s12, 0
    loop: start=0, step=1, limit=4
    $region2: #{tpu_custom_call.1} parent=1 // loop_pre_header
      _
    $region3: #{tpu_custom_call.1} parent=1 // loop_header
      %s15 = sphi 0, %s19
      %p16 = scmp.ge.s32.totalorder %s15, 4
      %s25 = sphi 0, %s27
      %s28 = sphi 0, %s25
      %s29 = sphi 0, %s28
      %s45 = sphi 0, %s29
      %s49 = sphi 0, %s49
      %s51 = sphi 0, %s49
      %s52 = sphi 0, %s51
      %s66 = sphi 0, %s52
      %s70 = sphi 0, %s70
      %s72 = sphi 0, %s70
      %s73 = sphi 0, %s72
      %s87 = sphi 0, %s73
      %s91 = sphi 0, %s91
      %s93 = sphi 0, %s91
      %s94 = sphi 0, %s93
      %s108 = sphi 0, %s94
      %s112 = sphi 0, %s112
      %s114 = sphi 0, %s112
      %s115 = sphi 0, %s114
      %s129 = sphi 0, %s115
      %s135 = sphi 0, %s137
      %s138 = sphi 0, %s135
      %s139 = sphi 0, %s138
      %s155 = sphi 0, %s139
    $region4: #{tpu_custom_call.1} parent=1 // loop_header_branch
      %18 = sbr.rel (%p16) target = $region8
    $region5: #{tpu_custom_call.1} parent=1 // loop_body
      %s20 = ssub.s32 %s15, 1
      %s21 = ssub.s32 %s15, 2
      %s22 = sadd.s32 %s15, 1
      %s23 = ssub.s32 %s15, %s22
      %p24 = scmp.eq.s32.totalorder %s23, 0
      %s26 = sadd.s32 %s25, 1
      %s27 = scalar_select %p24, %s25, %s26
      %p30 = pneg %p24
      %p31 = scmp.eq.s32.totalorder %s15, 1
      %p32 = por %p30, %p31
      %p33 = scmp.ne.s32.totalorder %s25, %s28
      %p34 = scmp.eq.s32.totalorder %s15, 0
      %p35 = por %p33, %p34
      %p36 = scmp.ne.s32.totalorder %s25, %s28
      %p37 = scmp.eq.s32.totalorder %s20, 1
      %p38 = por %p36, %p37
      %p39 = scmp.ne.s32.totalorder %s28, %s29
      %p40 = scmp.eq.s32.totalorder %s20, 0
      %p41 = por %p39, %p40
      %p42 = scmp.ne.s32.totalorder %s28, %s29
      %p43 = scmp.eq.s32.totalorder %s21, 1
      %p44 = por %p42, %p43
      %p46 = scmp.ne.s32.totalorder %s29, %s45
      %p47 = scmp.eq.s32.totalorder %s21, 0
      %p48 = por %p46, %p47
      %s50 = sadd.s32 %s49, 1
      %p53 = scmp.eq.s32.totalorder %s15, 1
      %p54 = scmp.ne.s32.totalorder %s49, %s51
      %p55 = scmp.eq.s32.totalorder %s15, 0
      %p56 = por %p54, %p55
      %p57 = scmp.ne.s32.totalorder %s49, %s51
      %p58 = scmp.eq.s32.totalorder %s20, 1
      %p59 = por %p57, %p58
      %p60 = scmp.ne.s32.totalorder %s51, %s52
      %p61 = scmp.eq.s32.totalorder %s20, 0
      %p62 = por %p60, %p61
      %p63 = scmp.ne.s32.totalorder %s51, %s52
      %p64 = scmp.eq.s32.totalorder %s21, 1
      %p65 = por %p63, %p64
      %p67 = scmp.ne.s32.totalorder %s52, %s66
      %p68 = scmp.eq.s32.totalorder %s21, 0
      %p69 = por %p67, %p68
      %s71 = sadd.s32 %s70, 1
      %p74 = scmp.eq.s32.totalorder %s15, 1
      %p75 = scmp.ne.s32.totalorder %s70, %s72
      %p76 = scmp.eq.s32.totalorder %s15, 0
      %p77 = por %p75, %p76
      %p78 = scmp.ne.s32.totalorder %s70, %s72
      %p79 = scmp.eq.s32.totalorder %s20, 1
      %p80 = por %p78, %p79
      %p81 = scmp.ne.s32.totalorder %s72, %s73
      %p82 = scmp.eq.s32.totalorder %s20, 0
      %p83 = por %p81, %p82
      %p84 = scmp.ne.s32.totalorder %s72, %s73
      %p85 = scmp.eq.s32.totalorder %s21, 1
      %p86 = por %p84, %p85
      %p88 = scmp.ne.s32.totalorder %s73, %s87
      %p89 = scmp.eq.s32.totalorder %s21, 0
      %p90 = por %p88, %p89
      %s92 = sadd.s32 %s91, 1
      %p95 = scmp.eq.s32.totalorder %s15, 1
      %p96 = scmp.ne.s32.totalorder %s91, %s93
      %p97 = scmp.eq.s32.totalorder %s15, 0
      %p98 = por %p96, %p97
      %p99 = scmp.ne.s32.totalorder %s91, %s93
      %p100 = scmp.eq.s32.totalorder %s20, 1
      %p101 = por %p99, %p100
      %p102 = scmp.ne.s32.totalorder %s93, %s94
      %p103 = scmp.eq.s32.totalorder %s20, 0
      %p104 = por %p102, %p103
      %p105 = scmp.ne.s32.totalorder %s93, %s94
      %p106 = scmp.eq.s32.totalorder %s21, 1
      %p107 = por %p105, %p106
      %p109 = scmp.ne.s32.totalorder %s94, %s108
      %p110 = scmp.eq.s32.totalorder %s21, 0
      %p111 = por %p109, %p110
      %s113 = sadd.s32 %s112, 1
      %p116 = scmp.eq.s32.totalorder %s15, 1
      %p117 = scmp.ne.s32.totalorder %s112, %s114
      %p118 = scmp.eq.s32.totalorder %s15, 0
      %p119 = por %p117, %p118
      %p120 = scmp.ne.s32.totalorder %s112, %s114
      %p121 = scmp.eq.s32.totalorder %s20, 1
      %p122 = por %p120, %p121
      %p123 = scmp.ne.s32.totalorder %s114, %s115
      %p124 = scmp.eq.s32.totalorder %s20, 0
      %p125 = por %p123, %p124
      %p126 = scmp.ne.s32.totalorder %s114, %s115
      %p127 = scmp.eq.s32.totalorder %s21, 1
      %p128 = por %p126, %p127
      %p130 = scmp.ne.s32.totalorder %s115, %s129
      %p131 = scmp.eq.s32.totalorder %s21, 0
      %p132 = por %p130, %p131
      %s133 = ssub.s32 %s15, %s22
      %p134 = scmp.eq.s32.totalorder %s133, 0
      %s136 = sadd.s32 %s135, 1
      %s137 = scalar_select %p134, %s135, %s136
      %p140 = pneg %p134
      %p141 = scmp.eq.s32.totalorder %s15, 1
      %p142 = por %p140, %p141
      %p143 = scmp.ne.s32.totalorder %s135, %s138
      %p144 = scmp.eq.s32.totalorder %s15, 0
      %p145 = por %p143, %p144
      %p146 = scmp.ne.s32.totalorder %s135, %s138
      %p147 = scmp.eq.s32.totalorder %s20, 1
      %p148 = por %p146, %p147
      %p149 = scmp.ne.s32.totalorder %s138, %s139
      %p150 = scmp.eq.s32.totalorder %s20, 0
      %p151 = por %p149, %p150
      %p152 = scmp.ne.s32.totalorder %s138, %s139
      %p153 = scmp.eq.s32.totalorder %s21, 1
      %p154 = por %p152, %p153
      %p156 = scmp.ne.s32.totalorder %s139, %s155
      %p157 = scmp.eq.s32.totalorder %s21, 0
      %p158 = por %p156, %p157
      %p159 = scmp.le.s32.totalorder 1, %s15
      %p160 = scmp.lt.s32.totalorder %s15, 3
      %p161 = pnand %p159, %p160
      %p162 = pneg %p161
      // Predicated region
      $region9: #{tpu_custom_call.1} parent=5 // pred_check
        _
      $region10: #{tpu_custom_call.1} parent=5 // pred_check_branch
        %164 = sbr.rel (%p161) target = $region12
      $region11: #{tpu_custom_call.1} parent=5 // pred_region
        %s165 = ssub.s32 %s15, 1
        // Predicated region
        $region13: #{tpu_custom_call.1} parent=11 // pred_check
          %p166 = pneg %p62
        $region14: #{tpu_custom_call.1} parent=11 // pred_check_branch
          %168 = sbr.rel (%p166) target = $region16
        $region15: #{tpu_custom_call.1} parent=11 // pred_region
          _
        $region16: #{tpu_custom_call.1} parent=11 // pred_fallthru
          _
        // Predicated region
        $region17: #{tpu_custom_call.1} parent=11 // pred_check
          %p169 = pneg %p83
        $region18: #{tpu_custom_call.1} parent=11 // pred_check_branch
          %171 = sbr.rel (%p169) target = $region20
        $region19: #{tpu_custom_call.1} parent=11 // pred_region
          _
        $region20: #{tpu_custom_call.1} parent=11 // pred_fallthru
          _
        // Predicated region
        $region21: #{tpu_custom_call.1} parent=11 // pred_check
          %p172 = pneg %p104
        $region22: #{tpu_custom_call.1} parent=11 // pred_check_branch
          %174 = sbr.rel (%p172) target = $region24
        $region23: #{tpu_custom_call.1} parent=11 // pred_region
          _
        $region24: #{tpu_custom_call.1} parent=11 // pred_fallthru
          _
        // Predicated region
        $region25: #{tpu_custom_call.1} parent=11 // pred_check
          %p175 = pneg %p125
        $region26: #{tpu_custom_call.1} parent=11 // pred_check_branch
          %177 = sbr.rel (%p175) target = $region28
        $region27: #{tpu_custom_call.1} parent=11 // pred_region
          _
        $region28: #{tpu_custom_call.1} parent=11 // pred_fallthru
          _
      $region12: #{tpu_custom_call.1} parent=5 // pred_fallthru
        _
      %p178 = scmp.lt.s32.totalorder %s15, 2
      // Predicated region
      $region29: #{tpu_custom_call.1} parent=5 // pred_check
        %p179 = pneg %p178
      $region30: #{tpu_custom_call.1} parent=5 // pred_check_branch
        %181 = sbr.rel (%p179) target = $region32
      $region31: #{tpu_custom_call.1} parent=5 // pred_region
        // Predicated region
        $region33: #{tpu_custom_call.1} parent=31 // pred_check
          %p182 = pneg %p35
        $region34: #{tpu_custom_call.1} parent=31 // pred_check_branch
          %184 = sbr.rel (%p182) target = $region36
        $region35: #{tpu_custom_call.1} parent=31 // pred_region
          %p185 = scmp.lt.s32.totalorder %s15, 1
          %s186 = scalar_select %p185, %s15, 1
          %s187 = smul.addr %s186, 160
          %s188 = smul.addr %s187, 4
          %s189 = scalar_lea.vmem %s0, %s188
        $region36: #{tpu_custom_call.1} parent=31 // pred_fallthru
          _
      $region32: #{tpu_custom_call.1} parent=5 // pred_fallthru
        _
      %p190 = scmp.le.s32.totalorder 1, %s15
      %p191 = scmp.lt.s32.totalorder %s15, 3
      %p192 = pnand %p190, %p191
      %p193 = pneg %p192
      // Predicated region
      $region37: #{tpu_custom_call.1} parent=5 // pred_check
        _
      $region38: #{tpu_custom_call.1} parent=5 // pred_check_branch
        %195 = sbr.rel (%p192) target = $region40
      $region39: #{tpu_custom_call.1} parent=5 // pred_region
        %s196 = ssub.s32 %s15, 1
        %p197 = scmp.lt.s32.totalorder %s20, 1
        %s198 = scalar_select %p197, %s20, 1
        %s199 = smul.addr %s198, 160
        %s200 = smul.addr %s199, 4
        %s201 = scalar_lea.vmem %s0, %s200
        %p202 = pneg %p41
        %p203 = pneg %p38
        %p204 = pneg %p62
        %p205 = pneg %p59
        %p206 = pneg %p83
        %p207 = pneg %p80
        %p208 = pneg %p104
        %p209 = pneg %p101
        %p210 = pneg %p125
        %p211 = pneg %p122
        %p212 = pneg %p151
        %p213 = pneg %p148
        %s214 = sand.u32 %s138, 1
        %s215 = scalar_lea.sflag [#allocation4], %s214
        %s216 = sand.u32 %s138, 1
        %s217 = scalar_lea.vmem [#allocation3], %s216
        %p218 = scmp.lt.s32.totalorder %s20, 1
        %s219 = scalar_select %p218, %s20, 1
        %s220 = smul.addr %s219, 160
        %s221 = smul.addr %s220, 4
        %s222 = scalar_lea.vmem %s0, %s221
        %s223 = sld [smem:[#allocation2]]
        %v224 = vld [vmem:[%s1] sm:$0xff]
        %v225 = vld [vmem:[%s1 + $0x8] sm:$0xff]
        %v226 = vld [vmem:[%s1 + $0x10] sm:$0xff]
        %v227 = vld [vmem:[%s1 + $0x18] sm:$0xff]
        %v228 = vld [vmem:[%s1 + $0x20] sm:$0xff]
        %v229 = vld [vmem:[%s1 + $0x28] sm:$0xff]
        %v230 = vld [vmem:[%s1 + $0x30] sm:$0xff]
        %v231 = vld [vmem:[%s1 + $0x38] sm:$0xff]
        %v232 = vld [vmem:[%s1 + $0x40] sm:$0xff]
        %v233 = vld [vmem:[%s1 + $0x48] sm:$0xff]
        %v234 = vld [vmem:[%s1 + $0x50] sm:$0xff]
        %v235 = vld [vmem:[%s1 + $0x58] sm:$0xff]
        %v236 = vld [vmem:[%s1 + $0x60] sm:$0xff]
        %v237 = vld [vmem:[%s1 + $0x68] sm:$0xff]
        %v238 = vld [vmem:[%s1 + $0x70] sm:$0xff]
        %v239 = vld [vmem:[%s1 + $0x78] sm:$0xff]
        %v240 = vld [vmem:[%s1 + $0x80] sm:$0xff]
        %v241 = vld [vmem:[%s1 + $0x88] sm:$0xff]
        %v242 = vld [vmem:[%s1 + $0x90] sm:$0xff]
        %v243 = vld [vmem:[%s1 + $0x98] sm:$0xff]
        %v244 = vld [vmem:[%s1 + $0xa0] sm:$0xff]
        %v245 = vld [vmem:[%s1 + $0xa8] sm:$0xff]
        %v246 = vld [vmem:[%s1 + $0xb0] sm:$0xff]
        %v247 = vld [vmem:[%s1 + $0xb8] sm:$0xff]
        %v248 = vld [vmem:[%s1 + $0xc0] sm:$0xff]
        %v249 = vld [vmem:[%s1 + $0xc8] sm:$0xff]
        %v250 = vld [vmem:[%s1 + $0xd0] sm:$0xff]
        %v251 = vld [vmem:[%s1 + $0xd8] sm:$0xff]
        %v252 = vld [vmem:[%s1 + $0xe0] sm:$0xff]
        %v253 = vld [vmem:[%s1 + $0xe8] sm:$0xff]
        %v254 = vld [vmem:[%s1 + $0xf0] sm:$0xff]
        %v255 = vld [vmem:[%s1 + $0xf8] sm:$0xff]
        %v256 = vld [vmem:[%s1 + $0x100] sm:$0xff]
        %v257 = vld [vmem:[%s1 + $0x108] sm:$0xff]
        %v258 = vld [vmem:[%s1 + $0x110] sm:$0xff]
        %v259 = vld [vmem:[%s1 + $0x118] sm:$0xff]
        %v260 = vld [vmem:[%s1 + $0x120] sm:$0xff]
        %v261 = vld [vmem:[%s1 + $0x128] sm:$0xff]
        %v262 = vld [vmem:[%s1 + $0x130] sm:$0xff]
        %v263 = vld [vmem:[%s1 + $0x138] sm:$0xff]
        %v264 = vld [vmem:[%s2] sm:$0xff]
        %v265 = vld [vmem:[%s2 + $0x8] sm:$0xff]
        %v266 = vld [vmem:[%s2 + $0x10] sm:$0xff]
        %v267 = vld [vmem:[%s2 + $0x18] sm:$0xff]
        %v268 = vld [vmem:[%s2 + $0x20] sm:$0xff]
        %v269 = vld [vmem:[%s2 + $0x28] sm:$0xff]
        %v270 = vld [vmem:[%s2 + $0x30] sm:$0xff]
        %v271 = vld [vmem:[%s2 + $0x38] sm:$0xff]
        %v272 = vld [vmem:[%s2 + $0x40] sm:$0xff]
        %v273 = vld [vmem:[%s2 + $0x48] sm:$0xff]
        %v274 = vld [vmem:[%s2 + $0x50] sm:$0xff]
        %v275 = vld [vmem:[%s2 + $0x58] sm:$0xff]
        %v276 = vld [vmem:[%s2 + $0x60] sm:$0xff]
        %v277 = vld [vmem:[%s2 + $0x68] sm:$0xff]
        %v278 = vld [vmem:[%s2 + $0x70] sm:$0xff]
        %v279 = vld [vmem:[%s2 + $0x78] sm:$0xff]
        %v280 = vld [vmem:[%s2 + $0x80] sm:$0xff]
        %v281 = vld [vmem:[%s2 + $0x88] sm:$0xff]
        %v282 = vld [vmem:[%s2 + $0x90] sm:$0xff]
        %v283 = vld [vmem:[%s2 + $0x98] sm:$0xff]
        %v284 = vld [vmem:[%s2 + $0xa0] sm:$0xff]
        %v285 = vld [vmem:[%s2 + $0xa8] sm:$0xff]
        %v286 = vld [vmem:[%s2 + $0xb0] sm:$0xff]
        %v287 = vld [vmem:[%s2 + $0xb8] sm:$0xff]
        %v288 = vld [vmem:[%s2 + $0xc0] sm:$0xff]
        %v289 = vld [vmem:[%s2 + $0xc8] sm:$0xff]
        %v290 = vld [vmem:[%s2 + $0xd0] sm:$0xff]
        %v291 = vld [vmem:[%s2 + $0xd8] sm:$0xff]
        %v292 = vld [vmem:[%s2 + $0xe0] sm:$0xff]
        %v293 = vld [vmem:[%s2 + $0xe8] sm:$0xff]
        %v294 = vld [vmem:[%s2 + $0xf0] sm:$0xff]
        %v295 = vld [vmem:[%s2 + $0xf8] sm:$0xff]
        %v296 = vld [vmem:[%s2 + $0x100] sm:$0xff]
        %v297 = vld [vmem:[%s2 + $0x108] sm:$0xff]
        %v298 = vld [vmem:[%s2 + $0x110] sm:$0xff]
        %v299 = vld [vmem:[%s2 + $0x118] sm:$0xff]
        %v300 = vld [vmem:[%s2 + $0x120] sm:$0xff]
        %v301 = vld [vmem:[%s2 + $0x128] sm:$0xff]
        %v302 = vld [vmem:[%s2 + $0x130] sm:$0xff]
        %v303 = vld [vmem:[%s2 + $0x138] sm:$0xff]
        %v304 = vld [vmem:[%s3] sm:$0xff]
        %v305 = vld [vmem:[%s3 + $0x8] sm:$0xff]
        %v306 = vld [vmem:[%s3 + $0x10] sm:$0xff]
        %v307 = vld [vmem:[%s3 + $0x18] sm:$0xff]
        %v308 = vld [vmem:[%s222] sm:$0xf]
        %v309 = vld [vmem:[%s222 + $0x4] sm:$0xf]
        %v310 = vld [vmem:[%s222 + $0x8] sm:$0xf]
        %v311 = vld [vmem:[%s222 + $0xc] sm:$0xf]
        %v312 = vld [vmem:[%s222 + $0x10] sm:$0xf]
        %v313 = vld [vmem:[%s222 + $0x14] sm:$0xf]
        %v314 = vld [vmem:[%s222 + $0x18] sm:$0xf]
        %v315 = vld [vmem:[%s222 + $0x1c] sm:$0xf]
        %v316 = vld [vmem:[%s222 + $0x20] sm:$0xf]
        %v317 = vld [vmem:[%s222 + $0x24] sm:$0xf]
        %v318 = vld [vmem:[%s222 + $0x28] sm:$0xf]
        %v319 = vld [vmem:[%s222 + $0x2c] sm:$0xf]
        %v320 = vld [vmem:[%s222 + $0x30] sm:$0xf]
        %v321 = vld [vmem:[%s222 + $0x34] sm:$0xf]
        %v322 = vld [vmem:[%s222 + $0x38] sm:$0xf]
        %v323 = vld [vmem:[%s222 + $0x3c] sm:$0xf]
        %v324 = vld [vmem:[%s222 + $0x40] sm:$0xf]
        %v325 = vld [vmem:[%s222 + $0x44] sm:$0xf]
        %v326 = vld [vmem:[%s222 + $0x48] sm:$0xf]
        %v327 = vld [vmem:[%s222 + $0x4c] sm:$0xf]
        %v328 = vld [vmem:[%s222 + $0x50] sm:$0xf]
        %v329 = vld [vmem:[%s222 + $0x54] sm:$0xf]
        %v330 = vld [vmem:[%s222 + $0x58] sm:$0xf]
        %v331 = vld [vmem:[%s222 + $0x5c] sm:$0xf]
        %v332 = vld [vmem:[%s222 + $0x60] sm:$0xf]
        %v333 = vld [vmem:[%s222 + $0x64] sm:$0xf]
        %v334 = vld [vmem:[%s222 + $0x68] sm:$0xf]
        %v335 = vld [vmem:[%s222 + $0x6c] sm:$0xf]
        %v336 = vld [vmem:[%s222 + $0x70] sm:$0xf]
        %v337 = vld [vmem:[%s222 + $0x74] sm:$0xf]
        %v338 = vld [vmem:[%s222 + $0x78] sm:$0xf]
        %v339 = vld [vmem:[%s222 + $0x7c] sm:$0xf]
        %v340 = vld [vmem:[%s222 + $0x80] sm:$0xf]
        %v341 = vld [vmem:[%s222 + $0x84] sm:$0xf]
        %v342 = vld [vmem:[%s222 + $0x88] sm:$0xf]
        %v343 = vld [vmem:[%s222 + $0x8c] sm:$0xf]
        %v344 = vld [vmem:[%s222 + $0x90] sm:$0xf]
        %v345 = vld [vmem:[%s222 + $0x94] sm:$0xf]
        %v346 = vld [vmem:[%s222 + $0x98] sm:$0xf]
        %v347 = vld [vmem:[%s222 + $0x9c] sm:$0xf]
        %v348 = vld [vmem:[%s222 + $0xa0] sm:$0xf]
        %v349 = vld [vmem:[%s222 + $0xa4] sm:$0xf]
        %v350 = vld [vmem:[%s222 + $0xa8] sm:$0xf]
        %v351 = vld [vmem:[%s222 + $0xac] sm:$0xf]
        %v352 = vld [vmem:[%s222 + $0xb0] sm:$0xf]
        %v353 = vld [vmem:[%s222 + $0xb4] sm:$0xf]
        %v354 = vld [vmem:[%s222 + $0xb8] sm:$0xf]
        %v355 = vld [vmem:[%s222 + $0xbc] sm:$0xf]
        %v356 = vld [vmem:[%s222 + $0xc0] sm:$0xf]
        %v357 = vld [vmem:[%s222 + $0xc4] sm:$0xf]
        %v358 = vld [vmem:[%s222 + $0xc8] sm:$0xf]
        %v359 = vld [vmem:[%s222 + $0xcc] sm:$0xf]
        %v360 = vld [vmem:[%s222 + $0xd0] sm:$0xf]
        %v361 = vld [vmem:[%s222 + $0xd4] sm:$0xf]
        %v362 = vld [vmem:[%s222 + $0xd8] sm:$0xf]
        %v363 = vld [vmem:[%s222 + $0xdc] sm:$0xf]
        %v364 = vld [vmem:[%s222 + $0xe0] sm:$0xf]
        %v365 = vld [vmem:[%s222 + $0xe4] sm:$0xf]
        %v366 = vld [vmem:[%s222 + $0xe8] sm:$0xf]
        %v367 = vld [vmem:[%s222 + $0xec] sm:$0xf]
        %v368 = vld [vmem:[%s222 + $0xf0] sm:$0xf]
        %v369 = vld [vmem:[%s222 + $0xf4] sm:$0xf]
        %v370 = vld [vmem:[%s222 + $0xf8] sm:$0xf]
        %v371 = vld [vmem:[%s222 + $0xfc] sm:$0xf]
        %v372 = vld [vmem:[%s222 + $0x100] sm:$0xf]
        %v373 = vld [vmem:[%s222 + $0x104] sm:$0xf]
        %v374 = vld [vmem:[%s222 + $0x108] sm:$0xf]
        %v375 = vld [vmem:[%s222 + $0x10c] sm:$0xf]
        %v376 = vld [vmem:[%s222 + $0x110] sm:$0xf]
        %v377 = vld [vmem:[%s222 + $0x114] sm:$0xf]
        %v378 = vld [vmem:[%s222 + $0x118] sm:$0xf]
        %v379 = vld [vmem:[%s222 + $0x11c] sm:$0xf]
        %v380 = vld [vmem:[%s222 + $0x120] sm:$0xf]
        %v381 = vld [vmem:[%s222 + $0x124] sm:$0xf]
        %v382 = vld [vmem:[%s222 + $0x128] sm:$0xf]
        %v383 = vld [vmem:[%s222 + $0x12c] sm:$0xf]
        %v384 = vld [vmem:[%s222 + $0x130] sm:$0xf]
        %v385 = vld [vmem:[%s222 + $0x134] sm:$0xf]
        %v386 = vld [vmem:[%s222 + $0x138] sm:$0xf]
        %v387 = vld [vmem:[%s222 + $0x13c] sm:$0xf]
        %v388 = vld [vmem:[%s222 + $0x140] sm:$0xf]
        %v389 = vld [vmem:[%s222 + $0x144] sm:$0xf]
        %v390 = vld [vmem:[%s222 + $0x148] sm:$0xf]
        %v391 = vld [vmem:[%s222 + $0x14c] sm:$0xf]
        %v392 = vld [vmem:[%s222 + $0x150] sm:$0xf]
        %v393 = vld [vmem:[%s222 + $0x154] sm:$0xf]
        %v394 = vld [vmem:[%s222 + $0x158] sm:$0xf]
        %v395 = vld [vmem:[%s222 + $0x15c] sm:$0xf]
        %v396 = vld [vmem:[%s222 + $0x160] sm:$0xf]
        %v397 = vld [vmem:[%s222 + $0x164] sm:$0xf]
        %v398 = vld [vmem:[%s222 + $0x168] sm:$0xf]
        %v399 = vld [vmem:[%s222 + $0x16c] sm:$0xf]
        %v400 = vld [vmem:[%s222 + $0x170] sm:$0xf]
        %v401 = vld [vmem:[%s222 + $0x174] sm:$0xf]
        %v402 = vld [vmem:[%s222 + $0x178] sm:$0xf]
        %v403 = vld [vmem:[%s222 + $0x17c] sm:$0xf]
        %v404 = vld [vmem:[%s222 + $0x180] sm:$0xf]
        %v405 = vld [vmem:[%s222 + $0x184] sm:$0xf]
        %v406 = vld [vmem:[%s222 + $0x188] sm:$0xf]
        %v407 = vld [vmem:[%s222 + $0x18c] sm:$0xf]
        %v408 = vld [vmem:[%s222 + $0x190] sm:$0xf]
        %v409 = vld [vmem:[%s222 + $0x194] sm:$0xf]
        %v410 = vld [vmem:[%s222 + $0x198] sm:$0xf]
        %v411 = vld [vmem:[%s222 + $0x19c] sm:$0xf]
        %v412 = vld [vmem:[%s222 + $0x1a0] sm:$0xf]
        %v413 = vld [vmem:[%s222 + $0x1a4] sm:$0xf]
        %v414 = vld [vmem:[%s222 + $0x1a8] sm:$0xf]
        %v415 = vld [vmem:[%s222 + $0x1ac] sm:$0xf]
        %v416 = vld [vmem:[%s222 + $0x1b0] sm:$0xf]
        %v417 = vld [vmem:[%s222 + $0x1b4] sm:$0xf]
        %v418 = vld [vmem:[%s222 + $0x1b8] sm:$0xf]
        %v419 = vld [vmem:[%s222 + $0x1bc] sm:$0xf]
        %v420 = vld [vmem:[%s222 + $0x1c0] sm:$0xf]
        %v421 = vld [vmem:[%s222 + $0x1c4] sm:$0xf]
        %v422 = vld [vmem:[%s222 + $0x1c8] sm:$0xf]
        %v423 = vld [vmem:[%s222 + $0x1cc] sm:$0xf]
        %v424 = vld [vmem:[%s222 + $0x1d0] sm:$0xf]
        %v425 = vld [vmem:[%s222 + $0x1d4] sm:$0xf]
        %v426 = vld [vmem:[%s222 + $0x1d8] sm:$0xf]
        %v427 = vld [vmem:[%s222 + $0x1dc] sm:$0xf]
        %v428 = vld [vmem:[%s222 + $0x1e0] sm:$0xf]
        %v429 = vld [vmem:[%s222 + $0x1e4] sm:$0xf]
        %v430 = vld [vmem:[%s222 + $0x1e8] sm:$0xf]
        %v431 = vld [vmem:[%s222 + $0x1ec] sm:$0xf]
        %v432 = vld [vmem:[%s222 + $0x1f0] sm:$0xf]
        %v433 = vld [vmem:[%s222 + $0x1f4] sm:$0xf]
        %v434 = vld [vmem:[%s222 + $0x1f8] sm:$0xf]
        %v435 = vld [vmem:[%s222 + $0x1fc] sm:$0xf]
        %v436 = vld [vmem:[%s222 + $0x200] sm:$0xf]
        %v437 = vld [vmem:[%s222 + $0x204] sm:$0xf]
        %v438 = vld [vmem:[%s222 + $0x208] sm:$0xf]
        %v439 = vld [vmem:[%s222 + $0x20c] sm:$0xf]
        %v440 = vld [vmem:[%s222 + $0x210] sm:$0xf]
        %v441 = vld [vmem:[%s222 + $0x214] sm:$0xf]
        %v442 = vld [vmem:[%s222 + $0x218] sm:$0xf]
        %v443 = vld [vmem:[%s222 + $0x21c] sm:$0xf]
        %v444 = vld [vmem:[%s222 + $0x220] sm:$0xf]
        %v445 = vld [vmem:[%s222 + $0x224] sm:$0xf]
        %v446 = vld [vmem:[%s222 + $0x228] sm:$0xf]
        %v447 = vld [vmem:[%s222 + $0x22c] sm:$0xf]
        %v448 = vld [vmem:[%s222 + $0x230] sm:$0xf]
        %v449 = vld [vmem:[%s222 + $0x234] sm:$0xf]
        %v450 = vld [vmem:[%s222 + $0x238] sm:$0xf]
        %v451 = vld [vmem:[%s222 + $0x23c] sm:$0xf]
        %v452 = vld [vmem:[%s222 + $0x240] sm:$0xf]
        %v453 = vld [vmem:[%s222 + $0x244] sm:$0xf]
        %v454 = vld [vmem:[%s222 + $0x248] sm:$0xf]
        %v455 = vld [vmem:[%s222 + $0x24c] sm:$0xf]
        %v456 = vld [vmem:[%s222 + $0x250] sm:$0xf]
        %v457 = vld [vmem:[%s222 + $0x254] sm:$0xf]
        %v458 = vld [vmem:[%s222 + $0x258] sm:$0xf]
        %v459 = vld [vmem:[%s222 + $0x25c] sm:$0xf]
        %v460 = vld [vmem:[%s222 + $0x260] sm:$0xf]
        %v461 = vld [vmem:[%s222 + $0x264] sm:$0xf]
        %v462 = vld [vmem:[%s222 + $0x268] sm:$0xf]
        %v463 = vld [vmem:[%s222 + $0x26c] sm:$0xf]
        %v464 = vld [vmem:[%s222 + $0x270] sm:$0xf]
        %v465 = vld [vmem:[%s222 + $0x274] sm:$0xf]
        %v466 = vld [vmem:[%s222 + $0x278] sm:$0xf]
        %v467 = vld [vmem:[%s222 + $0x27c] sm:$0xf]
        %v468 = vunpack.c.l.bf16 %v308
        %v469 = vunpack.c.l.bf16 %v309
        %v470 = vunpack.c.l.bf16 %v310
        %v471 = vunpack.c.l.bf16 %v311
        %v472 = vunpack.c.l.bf16 %v312
        %v473 = vunpack.c.l.bf16 %v313
        %v474 = vunpack.c.l.bf16 %v314
        %v475 = vunpack.c.l.bf16 %v315
        %v476 = vunpack.c.l.bf16 %v316
        %v477 = vunpack.c.l.bf16 %v317
        %v478 = vunpack.c.l.bf16 %v318
        %v479 = vunpack.c.l.bf16 %v319
        %v480 = vunpack.c.l.bf16 %v320
        %v481 = vunpack.c.l.bf16 %v321
        %v482 = vunpack.c.l.bf16 %v322
        %v483 = vunpack.c.l.bf16 %v323
        %v484 = vunpack.c.l.bf16 %v324
        %v485 = vunpack.c.l.bf16 %v325
        %v486 = vunpack.c.l.bf16 %v326
        %v487 = vunpack.c.l.bf16 %v327
        %v488 = vunpack.c.l.bf16 %v328
        %v489 = vunpack.c.l.bf16 %v329
        %v490 = vunpack.c.l.bf16 %v330
        %v491 = vunpack.c.l.bf16 %v331
        %v492 = vunpack.c.l.bf16 %v332
        %v493 = vunpack.c.l.bf16 %v333
        %v494 = vunpack.c.l.bf16 %v334
        %v495 = vunpack.c.l.bf16 %v335
        %v496 = vunpack.c.l.bf16 %v336
        %v497 = vunpack.c.l.bf16 %v337
        %v498 = vunpack.c.l.bf16 %v338
        %v499 = vunpack.c.l.bf16 %v339
        %v500 = vunpack.c.l.bf16 %v340
        %v501 = vunpack.c.l.bf16 %v341
        %v502 = vunpack.c.l.bf16 %v342
        %v503 = vunpack.c.l.bf16 %v343
        %v504 = vunpack.c.l.bf16 %v344
        %v505 = vunpack.c.l.bf16 %v345
        %v506 = vunpack.c.l.bf16 %v346
        %v507 = vunpack.c.l.bf16 %v347
        %v508 = vunpack.c.l.bf16 %v348
        %v509 = vunpack.c.l.bf16 %v349
        %v510 = vunpack.c.l.bf16 %v350
        %v511 = vunpack.c.l.bf16 %v351
        %v512 = vunpack.c.l.bf16 %v352
        %v513 = vunpack.c.l.bf16 %v353
        %v514 = vunpack.c.l.bf16 %v354
        %v515 = vunpack.c.l.bf16 %v355
        %v516 = vunpack.c.l.bf16 %v356
        %v517 = vunpack.c.l.bf16 %v357
        %v518 = vunpack.c.l.bf16 %v358
        %v519 = vunpack.c.l.bf16 %v359
        %v520 = vunpack.c.l.bf16 %v360
        %v521 = vunpack.c.l.bf16 %v361
        %v522 = vunpack.c.l.bf16 %v362
        %v523 = vunpack.c.l.bf16 %v363
        %v524 = vunpack.c.l.bf16 %v364
        %v525 = vunpack.c.l.bf16 %v365
        %v526 = vunpack.c.l.bf16 %v366
        %v527 = vunpack.c.l.bf16 %v367
        %v528 = vunpack.c.l.bf16 %v368
        %v529 = vunpack.c.l.bf16 %v369
        %v530 = vunpack.c.l.bf16 %v370
        %v531 = vunpack.c.l.bf16 %v371
        %v532 = vunpack.c.l.bf16 %v372
        %v533 = vunpack.c.l.bf16 %v373
        %v534 = vunpack.c.l.bf16 %v374
        %v535 = vunpack.c.l.bf16 %v375
        %v536 = vunpack.c.l.bf16 %v376
        %v537 = vunpack.c.l.bf16 %v377
        %v538 = vunpack.c.l.bf16 %v378
        %v539 = vunpack.c.l.bf16 %v379
        %v540 = vunpack.c.l.bf16 %v380
        %v541 = vunpack.c.l.bf16 %v381
        %v542 = vunpack.c.l.bf16 %v382
        %v543 = vunpack.c.l.bf16 %v383
        %v544 = vunpack.c.l.bf16 %v384
        %v545 = vunpack.c.l.bf16 %v385
        %v546 = vunpack.c.l.bf16 %v386
        %v547 = vunpack.c.l.bf16 %v387
        %v548 = vunpack.c.l.bf16 %v388
        %v549 = vunpack.c.l.bf16 %v389
        %v550 = vunpack.c.l.bf16 %v390
        %v551 = vunpack.c.l.bf16 %v391
        %v552 = vunpack.c.l.bf16 %v392
        %v553 = vunpack.c.l.bf16 %v393
        %v554 = vunpack.c.l.bf16 %v394
        %v555 = vunpack.c.l.bf16 %v395
        %v556 = vunpack.c.l.bf16 %v396
        %v557 = vunpack.c.l.bf16 %v397
        %v558 = vunpack.c.l.bf16 %v398
        %v559 = vunpack.c.l.bf16 %v399
        %v560 = vunpack.c.l.bf16 %v400
        %v561 = vunpack.c.l.bf16 %v401
        %v562 = vunpack.c.l.bf16 %v402
        %v563 = vunpack.c.l.bf16 %v403
        %v564 = vunpack.c.l.bf16 %v404
        %v565 = vunpack.c.l.bf16 %v405
        %v566 = vunpack.c.l.bf16 %v406
        %v567 = vunpack.c.l.bf16 %v407
        %v568 = vunpack.c.l.bf16 %v408
        %v569 = vunpack.c.l.bf16 %v409
        %v570 = vunpack.c.l.bf16 %v410
        %v571 = vunpack.c.l.bf16 %v411
        %v572 = vunpack.c.l.bf16 %v412
        %v573 = vunpack.c.l.bf16 %v413
        %v574 = vunpack.c.l.bf16 %v414
        %v575 = vunpack.c.l.bf16 %v415
        %v576 = vunpack.c.l.bf16 %v416
        %v577 = vunpack.c.l.bf16 %v417
        %v578 = vunpack.c.l.bf16 %v418
        %v579 = vunpack.c.l.bf16 %v419
        %v580 = vunpack.c.l.bf16 %v420
        %v581 = vunpack.c.l.bf16 %v421
        %v582 = vunpack.c.l.bf16 %v422
        %v583 = vunpack.c.l.bf16 %v423
        %v584 = vunpack.c.l.bf16 %v424
        %v585 = vunpack.c.l.bf16 %v425
        %v586 = vunpack.c.l.bf16 %v426
        %v587 = vunpack.c.l.bf16 %v427
        %v588 = vunpack.c.l.bf16 %v428
        %v589 = vunpack.c.l.bf16 %v429
        %v590 = vunpack.c.l.bf16 %v430
        %v591 = vunpack.c.l.bf16 %v431
        %v592 = vunpack.c.l.bf16 %v432
        %v593 = vunpack.c.l.bf16 %v433
        %v594 = vunpack.c.l.bf16 %v434
        %v595 = vunpack.c.l.bf16 %v435
        %v596 = vunpack.c.l.bf16 %v436
        %v597 = vunpack.c.l.bf16 %v437
        %v598 = vunpack.c.l.bf16 %v438
        %v599 = vunpack.c.l.bf16 %v439
        %v600 = vunpack.c.l.bf16 %v440
        %v601 = vunpack.c.l.bf16 %v441
        %v602 = vunpack.c.l.bf16 %v442
        %v603 = vunpack.c.l.bf16 %v443
        %v604 = vunpack.c.l.bf16 %v444
        %v605 = vunpack.c.l.bf16 %v445
        %v606 = vunpack.c.l.bf16 %v446
        %v607 = vunpack.c.l.bf16 %v447
        %v608 = vunpack.c.l.bf16 %v448
        %v609 = vunpack.c.l.bf16 %v449
        %v610 = vunpack.c.l.bf16 %v450
        %v611 = vunpack.c.l.bf16 %v451
        %v612 = vunpack.c.l.bf16 %v452
        %v613 = vunpack.c.l.bf16 %v453
        %v614 = vunpack.c.l.bf16 %v454
        %v615 = vunpack.c.l.bf16 %v455
        %v616 = vunpack.c.l.bf16 %v456
        %v617 = vunpack.c.l.bf16 %v457
        %v618 = vunpack.c.l.bf16 %v458
        %v619 = vunpack.c.l.bf16 %v459
        %v620 = vunpack.c.l.bf16 %v460
        %v621 = vunpack.c.l.bf16 %v461
        %v622 = vunpack.c.l.bf16 %v462
        %v623 = vunpack.c.l.bf16 %v463
        %v624 = vunpack.c.l.bf16 %v464
        %v625 = vunpack.c.l.bf16 %v465
        %v626 = vunpack.c.l.bf16 %v466
        %v627 = vunpack.c.l.bf16 %v467
        %vm628 = vcmask 523264
        %v629 = vsel %vm628, %v468, 0.0
        %630 = vadd.xlane.f32.xlu0 %v629
        %v631 = vpop.xlane.xlu0 %630
        %v632 = vsel %vm628, %v469, 0.0
        %633 = vadd.xlane.f32.xlu0 %v632
        %v634 = vpop.xlane.xlu0 %633
        %v635 = vsel %vm628, %v470, 0.0
        %636 = vadd.xlane.f32.xlu0 %v635
        %v637 = vpop.xlane.xlu0 %636
        %v638 = vsel %vm628, %v471, 0.0
        %639 = vadd.xlane.f32.xlu0 %v638
        %v640 = vpop.xlane.xlu0 %639
        %v641 = vsel %vm628, %v472, 0.0
        %642 = vadd.xlane.f32.xlu0 %v641
        %v643 = vpop.xlane.xlu0 %642
        %v644 = vsel %vm628, %v473, 0.0
        %645 = vadd.xlane.f32.xlu0 %v644
        %v646 = vpop.xlane.xlu0 %645
        %v647 = vsel %vm628, %v474, 0.0
        %648 = vadd.xlane.f32.xlu0 %v647
        %v649 = vpop.xlane.xlu0 %648
        %v650 = vsel %vm628, %v475, 0.0
        %651 = vadd.xlane.f32.xlu0 %v650
        %v652 = vpop.xlane.xlu0 %651
        %v653 = vsel %vm628, %v476, 0.0
        %654 = vadd.xlane.f32.xlu0 %v653
        %v655 = vpop.xlane.xlu0 %654
        %v656 = vsel %vm628, %v477, 0.0
        %657 = vadd.xlane.f32.xlu0 %v656
        %v658 = vpop.xlane.xlu0 %657
        %v659 = vsel %vm628, %v478, 0.0
        %660 = vadd.xlane.f32.xlu0 %v659
        %v661 = vpop.xlane.xlu0 %660
        %v662 = vsel %vm628, %v479, 0.0
        %663 = vadd.xlane.f32.xlu0 %v662
        %v664 = vpop.xlane.xlu0 %663
        %v665 = vsel %vm628, %v480, 0.0
        %666 = vadd.xlane.f32.xlu0 %v665
        %v667 = vpop.xlane.xlu0 %666
        %v668 = vsel %vm628, %v481, 0.0
        %669 = vadd.xlane.f32.xlu0 %v668
        %v670 = vpop.xlane.xlu0 %669
        %v671 = vsel %vm628, %v482, 0.0
        %672 = vadd.xlane.f32.xlu0 %v671
        %v673 = vpop.xlane.xlu0 %672
        %v674 = vsel %vm628, %v483, 0.0
        %675 = vadd.xlane.f32.xlu0 %v674
        %v676 = vpop.xlane.xlu0 %675
        %v677 = vsel %vm628, %v484, 0.0
        %678 = vadd.xlane.f32.xlu0 %v677
        %v679 = vpop.xlane.xlu0 %678
        %v680 = vsel %vm628, %v485, 0.0
        %681 = vadd.xlane.f32.xlu0 %v680
        %v682 = vpop.xlane.xlu0 %681
        %v683 = vsel %vm628, %v486, 0.0
        %684 = vadd.xlane.f32.xlu0 %v683
        %v685 = vpop.xlane.xlu0 %684
        %v686 = vsel %vm628, %v487, 0.0
        %687 = vadd.xlane.f32.xlu0 %v686
        %v688 = vpop.xlane.xlu0 %687
        %v689 = vsel %vm628, %v488, 0.0
        %690 = vadd.xlane.f32.xlu0 %v689
        %v691 = vpop.xlane.xlu0 %690
        %v692 = vsel %vm628, %v489, 0.0
        %693 = vadd.xlane.f32.xlu0 %v692
        %v694 = vpop.xlane.xlu0 %693
        %v695 = vsel %vm628, %v490, 0.0
        %696 = vadd.xlane.f32.xlu0 %v695
        %v697 = vpop.xlane.xlu0 %696
        %v698 = vsel %vm628, %v491, 0.0
        %699 = vadd.xlane.f32.xlu0 %v698
        %v700 = vpop.xlane.xlu0 %699
        %v701 = vsel %vm628, %v492, 0.0
        %702 = vadd.xlane.f32.xlu0 %v701
        %v703 = vpop.xlane.xlu0 %702
        %v704 = vsel %vm628, %v493, 0.0
        %705 = vadd.xlane.f32.xlu0 %v704
        %v706 = vpop.xlane.xlu0 %705
        %v707 = vsel %vm628, %v494, 0.0
        %708 = vadd.xlane.f32.xlu0 %v707
        %v709 = vpop.xlane.xlu0 %708
        %v710 = vsel %vm628, %v495, 0.0
        %711 = vadd.xlane.f32.xlu0 %v710
        %v712 = vpop.xlane.xlu0 %711
        %v713 = vsel %vm628, %v496, 0.0
        %714 = vadd.xlane.f32.xlu0 %v713
        %v715 = vpop.xlane.xlu0 %714
        %v716 = vsel %vm628, %v497, 0.0
        %717 = vadd.xlane.f32.xlu0 %v716
        %v718 = vpop.xlane.xlu0 %717
        %v719 = vsel %vm628, %v498, 0.0
        %720 = vadd.xlane.f32.xlu0 %v719
        %v721 = vpop.xlane.xlu0 %720
        %v722 = vsel %vm628, %v499, 0.0
        %723 = vadd.xlane.f32.xlu0 %v722
        %v724 = vpop.xlane.xlu0 %723
        %v725 = vsel %vm628, %v500, 0.0
        %726 = vadd.xlane.f32.xlu0 %v725
        %v727 = vpop.xlane.xlu0 %726
        %v728 = vsel %vm628, %v501, 0.0
        %729 = vadd.xlane.f32.xlu0 %v728
        %v730 = vpop.xlane.xlu0 %729
        %v731 = vsel %vm628, %v502, 0.0
        %732 = vadd.xlane.f32.xlu0 %v731
        %v733 = vpop.xlane.xlu0 %732
        %v734 = vsel %vm628, %v503, 0.0
        %735 = vadd.xlane.f32.xlu0 %v734
        %v736 = vpop.xlane.xlu0 %735
        %v737 = vsel %vm628, %v504, 0.0
        %738 = vadd.xlane.f32.xlu0 %v737
        %v739 = vpop.xlane.xlu0 %738
        %v740 = vsel %vm628, %v505, 0.0
        %741 = vadd.xlane.f32.xlu0 %v740
        %v742 = vpop.xlane.xlu0 %741
        %v743 = vsel %vm628, %v506, 0.0
        %744 = vadd.xlane.f32.xlu0 %v743
        %v745 = vpop.xlane.xlu0 %744
        %v746 = vsel %vm628, %v507, 0.0
        %747 = vadd.xlane.f32.xlu0 %v746
        %v748 = vpop.xlane.xlu0 %747
        %v749 = vsel %vm628, %v508, 0.0
        %750 = vadd.xlane.f32.xlu0 %v749
        %v751 = vpop.xlane.xlu0 %750
        %v752 = vsel %vm628, %v509, 0.0
        %753 = vadd.xlane.f32.xlu0 %v752
        %v754 = vpop.xlane.xlu0 %753
        %v755 = vsel %vm628, %v510, 0.0
        %756 = vadd.xlane.f32.xlu0 %v755
        %v757 = vpop.xlane.xlu0 %756
        %v758 = vsel %vm628, %v511, 0.0
        %759 = vadd.xlane.f32.xlu0 %v758
        %v760 = vpop.xlane.xlu0 %759
        %v761 = vsel %vm628, %v512, 0.0
        %762 = vadd.xlane.f32.xlu0 %v761
        %v763 = vpop.xlane.xlu0 %762
        %v764 = vsel %vm628, %v513, 0.0
        %765 = vadd.xlane.f32.xlu0 %v764
        %v766 = vpop.xlane.xlu0 %765
        %v767 = vsel %vm628, %v514, 0.0
        %768 = vadd.xlane.f32.xlu0 %v767
        %v769 = vpop.xlane.xlu0 %768
        %v770 = vsel %vm628, %v515, 0.0
        %771 = vadd.xlane.f32.xlu0 %v770
        %v772 = vpop.xlane.xlu0 %771
        %v773 = vsel %vm628, %v516, 0.0
        %774 = vadd.xlane.f32.xlu0 %v773
        %v775 = vpop.xlane.xlu0 %774
        %v776 = vsel %vm628, %v517, 0.0
        %777 = vadd.xlane.f32.xlu0 %v776
        %v778 = vpop.xlane.xlu0 %777
        %v779 = vsel %vm628, %v518, 0.0
        %780 = vadd.xlane.f32.xlu0 %v779
        %v781 = vpop.xlane.xlu0 %780
        %v782 = vsel %vm628, %v519, 0.0
        %783 = vadd.xlane.f32.xlu0 %v782
        %v784 = vpop.xlane.xlu0 %783
        %v785 = vsel %vm628, %v520, 0.0
        %786 = vadd.xlane.f32.xlu0 %v785
        %v787 = vpop.xlane.xlu0 %786
        %v788 = vsel %vm628, %v521, 0.0
        %789 = vadd.xlane.f32.xlu0 %v788
        %v790 = vpop.xlane.xlu0 %789
        %v791 = vsel %vm628, %v522, 0.0
        %792 = vadd.xlane.f32.xlu0 %v791
        %v793 = vpop.xlane.xlu0 %792
        %v794 = vsel %vm628, %v523, 0.0
        %795 = vadd.xlane.f32.xlu0 %v794
        %v796 = vpop.xlane.xlu0 %795
        %v797 = vsel %vm628, %v524, 0.0
        %798 = vadd.xlane.f32.xlu0 %v797
        %v799 = vpop.xlane.xlu0 %798
        %v800 = vsel %vm628, %v525, 0.0
        %801 = vadd.xlane.f32.xlu0 %v800
        %v802 = vpop.xlane.xlu0 %801
        %v803 = vsel %vm628, %v526, 0.0
        %804 = vadd.xlane.f32.xlu0 %v803
        %v805 = vpop.xlane.xlu0 %804
        %v806 = vsel %vm628, %v527, 0.0
        %807 = vadd.xlane.f32.xlu0 %v806
        %v808 = vpop.xlane.xlu0 %807
        %v809 = vsel %vm628, %v528, 0.0
        %810 = vadd.xlane.f32.xlu0 %v809
        %v811 = vpop.xlane.xlu0 %810
        %v812 = vsel %vm628, %v529, 0.0
        %813 = vadd.xlane.f32.xlu0 %v812
        %v814 = vpop.xlane.xlu0 %813
        %v815 = vsel %vm628, %v530, 0.0
        %816 = vadd.xlane.f32.xlu0 %v815
        %v817 = vpop.xlane.xlu0 %816
        %v818 = vsel %vm628, %v531, 0.0
        %819 = vadd.xlane.f32.xlu0 %v818
        %v820 = vpop.xlane.xlu0 %819
        %v821 = vsel %vm628, %v532, 0.0
        %822 = vadd.xlane.f32.xlu0 %v821
        %v823 = vpop.xlane.xlu0 %822
        %v824 = vsel %vm628, %v533, 0.0
        %825 = vadd.xlane.f32.xlu0 %v824
        %v826 = vpop.xlane.xlu0 %825
        %v827 = vsel %vm628, %v534, 0.0
        %828 = vadd.xlane.f32.xlu0 %v827
        %v829 = vpop.xlane.xlu0 %828
        %v830 = vsel %vm628, %v535, 0.0
        %831 = vadd.xlane.f32.xlu0 %v830
        %v832 = vpop.xlane.xlu0 %831
        %v833 = vsel %vm628, %v536, 0.0
        %834 = vadd.xlane.f32.xlu0 %v833
        %v835 = vpop.xlane.xlu0 %834
        %v836 = vsel %vm628, %v537, 0.0
        %837 = vadd.xlane.f32.xlu0 %v836
        %v838 = vpop.xlane.xlu0 %837
        %v839 = vsel %vm628, %v538, 0.0
        %840 = vadd.xlane.f32.xlu0 %v839
        %v841 = vpop.xlane.xlu0 %840
        %v842 = vsel %vm628, %v539, 0.0
        %843 = vadd.xlane.f32.xlu0 %v842
        %v844 = vpop.xlane.xlu0 %843
        %v845 = vsel %vm628, %v540, 0.0
        %846 = vadd.xlane.f32.xlu0 %v845
        %v847 = vpop.xlane.xlu0 %846
        %v848 = vsel %vm628, %v541, 0.0
        %849 = vadd.xlane.f32.xlu0 %v848
        %v850 = vpop.xlane.xlu0 %849
        %v851 = vsel %vm628, %v542, 0.0
        %852 = vadd.xlane.f32.xlu0 %v851
        %v853 = vpop.xlane.xlu0 %852
        %v854 = vsel %vm628, %v543, 0.0
        %855 = vadd.xlane.f32.xlu0 %v854
        %v856 = vpop.xlane.xlu0 %855
        %v857 = vsel %vm628, %v544, 0.0
        %858 = vadd.xlane.f32.xlu0 %v857
        %v859 = vpop.xlane.xlu0 %858
        %v860 = vsel %vm628, %v545, 0.0
        %861 = vadd.xlane.f32.xlu0 %v860
        %v862 = vpop.xlane.xlu0 %861
        %v863 = vsel %vm628, %v546, 0.0
        %864 = vadd.xlane.f32.xlu0 %v863
        %v865 = vpop.xlane.xlu0 %864
        %v866 = vsel %vm628, %v547, 0.0
        %867 = vadd.xlane.f32.xlu0 %v866
        %v868 = vpop.xlane.xlu0 %867
        %v869 = vsel %vm628, %v548, 0.0
        %870 = vadd.xlane.f32.xlu0 %v869
        %v871 = vpop.xlane.xlu0 %870
        %v872 = vsel %vm628, %v549, 0.0
        %873 = vadd.xlane.f32.xlu0 %v872
        %v874 = vpop.xlane.xlu0 %873
        %v875 = vsel %vm628, %v550, 0.0
        %876 = vadd.xlane.f32.xlu0 %v875
        %v877 = vpop.xlane.xlu0 %876
        %v878 = vsel %vm628, %v551, 0.0
        %879 = vadd.xlane.f32.xlu0 %v878
        %v880 = vpop.xlane.xlu0 %879
        %v881 = vsel %vm628, %v552, 0.0
        %882 = vadd.xlane.f32.xlu0 %v881
        %v883 = vpop.xlane.xlu0 %882
        %v884 = vsel %vm628, %v553, 0.0
        %885 = vadd.xlane.f32.xlu0 %v884
        %v886 = vpop.xlane.xlu0 %885
        %v887 = vsel %vm628, %v554, 0.0
        %888 = vadd.xlane.f32.xlu0 %v887
        %v889 = vpop.xlane.xlu0 %888
        %v890 = vsel %vm628, %v555, 0.0
        %891 = vadd.xlane.f32.xlu0 %v890
        %v892 = vpop.xlane.xlu0 %891
        %v893 = vsel %vm628, %v556, 0.0
        %894 = vadd.xlane.f32.xlu0 %v893
        %v895 = vpop.xlane.xlu0 %894
        %v896 = vsel %vm628, %v557, 0.0
        %897 = vadd.xlane.f32.xlu0 %v896
        %v898 = vpop.xlane.xlu0 %897
        %v899 = vsel %vm628, %v558, 0.0
        %900 = vadd.xlane.f32.xlu0 %v899
        %v901 = vpop.xlane.xlu0 %900
        %v902 = vsel %vm628, %v559, 0.0
        %903 = vadd.xlane.f32.xlu0 %v902
        %v904 = vpop.xlane.xlu0 %903
        %v905 = vsel %vm628, %v560, 0.0
        %906 = vadd.xlane.f32.xlu0 %v905
        %v907 = vpop.xlane.xlu0 %906
        %v908 = vsel %vm628, %v561, 0.0
        %909 = vadd.xlane.f32.xlu0 %v908
        %v910 = vpop.xlane.xlu0 %909
        %v911 = vsel %vm628, %v562, 0.0
        %912 = vadd.xlane.f32.xlu0 %v911
        %v913 = vpop.xlane.xlu0 %912
        %v914 = vsel %vm628, %v563, 0.0
        %915 = vadd.xlane.f32.xlu0 %v914
        %v916 = vpop.xlane.xlu0 %915
        %v917 = vsel %vm628, %v564, 0.0
        %918 = vadd.xlane.f32.xlu0 %v917
        %v919 = vpop.xlane.xlu0 %918
        %v920 = vsel %vm628, %v565, 0.0
        %921 = vadd.xlane.f32.xlu0 %v920
        %v922 = vpop.xlane.xlu0 %921
        %v923 = vsel %vm628, %v566, 0.0
        %924 = vadd.xlane.f32.xlu0 %v923
        %v925 = vpop.xlane.xlu0 %924
        %v926 = vsel %vm628, %v567, 0.0
        %927 = vadd.xlane.f32.xlu0 %v926
        %v928 = vpop.xlane.xlu0 %927
        %v929 = vsel %vm628, %v568, 0.0
        %930 = vadd.xlane.f32.xlu0 %v929
        %v931 = vpop.xlane.xlu0 %930
        %v932 = vsel %vm628, %v569, 0.0
        %933 = vadd.xlane.f32.xlu0 %v932
        %v934 = vpop.xlane.xlu0 %933
        %v935 = vsel %vm628, %v570, 0.0
        %936 = vadd.xlane.f32.xlu0 %v935
        %v937 = vpop.xlane.xlu0 %936
        %v938 = vsel %vm628, %v571, 0.0
        %939 = vadd.xlane.f32.xlu0 %v938
        %v940 = vpop.xlane.xlu0 %939
        %v941 = vsel %vm628, %v572, 0.0
        %942 = vadd.xlane.f32.xlu0 %v941
        %v943 = vpop.xlane.xlu0 %942
        %v944 = vsel %vm628, %v573, 0.0
        %945 = vadd.xlane.f32.xlu0 %v944
        %v946 = vpop.xlane.xlu0 %945
        %v947 = vsel %vm628, %v574, 0.0
        %948 = vadd.xlane.f32.xlu0 %v947
        %v949 = vpop.xlane.xlu0 %948
        %v950 = vsel %vm628, %v575, 0.0
        %951 = vadd.xlane.f32.xlu0 %v950
        %v952 = vpop.xlane.xlu0 %951
        %v953 = vsel %vm628, %v576, 0.0
        %954 = vadd.xlane.f32.xlu0 %v953
        %v955 = vpop.xlane.xlu0 %954
        %v956 = vsel %vm628, %v577, 0.0
        %957 = vadd.xlane.f32.xlu0 %v956
        %v958 = vpop.xlane.xlu0 %957
        %v959 = vsel %vm628, %v578, 0.0
        %960 = vadd.xlane.f32.xlu0 %v959
        %v961 = vpop.xlane.xlu0 %960
        %v962 = vsel %vm628, %v579, 0.0
        %963 = vadd.xlane.f32.xlu0 %v962
        %v964 = vpop.xlane.xlu0 %963
        %v965 = vsel %vm628, %v580, 0.0
        %966 = vadd.xlane.f32.xlu0 %v965
        %v967 = vpop.xlane.xlu0 %966
        %v968 = vsel %vm628, %v581, 0.0
        %969 = vadd.xlane.f32.xlu0 %v968
        %v970 = vpop.xlane.xlu0 %969
        %v971 = vsel %vm628, %v582, 0.0
        %972 = vadd.xlane.f32.xlu0 %v971
        %v973 = vpop.xlane.xlu0 %972
        %v974 = vsel %vm628, %v583, 0.0
        %975 = vadd.xlane.f32.xlu0 %v974
        %v976 = vpop.xlane.xlu0 %975
        %v977 = vsel %vm628, %v584, 0.0
        %978 = vadd.xlane.f32.xlu0 %v977
        %v979 = vpop.xlane.xlu0 %978
        %v980 = vsel %vm628, %v585, 0.0
        %981 = vadd.xlane.f32.xlu0 %v980
        %v982 = vpop.xlane.xlu0 %981
        %v983 = vsel %vm628, %v586, 0.0
        %984 = vadd.xlane.f32.xlu0 %v983
        %v985 = vpop.xlane.xlu0 %984
        %v986 = vsel %vm628, %v587, 0.0
        %987 = vadd.xlane.f32.xlu0 %v986
        %v988 = vpop.xlane.xlu0 %987
        %v989 = vsel %vm628, %v588, 0.0
        %990 = vadd.xlane.f32.xlu0 %v989
        %v991 = vpop.xlane.xlu0 %990
        %v992 = vsel %vm628, %v589, 0.0
        %993 = vadd.xlane.f32.xlu0 %v992
        %v994 = vpop.xlane.xlu0 %993
        %v995 = vsel %vm628, %v590, 0.0
        %996 = vadd.xlane.f32.xlu0 %v995
        %v997 = vpop.xlane.xlu0 %996
        %v998 = vsel %vm628, %v591, 0.0
        %999 = vadd.xlane.f32.xlu0 %v998
        %v1000 = vpop.xlane.xlu0 %999
        %v1001 = vsel %vm628, %v592, 0.0
        %1002 = vadd.xlane.f32.xlu0 %v1001
        %v1003 = vpop.xlane.xlu0 %1002
        %v1004 = vsel %vm628, %v593, 0.0
        %1005 = vadd.xlane.f32.xlu0 %v1004
        %v1006 = vpop.xlane.xlu0 %1005
        %v1007 = vsel %vm628, %v594, 0.0
        %1008 = vadd.xlane.f32.xlu0 %v1007
        %v1009 = vpop.xlane.xlu0 %1008
        %v1010 = vsel %vm628, %v595, 0.0
        %1011 = vadd.xlane.f32.xlu0 %v1010
        %v1012 = vpop.xlane.xlu0 %1011
        %v1013 = vsel %vm628, %v596, 0.0
        %1014 = vadd.xlane.f32.xlu0 %v1013
        %v1015 = vpop.xlane.xlu0 %1014
        %v1016 = vsel %vm628, %v597, 0.0
        %1017 = vadd.xlane.f32.xlu0 %v1016
        %v1018 = vpop.xlane.xlu0 %1017
        %v1019 = vsel %vm628, %v598, 0.0
        %1020 = vadd.xlane.f32.xlu0 %v1019
        %v1021 = vpop.xlane.xlu0 %1020
        %v1022 = vsel %vm628, %v599, 0.0
        %1023 = vadd.xlane.f32.xlu0 %v1022
        %v1024 = vpop.xlane.xlu0 %1023
        %v1025 = vsel %vm628, %v600, 0.0
        %1026 = vadd.xlane.f32.xlu0 %v1025
        %v1027 = vpop.xlane.xlu0 %1026
        %v1028 = vsel %vm628, %v601, 0.0
        %1029 = vadd.xlane.f32.xlu0 %v1028
        %v1030 = vpop.xlane.xlu0 %1029
        %v1031 = vsel %vm628, %v602, 0.0
        %1032 = vadd.xlane.f32.xlu0 %v1031
        %v1033 = vpop.xlane.xlu0 %1032
        %v1034 = vsel %vm628, %v603, 0.0
        %1035 = vadd.xlane.f32.xlu0 %v1034
        %v1036 = vpop.xlane.xlu0 %1035
        %v1037 = vsel %vm628, %v604, 0.0
        %1038 = vadd.xlane.f32.xlu0 %v1037
        %v1039 = vpop.xlane.xlu0 %1038
        %v1040 = vsel %vm628, %v605, 0.0
        %1041 = vadd.xlane.f32.xlu0 %v1040
        %v1042 = vpop.xlane.xlu0 %1041
        %v1043 = vsel %vm628, %v606, 0.0
        %1044 = vadd.xlane.f32.xlu0 %v1043
        %v1045 = vpop.xlane.xlu0 %1044
        %v1046 = vsel %vm628, %v607, 0.0
        %1047 = vadd.xlane.f32.xlu0 %v1046
        %v1048 = vpop.xlane.xlu0 %1047
        %v1049 = vsel %vm628, %v608, 0.0
        %1050 = vadd.xlane.f32.xlu0 %v1049
        %v1051 = vpop.xlane.xlu0 %1050
        %v1052 = vsel %vm628, %v609, 0.0
        %1053 = vadd.xlane.f32.xlu0 %v1052
        %v1054 = vpop.xlane.xlu0 %1053
        %v1055 = vsel %vm628, %v610, 0.0
        %1056 = vadd.xlane.f32.xlu0 %v1055
        %v1057 = vpop.xlane.xlu0 %1056
        %v1058 = vsel %vm628, %v611, 0.0
        %1059 = vadd.xlane.f32.xlu0 %v1058
        %v1060 = vpop.xlane.xlu0 %1059
        %v1061 = vsel %vm628, %v612, 0.0
        %1062 = vadd.xlane.f32.xlu0 %v1061
        %v1063 = vpop.xlane.xlu0 %1062
        %v1064 = vsel %vm628, %v613, 0.0
        %1065 = vadd.xlane.f32.xlu0 %v1064
        %v1066 = vpop.xlane.xlu0 %1065
        %v1067 = vsel %vm628, %v614, 0.0
        %1068 = vadd.xlane.f32.xlu0 %v1067
        %v1069 = vpop.xlane.xlu0 %1068
        %v1070 = vsel %vm628, %v615, 0.0
        %1071 = vadd.xlane.f32.xlu0 %v1070
        %v1072 = vpop.xlane.xlu0 %1071
        %v1073 = vsel %vm628, %v616, 0.0
        %1074 = vadd.xlane.f32.xlu0 %v1073
        %v1075 = vpop.xlane.xlu0 %1074
        %v1076 = vsel %vm628, %v617, 0.0
        %1077 = vadd.xlane.f32.xlu0 %v1076
        %v1078 = vpop.xlane.xlu0 %1077
        %v1079 = vsel %vm628, %v618, 0.0
        %1080 = vadd.xlane.f32.xlu0 %v1079
        %v1081 = vpop.xlane.xlu0 %1080
        %v1082 = vsel %vm628, %v619, 0.0
        %1083 = vadd.xlane.f32.xlu0 %v1082
        %v1084 = vpop.xlane.xlu0 %1083
        %v1085 = vsel %vm628, %v620, 0.0
        %1086 = vadd.xlane.f32.xlu0 %v1085
        %v1087 = vpop.xlane.xlu0 %1086
        %v1088 = vsel %vm628, %v621, 0.0
        %1089 = vadd.xlane.f32.xlu0 %v1088
        %v1090 = vpop.xlane.xlu0 %1089
        %v1091 = vsel %vm628, %v622, 0.0
        %1092 = vadd.xlane.f32.xlu0 %v1091
        %v1093 = vpop.xlane.xlu0 %1092
        %v1094 = vsel %vm628, %v623, 0.0
        %1095 = vadd.xlane.f32.xlu0 %v1094
        %v1096 = vpop.xlane.xlu0 %1095
        %v1097 = vsel %vm628, %v624, 0.0
        %1098 = vadd.xlane.f32.xlu0 %v1097
        %v1099 = vpop.xlane.xlu0 %1098
        %v1100 = vsel %vm628, %v625, 0.0
        %1101 = vadd.xlane.f32.xlu0 %v1100
        %v1102 = vpop.xlane.xlu0 %1101
        %v1103 = vsel %vm628, %v626, 0.0
        %1104 = vadd.xlane.f32.xlu0 %v1103
        %v1105 = vpop.xlane.xlu0 %1104
        %v1106 = vsel %vm628, %v627, 0.0
        %1107 = vadd.xlane.f32.xlu0 %v1106
        %v1108 = vpop.xlane.xlu0 %1107
        %v1109 = vmul.f32 %v468, %v468
        %v1110 = vmul.f32 %v469, %v469
        %v1111 = vmul.f32 %v470, %v470
        %v1112 = vmul.f32 %v471, %v471
        %v1113 = vmul.f32 %v472, %v472
        %v1114 = vmul.f32 %v473, %v473
        %v1115 = vmul.f32 %v474, %v474
        %v1116 = vmul.f32 %v475, %v475
        %v1117 = vmul.f32 %v476, %v476
        %v1118 = vmul.f32 %v477, %v477
        %v1119 = vmul.f32 %v478, %v478
        %v1120 = vmul.f32 %v479, %v479
        %v1121 = vmul.f32 %v480, %v480
        %v1122 = vmul.f32 %v481, %v481
        %v1123 = vmul.f32 %v482, %v482
        %v1124 = vmul.f32 %v483, %v483
        %v1125 = vmul.f32 %v484, %v484
        %v1126 = vmul.f32 %v485, %v485
        %v1127 = vmul.f32 %v486, %v486
        %v1128 = vmul.f32 %v487, %v487
        %v1129 = vmul.f32 %v488, %v488
        %v1130 = vmul.f32 %v489, %v489
        %v1131 = vmul.f32 %v490, %v490
        %v1132 = vmul.f32 %v491, %v491
        %v1133 = vmul.f32 %v492, %v492
        %v1134 = vmul.f32 %v493, %v493
        %v1135 = vmul.f32 %v494, %v494
        %v1136 = vmul.f32 %v495, %v495
        %v1137 = vmul.f32 %v496, %v496
        %v1138 = vmul.f32 %v497, %v497
        %v1139 = vmul.f32 %v498, %v498
        %v1140 = vmul.f32 %v499, %v499
        %v1141 = vmul.f32 %v500, %v500
        %v1142 = vmul.f32 %v501, %v501
        %v1143 = vmul.f32 %v502, %v502
        %v1144 = vmul.f32 %v503, %v503
        %v1145 = vmul.f32 %v504, %v504
        %v1146 = vmul.f32 %v505, %v505
        %v1147 = vmul.f32 %v506, %v506
        %v1148 = vmul.f32 %v507, %v507
        %v1149 = vmul.f32 %v508, %v508
        %v1150 = vmul.f32 %v509, %v509
        %v1151 = vmul.f32 %v510, %v510
        %v1152 = vmul.f32 %v511, %v511
        %v1153 = vmul.f32 %v512, %v512
        %v1154 = vmul.f32 %v513, %v513
        %v1155 = vmul.f32 %v514, %v514
        %v1156 = vmul.f32 %v515, %v515
        %v1157 = vmul.f32 %v516, %v516
        %v1158 = vmul.f32 %v517, %v517
        %v1159 = vmul.f32 %v518, %v518
        %v1160 = vmul.f32 %v519, %v519
        %v1161 = vmul.f32 %v520, %v520
        %v1162 = vmul.f32 %v521, %v521
        %v1163 = vmul.f32 %v522, %v522
        %v1164 = vmul.f32 %v523, %v523
        %v1165 = vmul.f32 %v524, %v524
        %v1166 = vmul.f32 %v525, %v525
        %v1167 = vmul.f32 %v526, %v526
        %v1168 = vmul.f32 %v527, %v527
        %v1169 = vmul.f32 %v528, %v528
        %v1170 = vmul.f32 %v529, %v529
        %v1171 = vmul.f32 %v530, %v530
        %v1172 = vmul.f32 %v531, %v531
        %v1173 = vmul.f32 %v532, %v532
        %v1174 = vmul.f32 %v533, %v533
        %v1175 = vmul.f32 %v534, %v534
        %v1176 = vmul.f32 %v535, %v535
        %v1177 = vmul.f32 %v536, %v536
        %v1178 = vmul.f32 %v537, %v537
        %v1179 = vmul.f32 %v538, %v538
        %v1180 = vmul.f32 %v539, %v539
        %v1181 = vmul.f32 %v540, %v540
        %v1182 = vmul.f32 %v541, %v541
        %v1183 = vmul.f32 %v542, %v542
        %v1184 = vmul.f32 %v543, %v543
        %v1185 = vmul.f32 %v544, %v544
        %v1186 = vmul.f32 %v545, %v545
        %v1187 = vmul.f32 %v546, %v546
        %v1188 = vmul.f32 %v547, %v547
        %v1189 = vmul.f32 %v548, %v548
        %v1190 = vmul.f32 %v549, %v549
        %v1191 = vmul.f32 %v550, %v550
        %v1192 = vmul.f32 %v551, %v551
        %v1193 = vmul.f32 %v552, %v552
        %v1194 = vmul.f32 %v553, %v553
        %v1195 = vmul.f32 %v554, %v554
        %v1196 = vmul.f32 %v555, %v555
        %v1197 = vmul.f32 %v556, %v556
        %v1198 = vmul.f32 %v557, %v557
        %v1199 = vmul.f32 %v558, %v558
        %v1200 = vmul.f32 %v559, %v559
        %v1201 = vmul.f32 %v560, %v560
        %v1202 = vmul.f32 %v561, %v561
        %v1203 = vmul.f32 %v562, %v562
        %v1204 = vmul.f32 %v563, %v563
        %v1205 = vmul.f32 %v564, %v564
        %v1206 = vmul.f32 %v565, %v565
        %v1207 = vmul.f32 %v566, %v566
        %v1208 = vmul.f32 %v567, %v567
        %v1209 = vmul.f32 %v568, %v568
        %v1210 = vmul.f32 %v569, %v569
        %v1211 = vmul.f32 %v570, %v570
        %v1212 = vmul.f32 %v571, %v571
        %v1213 = vmul.f32 %v572, %v572
        %v1214 = vmul.f32 %v573, %v573
        %v1215 = vmul.f32 %v574, %v574
        %v1216 = vmul.f32 %v575, %v575
        %v1217 = vmul.f32 %v576, %v576
        %v1218 = vmul.f32 %v577, %v577
        %v1219 = vmul.f32 %v578, %v578
        %v1220 = vmul.f32 %v579, %v579
        %v1221 = vmul.f32 %v580, %v580
        %v1222 = vmul.f32 %v581, %v581
        %v1223 = vmul.f32 %v582, %v582
        %v1224 = vmul.f32 %v583, %v583
        %v1225 = vmul.f32 %v584, %v584
        %v1226 = vmul.f32 %v585, %v585
        %v1227 = vmul.f32 %v586, %v586
        %v1228 = vmul.f32 %v587, %v587
        %v1229 = vmul.f32 %v588, %v588
        %v1230 = vmul.f32 %v589, %v589
        %v1231 = vmul.f32 %v590, %v590
        %v1232 = vmul.f32 %v591, %v591
        %v1233 = vmul.f32 %v592, %v592
        %v1234 = vmul.f32 %v593, %v593
        %v1235 = vmul.f32 %v594, %v594
        %v1236 = vmul.f32 %v595, %v595
        %v1237 = vmul.f32 %v596, %v596
        %v1238 = vmul.f32 %v597, %v597
        %v1239 = vmul.f32 %v598, %v598
        %v1240 = vmul.f32 %v599, %v599
        %v1241 = vmul.f32 %v600, %v600
        %v1242 = vmul.f32 %v601, %v601
        %v1243 = vmul.f32 %v602, %v602
        %v1244 = vmul.f32 %v603, %v603
        %v1245 = vmul.f32 %v604, %v604
        %v1246 = vmul.f32 %v605, %v605
        %v1247 = vmul.f32 %v606, %v606
        %v1248 = vmul.f32 %v607, %v607
        %v1249 = vmul.f32 %v608, %v608
        %v1250 = vmul.f32 %v609, %v609
        %v1251 = vmul.f32 %v610, %v610
        %v1252 = vmul.f32 %v611, %v611
        %v1253 = vmul.f32 %v612, %v612
        %v1254 = vmul.f32 %v613, %v613
        %v1255 = vmul.f32 %v614, %v614
        %v1256 = vmul.f32 %v615, %v615
        %v1257 = vmul.f32 %v616, %v616
        %v1258 = vmul.f32 %v617, %v617
        %v1259 = vmul.f32 %v618, %v618
        %v1260 = vmul.f32 %v619, %v619
        %v1261 = vmul.f32 %v620, %v620
        %v1262 = vmul.f32 %v621, %v621
        %v1263 = vmul.f32 %v622, %v622
        %v1264 = vmul.f32 %v623, %v623
        %v1265 = vmul.f32 %v624, %v624
        %v1266 = vmul.f32 %v625, %v625
        %v1267 = vmul.f32 %v626, %v626
        %v1268 = vmul.f32 %v627, %v627
        %v1269 = vsel %vm628, %v1109, 0.0
        %1270 = vadd.xlane.f32.xlu0 %v1269
        %v1271 = vpop.xlane.xlu0 %1270
        %v1272 = vsel %vm628, %v1110, 0.0
        %1273 = vadd.xlane.f32.xlu0 %v1272
        %v1274 = vpop.xlane.xlu0 %1273
        %v1275 = vsel %vm628, %v1111, 0.0
        %1276 = vadd.xlane.f32.xlu0 %v1275
        %v1277 = vpop.xlane.xlu0 %1276
        %v1278 = vsel %vm628, %v1112, 0.0
        %1279 = vadd.xlane.f32.xlu0 %v1278
        %v1280 = vpop.xlane.xlu0 %1279
        %v1281 = vsel %vm628, %v1113, 0.0
        %1282 = vadd.xlane.f32.xlu0 %v1281
        %v1283 = vpop.xlane.xlu0 %1282
        %v1284 = vsel %vm628, %v1114, 0.0
        %1285 = vadd.xlane.f32.xlu0 %v1284
        %v1286 = vpop.xlane.xlu0 %1285
        %v1287 = vsel %vm628, %v1115, 0.0
        %1288 = vadd.xlane.f32.xlu0 %v1287
        %v1289 = vpop.xlane.xlu0 %1288
        %v1290 = vsel %vm628, %v1116, 0.0
        %1291 = vadd.xlane.f32.xlu0 %v1290
        %v1292 = vpop.xlane.xlu0 %1291
        %v1293 = vsel %vm628, %v1117, 0.0
        %1294 = vadd.xlane.f32.xlu0 %v1293
        %v1295 = vpop.xlane.xlu0 %1294
        %v1296 = vsel %vm628, %v1118, 0.0
        %1297 = vadd.xlane.f32.xlu0 %v1296
        %v1298 = vpop.xlane.xlu0 %1297
        %v1299 = vsel %vm628, %v1119, 0.0
        %1300 = vadd.xlane.f32.xlu0 %v1299
        %v1301 = vpop.xlane.xlu0 %1300
        %v1302 = vsel %vm628, %v1120, 0.0
        %1303 = vadd.xlane.f32.xlu0 %v1302
        %v1304 = vpop.xlane.xlu0 %1303
        %v1305 = vsel %vm628, %v1121, 0.0
        %1306 = vadd.xlane.f32.xlu0 %v1305
        %v1307 = vpop.xlane.xlu0 %1306
        %v1308 = vsel %vm628, %v1122, 0.0
        %1309 = vadd.xlane.f32.xlu0 %v1308
        %v1310 = vpop.xlane.xlu0 %1309
        %v1311 = vsel %vm628, %v1123, 0.0
        %1312 = vadd.xlane.f32.xlu0 %v1311
        %v1313 = vpop.xlane.xlu0 %1312
        %v1314 = vsel %vm628, %v1124, 0.0
        %1315 = vadd.xlane.f32.xlu0 %v1314
        %v1316 = vpop.xlane.xlu0 %1315
        %v1317 = vsel %vm628, %v1125, 0.0
        %1318 = vadd.xlane.f32.xlu0 %v1317
        %v1319 = vpop.xlane.xlu0 %1318
        %v1320 = vsel %vm628, %v1126, 0.0
        %1321 = vadd.xlane.f32.xlu0 %v1320
        %v1322 = vpop.xlane.xlu0 %1321
        %v1323 = vsel %vm628, %v1127, 0.0
        %1324 = vadd.xlane.f32.xlu0 %v1323
        %v1325 = vpop.xlane.xlu0 %1324
        %v1326 = vsel %vm628, %v1128, 0.0
        %1327 = vadd.xlane.f32.xlu0 %v1326
        %v1328 = vpop.xlane.xlu0 %1327
        %v1329 = vsel %vm628, %v1129, 0.0
        %1330 = vadd.xlane.f32.xlu0 %v1329
        %v1331 = vpop.xlane.xlu0 %1330
        %v1332 = vsel %vm628, %v1130, 0.0
        %1333 = vadd.xlane.f32.xlu0 %v1332
        %v1334 = vpop.xlane.xlu0 %1333
        %v1335 = vsel %vm628, %v1131, 0.0
        %1336 = vadd.xlane.f32.xlu0 %v1335
        %v1337 = vpop.xlane.xlu0 %1336
        %v1338 = vsel %vm628, %v1132, 0.0
        %1339 = vadd.xlane.f32.xlu0 %v1338
        %v1340 = vpop.xlane.xlu0 %1339
        %v1341 = vsel %vm628, %v1133, 0.0
        %1342 = vadd.xlane.f32.xlu0 %v1341
        %v1343 = vpop.xlane.xlu0 %1342
        %v1344 = vsel %vm628, %v1134, 0.0
        %1345 = vadd.xlane.f32.xlu0 %v1344
        %v1346 = vpop.xlane.xlu0 %1345
        %v1347 = vsel %vm628, %v1135, 0.0
        %1348 = vadd.xlane.f32.xlu0 %v1347
        %v1349 = vpop.xlane.xlu0 %1348
        %v1350 = vsel %vm628, %v1136, 0.0
        %1351 = vadd.xlane.f32.xlu0 %v1350
        %v1352 = vpop.xlane.xlu0 %1351
        %v1353 = vsel %vm628, %v1137, 0.0
        %1354 = vadd.xlane.f32.xlu0 %v1353
        %v1355 = vpop.xlane.xlu0 %1354
        %v1356 = vsel %vm628, %v1138, 0.0
        %1357 = vadd.xlane.f32.xlu0 %v1356
        %v1358 = vpop.xlane.xlu0 %1357
        %v1359 = vsel %vm628, %v1139, 0.0
        %1360 = vadd.xlane.f32.xlu0 %v1359
        %v1361 = vpop.xlane.xlu0 %1360
        %v1362 = vsel %vm628, %v1140, 0.0
        %1363 = vadd.xlane.f32.xlu0 %v1362
        %v1364 = vpop.xlane.xlu0 %1363
        %v1365 = vsel %vm628, %v1141, 0.0
        %1366 = vadd.xlane.f32.xlu0 %v1365
        %v1367 = vpop.xlane.xlu0 %1366
        %v1368 = vsel %vm628, %v1142, 0.0
        %1369 = vadd.xlane.f32.xlu0 %v1368
        %v1370 = vpop.xlane.xlu0 %1369
        %v1371 = vsel %vm628, %v1143, 0.0
        %1372 = vadd.xlane.f32.xlu0 %v1371
        %v1373 = vpop.xlane.xlu0 %1372
        %v1374 = vsel %vm628, %v1144, 0.0
        %1375 = vadd.xlane.f32.xlu0 %v1374
        %v1376 = vpop.xlane.xlu0 %1375
        %v1377 = vsel %vm628, %v1145, 0.0
        %1378 = vadd.xlane.f32.xlu0 %v1377
        %v1379 = vpop.xlane.xlu0 %1378
        %v1380 = vsel %vm628, %v1146, 0.0
        %1381 = vadd.xlane.f32.xlu0 %v1380
        %v1382 = vpop.xlane.xlu0 %1381
        %v1383 = vsel %vm628, %v1147, 0.0
        %1384 = vadd.xlane.f32.xlu0 %v1383
        %v1385 = vpop.xlane.xlu0 %1384
        %v1386 = vsel %vm628, %v1148, 0.0
        %1387 = vadd.xlane.f32.xlu0 %v1386
        %v1388 = vpop.xlane.xlu0 %1387
        %v1389 = vsel %vm628, %v1149, 0.0
        %1390 = vadd.xlane.f32.xlu0 %v1389
        %v1391 = vpop.xlane.xlu0 %1390
        %v1392 = vsel %vm628, %v1150, 0.0
        %1393 = vadd.xlane.f32.xlu0 %v1392
        %v1394 = vpop.xlane.xlu0 %1393
        %v1395 = vsel %vm628, %v1151, 0.0
        %1396 = vadd.xlane.f32.xlu0 %v1395
        %v1397 = vpop.xlane.xlu0 %1396
        %v1398 = vsel %vm628, %v1152, 0.0
        %1399 = vadd.xlane.f32.xlu0 %v1398
        %v1400 = vpop.xlane.xlu0 %1399
        %v1401 = vsel %vm628, %v1153, 0.0
        %1402 = vadd.xlane.f32.xlu0 %v1401
        %v1403 = vpop.xlane.xlu0 %1402
        %v1404 = vsel %vm628, %v1154, 0.0
        %1405 = vadd.xlane.f32.xlu0 %v1404
        %v1406 = vpop.xlane.xlu0 %1405
        %v1407 = vsel %vm628, %v1155, 0.0
        %1408 = vadd.xlane.f32.xlu0 %v1407
        %v1409 = vpop.xlane.xlu0 %1408
        %v1410 = vsel %vm628, %v1156, 0.0
        %1411 = vadd.xlane.f32.xlu0 %v1410
        %v1412 = vpop.xlane.xlu0 %1411
        %v1413 = vsel %vm628, %v1157, 0.0
        %1414 = vadd.xlane.f32.xlu0 %v1413
        %v1415 = vpop.xlane.xlu0 %1414
        %v1416 = vsel %vm628, %v1158, 0.0
        %1417 = vadd.xlane.f32.xlu0 %v1416
        %v1418 = vpop.xlane.xlu0 %1417
        %v1419 = vsel %vm628, %v1159, 0.0
        %1420 = vadd.xlane.f32.xlu0 %v1419
        %v1421 = vpop.xlane.xlu0 %1420
        %v1422 = vsel %vm628, %v1160, 0.0
        %1423 = vadd.xlane.f32.xlu0 %v1422
        %v1424 = vpop.xlane.xlu0 %1423
        %v1425 = vsel %vm628, %v1161, 0.0
        %1426 = vadd.xlane.f32.xlu0 %v1425
        %v1427 = vpop.xlane.xlu0 %1426
        %v1428 = vsel %vm628, %v1162, 0.0
        %1429 = vadd.xlane.f32.xlu0 %v1428
        %v1430 = vpop.xlane.xlu0 %1429
        %v1431 = vsel %vm628, %v1163, 0.0
        %1432 = vadd.xlane.f32.xlu0 %v1431
        %v1433 = vpop.xlane.xlu0 %1432
        %v1434 = vsel %vm628, %v1164, 0.0
        %1435 = vadd.xlane.f32.xlu0 %v1434
        %v1436 = vpop.xlane.xlu0 %1435
        %v1437 = vsel %vm628, %v1165, 0.0
        %1438 = vadd.xlane.f32.xlu0 %v1437
        %v1439 = vpop.xlane.xlu0 %1438
        %v1440 = vsel %vm628, %v1166, 0.0
        %1441 = vadd.xlane.f32.xlu0 %v1440
        %v1442 = vpop.xlane.xlu0 %1441
        %v1443 = vsel %vm628, %v1167, 0.0
        %1444 = vadd.xlane.f32.xlu0 %v1443
        %v1445 = vpop.xlane.xlu0 %1444
        %v1446 = vsel %vm628, %v1168, 0.0
        %1447 = vadd.xlane.f32.xlu0 %v1446
        %v1448 = vpop.xlane.xlu0 %1447
        %v1449 = vsel %vm628, %v1169, 0.0
        %1450 = vadd.xlane.f32.xlu0 %v1449
        %v1451 = vpop.xlane.xlu0 %1450
        %v1452 = vsel %vm628, %v1170, 0.0
        %1453 = vadd.xlane.f32.xlu0 %v1452
        %v1454 = vpop.xlane.xlu0 %1453
        %v1455 = vsel %vm628, %v1171, 0.0
        %1456 = vadd.xlane.f32.xlu0 %v1455
        %v1457 = vpop.xlane.xlu0 %1456
        %v1458 = vsel %vm628, %v1172, 0.0
        %1459 = vadd.xlane.f32.xlu0 %v1458
        %v1460 = vpop.xlane.xlu0 %1459
        %v1461 = vsel %vm628, %v1173, 0.0
        %1462 = vadd.xlane.f32.xlu0 %v1461
        %v1463 = vpop.xlane.xlu0 %1462
        %v1464 = vsel %vm628, %v1174, 0.0
        %1465 = vadd.xlane.f32.xlu0 %v1464
        %v1466 = vpop.xlane.xlu0 %1465
        %v1467 = vsel %vm628, %v1175, 0.0
        %1468 = vadd.xlane.f32.xlu0 %v1467
        %v1469 = vpop.xlane.xlu0 %1468
        %v1470 = vsel %vm628, %v1176, 0.0
        %1471 = vadd.xlane.f32.xlu0 %v1470
        %v1472 = vpop.xlane.xlu0 %1471
        %v1473 = vsel %vm628, %v1177, 0.0
        %1474 = vadd.xlane.f32.xlu0 %v1473
        %v1475 = vpop.xlane.xlu0 %1474
        %v1476 = vsel %vm628, %v1178, 0.0
        %1477 = vadd.xlane.f32.xlu0 %v1476
        %v1478 = vpop.xlane.xlu0 %1477
        %v1479 = vsel %vm628, %v1179, 0.0
        %1480 = vadd.xlane.f32.xlu0 %v1479
        %v1481 = vpop.xlane.xlu0 %1480
        %v1482 = vsel %vm628, %v1180, 0.0
        %1483 = vadd.xlane.f32.xlu0 %v1482
        %v1484 = vpop.xlane.xlu0 %1483
        %v1485 = vsel %vm628, %v1181, 0.0
        %1486 = vadd.xlane.f32.xlu0 %v1485
        %v1487 = vpop.xlane.xlu0 %1486
        %v1488 = vsel %vm628, %v1182, 0.0
        %1489 = vadd.xlane.f32.xlu0 %v1488
        %v1490 = vpop.xlane.xlu0 %1489
        %v1491 = vsel %vm628, %v1183, 0.0
        %1492 = vadd.xlane.f32.xlu0 %v1491
        %v1493 = vpop.xlane.xlu0 %1492
        %v1494 = vsel %vm628, %v1184, 0.0
        %1495 = vadd.xlane.f32.xlu0 %v1494
        %v1496 = vpop.xlane.xlu0 %1495
        %v1497 = vsel %vm628, %v1185, 0.0
        %1498 = vadd.xlane.f32.xlu0 %v1497
        %v1499 = vpop.xlane.xlu0 %1498
        %v1500 = vsel %vm628, %v1186, 0.0
        %1501 = vadd.xlane.f32.xlu0 %v1500
        %v1502 = vpop.xlane.xlu0 %1501
        %v1503 = vsel %vm628, %v1187, 0.0
        %1504 = vadd.xlane.f32.xlu0 %v1503
        %v1505 = vpop.xlane.xlu0 %1504
        %v1506 = vsel %vm628, %v1188, 0.0
        %1507 = vadd.xlane.f32.xlu0 %v1506
        %v1508 = vpop.xlane.xlu0 %1507
        %v1509 = vsel %vm628, %v1189, 0.0
        %1510 = vadd.xlane.f32.xlu0 %v1509
        %v1511 = vpop.xlane.xlu0 %1510
        %v1512 = vsel %vm628, %v1190, 0.0
        %1513 = vadd.xlane.f32.xlu0 %v1512
        %v1514 = vpop.xlane.xlu0 %1513
        %v1515 = vsel %vm628, %v1191, 0.0
        %1516 = vadd.xlane.f32.xlu0 %v1515
        %v1517 = vpop.xlane.xlu0 %1516
        %v1518 = vsel %vm628, %v1192, 0.0
        %1519 = vadd.xlane.f32.xlu0 %v1518
        %v1520 = vpop.xlane.xlu0 %1519
        %v1521 = vsel %vm628, %v1193, 0.0
        %1522 = vadd.xlane.f32.xlu0 %v1521
        %v1523 = vpop.xlane.xlu0 %1522
        %v1524 = vsel %vm628, %v1194, 0.0
        %1525 = vadd.xlane.f32.xlu0 %v1524
        %v1526 = vpop.xlane.xlu0 %1525
        %v1527 = vsel %vm628, %v1195, 0.0
        %1528 = vadd.xlane.f32.xlu0 %v1527
        %v1529 = vpop.xlane.xlu0 %1528
        %v1530 = vsel %vm628, %v1196, 0.0
        %1531 = vadd.xlane.f32.xlu0 %v1530
        %v1532 = vpop.xlane.xlu0 %1531
        %v1533 = vsel %vm628, %v1197, 0.0
        %1534 = vadd.xlane.f32.xlu0 %v1533
        %v1535 = vpop.xlane.xlu0 %1534
        %v1536 = vsel %vm628, %v1198, 0.0
        %1537 = vadd.xlane.f32.xlu0 %v1536
        %v1538 = vpop.xlane.xlu0 %1537
        %v1539 = vsel %vm628, %v1199, 0.0
        %1540 = vadd.xlane.f32.xlu0 %v1539
        %v1541 = vpop.xlane.xlu0 %1540
        %v1542 = vsel %vm628, %v1200, 0.0
        %1543 = vadd.xlane.f32.xlu0 %v1542
        %v1544 = vpop.xlane.xlu0 %1543
        %v1545 = vsel %vm628, %v1201, 0.0
        %1546 = vadd.xlane.f32.xlu0 %v1545
        %v1547 = vpop.xlane.xlu0 %1546
        %v1548 = vsel %vm628, %v1202, 0.0
        %1549 = vadd.xlane.f32.xlu0 %v1548
        %v1550 = vpop.xlane.xlu0 %1549
        %v1551 = vsel %vm628, %v1203, 0.0
        %1552 = vadd.xlane.f32.xlu0 %v1551
        %v1553 = vpop.xlane.xlu0 %1552
        %v1554 = vsel %vm628, %v1204, 0.0
        %1555 = vadd.xlane.f32.xlu0 %v1554
        %v1556 = vpop.xlane.xlu0 %1555
        %v1557 = vsel %vm628, %v1205, 0.0
        %1558 = vadd.xlane.f32.xlu0 %v1557
        %v1559 = vpop.xlane.xlu0 %1558
        %v1560 = vsel %vm628, %v1206, 0.0
        %1561 = vadd.xlane.f32.xlu0 %v1560
        %v1562 = vpop.xlane.xlu0 %1561
        %v1563 = vsel %vm628, %v1207, 0.0
        %1564 = vadd.xlane.f32.xlu0 %v1563
        %v1565 = vpop.xlane.xlu0 %1564
        %v1566 = vsel %vm628, %v1208, 0.0
        %1567 = vadd.xlane.f32.xlu0 %v1566
        %v1568 = vpop.xlane.xlu0 %1567
        %v1569 = vsel %vm628, %v1209, 0.0
        %1570 = vadd.xlane.f32.xlu0 %v1569
        %v1571 = vpop.xlane.xlu0 %1570
        %v1572 = vsel %vm628, %v1210, 0.0
        %1573 = vadd.xlane.f32.xlu0 %v1572
        %v1574 = vpop.xlane.xlu0 %1573
        %v1575 = vsel %vm628, %v1211, 0.0
        %1576 = vadd.xlane.f32.xlu0 %v1575
        %v1577 = vpop.xlane.xlu0 %1576
        %v1578 = vsel %vm628, %v1212, 0.0
        %1579 = vadd.xlane.f32.xlu0 %v1578
        %v1580 = vpop.xlane.xlu0 %1579
        %v1581 = vsel %vm628, %v1213, 0.0
        %1582 = vadd.xlane.f32.xlu0 %v1581
        %v1583 = vpop.xlane.xlu0 %1582
        %v1584 = vsel %vm628, %v1214, 0.0
        %1585 = vadd.xlane.f32.xlu0 %v1584
        %v1586 = vpop.xlane.xlu0 %1585
        %v1587 = vsel %vm628, %v1215, 0.0
        %1588 = vadd.xlane.f32.xlu0 %v1587
        %v1589 = vpop.xlane.xlu0 %1588
        %v1590 = vsel %vm628, %v1216, 0.0
        %1591 = vadd.xlane.f32.xlu0 %v1590
        %v1592 = vpop.xlane.xlu0 %1591
        %v1593 = vsel %vm628, %v1217, 0.0
        %1594 = vadd.xlane.f32.xlu0 %v1593
        %v1595 = vpop.xlane.xlu0 %1594
        %v1596 = vsel %vm628, %v1218, 0.0
        %1597 = vadd.xlane.f32.xlu0 %v1596
        %v1598 = vpop.xlane.xlu0 %1597
        %v1599 = vsel %vm628, %v1219, 0.0
        %1600 = vadd.xlane.f32.xlu0 %v1599
        %v1601 = vpop.xlane.xlu0 %1600
        %v1602 = vsel %vm628, %v1220, 0.0
        %1603 = vadd.xlane.f32.xlu0 %v1602
        %v1604 = vpop.xlane.xlu0 %1603
        %v1605 = vsel %vm628, %v1221, 0.0
        %1606 = vadd.xlane.f32.xlu0 %v1605
        %v1607 = vpop.xlane.xlu0 %1606
        %v1608 = vsel %vm628, %v1222, 0.0
        %1609 = vadd.xlane.f32.xlu0 %v1608
        %v1610 = vpop.xlane.xlu0 %1609
        %v1611 = vsel %vm628, %v1223, 0.0
        %1612 = vadd.xlane.f32.xlu0 %v1611
        %v1613 = vpop.xlane.xlu0 %1612
        %v1614 = vsel %vm628, %v1224, 0.0
        %1615 = vadd.xlane.f32.xlu0 %v1614
        %v1616 = vpop.xlane.xlu0 %1615
        %v1617 = vsel %vm628, %v1225, 0.0
        %1618 = vadd.xlane.f32.xlu0 %v1617
        %v1619 = vpop.xlane.xlu0 %1618
        %v1620 = vsel %vm628, %v1226, 0.0
        %1621 = vadd.xlane.f32.xlu0 %v1620
        %v1622 = vpop.xlane.xlu0 %1621
        %v1623 = vsel %vm628, %v1227, 0.0
        %1624 = vadd.xlane.f32.xlu0 %v1623
        %v1625 = vpop.xlane.xlu0 %1624
        %v1626 = vsel %vm628, %v1228, 0.0
        %1627 = vadd.xlane.f32.xlu0 %v1626
        %v1628 = vpop.xlane.xlu0 %1627
        %v1629 = vsel %vm628, %v1229, 0.0
        %1630 = vadd.xlane.f32.xlu0 %v1629
        %v1631 = vpop.xlane.xlu0 %1630
        %v1632 = vsel %vm628, %v1230, 0.0
        %1633 = vadd.xlane.f32.xlu0 %v1632
        %v1634 = vpop.xlane.xlu0 %1633
        %v1635 = vsel %vm628, %v1231, 0.0
        %1636 = vadd.xlane.f32.xlu0 %v1635
        %v1637 = vpop.xlane.xlu0 %1636
        %v1638 = vsel %vm628, %v1232, 0.0
        %1639 = vadd.xlane.f32.xlu0 %v1638
        %v1640 = vpop.xlane.xlu0 %1639
        %v1641 = vsel %vm628, %v1233, 0.0
        %1642 = vadd.xlane.f32.xlu0 %v1641
        %v1643 = vpop.xlane.xlu0 %1642
        %v1644 = vsel %vm628, %v1234, 0.0
        %1645 = vadd.xlane.f32.xlu0 %v1644
        %v1646 = vpop.xlane.xlu0 %1645
        %v1647 = vsel %vm628, %v1235, 0.0
        %1648 = vadd.xlane.f32.xlu0 %v1647
        %v1649 = vpop.xlane.xlu0 %1648
        %v1650 = vsel %vm628, %v1236, 0.0
        %1651 = vadd.xlane.f32.xlu0 %v1650
        %v1652 = vpop.xlane.xlu0 %1651
        %v1653 = vsel %vm628, %v1237, 0.0
        %1654 = vadd.xlane.f32.xlu0 %v1653
        %v1655 = vpop.xlane.xlu0 %1654
        %v1656 = vsel %vm628, %v1238, 0.0
        %1657 = vadd.xlane.f32.xlu0 %v1656
        %v1658 = vpop.xlane.xlu0 %1657
        %v1659 = vsel %vm628, %v1239, 0.0
        %1660 = vadd.xlane.f32.xlu0 %v1659
        %v1661 = vpop.xlane.xlu0 %1660
        %v1662 = vsel %vm628, %v1240, 0.0
        %1663 = vadd.xlane.f32.xlu0 %v1662
        %v1664 = vpop.xlane.xlu0 %1663
        %v1665 = vsel %vm628, %v1241, 0.0
        %1666 = vadd.xlane.f32.xlu0 %v1665
        %v1667 = vpop.xlane.xlu0 %1666
        %v1668 = vsel %vm628, %v1242, 0.0
        %1669 = vadd.xlane.f32.xlu0 %v1668
        %v1670 = vpop.xlane.xlu0 %1669
        %v1671 = vsel %vm628, %v1243, 0.0
        %1672 = vadd.xlane.f32.xlu0 %v1671
        %v1673 = vpop.xlane.xlu0 %1672
        %v1674 = vsel %vm628, %v1244, 0.0
        %1675 = vadd.xlane.f32.xlu0 %v1674
        %v1676 = vpop.xlane.xlu0 %1675
        %v1677 = vsel %vm628, %v1245, 0.0
        %1678 = vadd.xlane.f32.xlu0 %v1677
        %v1679 = vpop.xlane.xlu0 %1678
        %v1680 = vsel %vm628, %v1246, 0.0
        %1681 = vadd.xlane.f32.xlu0 %v1680
        %v1682 = vpop.xlane.xlu0 %1681
        %v1683 = vsel %vm628, %v1247, 0.0
        %1684 = vadd.xlane.f32.xlu0 %v1683
        %v1685 = vpop.xlane.xlu0 %1684
        %v1686 = vsel %vm628, %v1248, 0.0
        %1687 = vadd.xlane.f32.xlu0 %v1686
        %v1688 = vpop.xlane.xlu0 %1687
        %v1689 = vsel %vm628, %v1249, 0.0
        %1690 = vadd.xlane.f32.xlu0 %v1689
        %v1691 = vpop.xlane.xlu0 %1690
        %v1692 = vsel %vm628, %v1250, 0.0
        %1693 = vadd.xlane.f32.xlu0 %v1692
        %v1694 = vpop.xlane.xlu0 %1693
        %v1695 = vsel %vm628, %v1251, 0.0
        %1696 = vadd.xlane.f32.xlu0 %v1695
        %v1697 = vpop.xlane.xlu0 %1696
        %v1698 = vsel %vm628, %v1252, 0.0
        %1699 = vadd.xlane.f32.xlu0 %v1698
        %v1700 = vpop.xlane.xlu0 %1699
        %v1701 = vsel %vm628, %v1253, 0.0
        %1702 = vadd.xlane.f32.xlu0 %v1701
        %v1703 = vpop.xlane.xlu0 %1702
        %v1704 = vsel %vm628, %v1254, 0.0
        %1705 = vadd.xlane.f32.xlu0 %v1704
        %v1706 = vpop.xlane.xlu0 %1705
        %v1707 = vsel %vm628, %v1255, 0.0
        %1708 = vadd.xlane.f32.xlu0 %v1707
        %v1709 = vpop.xlane.xlu0 %1708
        %v1710 = vsel %vm628, %v1256, 0.0
        %1711 = vadd.xlane.f32.xlu0 %v1710
        %v1712 = vpop.xlane.xlu0 %1711
        %v1713 = vsel %vm628, %v1257, 0.0
        %1714 = vadd.xlane.f32.xlu0 %v1713
        %v1715 = vpop.xlane.xlu0 %1714
        %v1716 = vsel %vm628, %v1258, 0.0
        %1717 = vadd.xlane.f32.xlu0 %v1716
        %v1718 = vpop.xlane.xlu0 %1717
        %v1719 = vsel %vm628, %v1259, 0.0
        %1720 = vadd.xlane.f32.xlu0 %v1719
        %v1721 = vpop.xlane.xlu0 %1720
        %v1722 = vsel %vm628, %v1260, 0.0
        %1723 = vadd.xlane.f32.xlu0 %v1722
        %v1724 = vpop.xlane.xlu0 %1723
        %v1725 = vsel %vm628, %v1261, 0.0
        %1726 = vadd.xlane.f32.xlu0 %v1725
        %v1727 = vpop.xlane.xlu0 %1726
        %v1728 = vsel %vm628, %v1262, 0.0
        %1729 = vadd.xlane.f32.xlu0 %v1728
        %v1730 = vpop.xlane.xlu0 %1729
        %v1731 = vsel %vm628, %v1263, 0.0
        %1732 = vadd.xlane.f32.xlu0 %v1731
        %v1733 = vpop.xlane.xlu0 %1732
        %v1734 = vsel %vm628, %v1264, 0.0
        %1735 = vadd.xlane.f32.xlu0 %v1734
        %v1736 = vpop.xlane.xlu0 %1735
        %v1737 = vsel %vm628, %v1265, 0.0
        %1738 = vadd.xlane.f32.xlu0 %v1737
        %v1739 = vpop.xlane.xlu0 %1738
        %v1740 = vsel %vm628, %v1266, 0.0
        %1741 = vadd.xlane.f32.xlu0 %v1740
        %v1742 = vpop.xlane.xlu0 %1741
        %v1743 = vsel %vm628, %v1267, 0.0
        %1744 = vadd.xlane.f32.xlu0 %v1743
        %v1745 = vpop.xlane.xlu0 %1744
        %v1746 = vsel %vm628, %v1268, 0.0
        %1747 = vadd.xlane.f32.xlu0 %v1746
        %v1748 = vpop.xlane.xlu0 %1747
        %1749 = vmatpush.msra.mxu0 %v676
        %1750 = vmatpush.msra.mxu0 %v673
        %1751 = vmatpush.msra.mxu0 %v670
        %1752 = vmatpush.msra.mxu0 %v667
        %1753 = vmatpush.msra.mxu0 %v664
        %1754 = vmatpush.msra.mxu0 %v661
        %1755 = vmatpush.msra.mxu0 %v658
        %1756 = vmatpush.msra.mxu0 %v655
        %1757 = vmatpush.msra.mxu0 %v652
        %1758 = vmatpush.msra.mxu0 %v649
        %1759 = vmatpush.msra.mxu0 %v646
        %1760 = vmatpush.msra.mxu0 %v643
        %1761 = vmatpush.msra.mxu0 %v640
        %1762 = vmatpush.msra.mxu0 %v637
        %1763 = vmatpush.msra.mxu0 %v634
        %1764 = vmatpush.msra.mxu0 %v631
        %1765 = vmatmul.f32.gmra.mxu0 %v264
        %v1766 = vpop.f32.mrf.mxu0
        %v1767 = vadd.f32 0.0, %v1766
        %1768 = vmatmul.f32.gmra.mxu0 %v274
        %v1769 = vpop.f32.mrf.mxu0
        %v1770 = vadd.f32 0.0, %v1769
        %1771 = vmatmul.f32.gmra.mxu0 %v284
        %v1772 = vpop.f32.mrf.mxu0
        %v1773 = vadd.f32 0.0, %v1772
        %1774 = vmatmul.f32.gmra.mxu0 %v294
        %v1775 = vpop.f32.mrf.mxu0
        %v1776 = vadd.f32 0.0, %v1775
        %1777 = vdwg.mxu0
        %1778 = vmatpush.msra.mxu0 %v724
        %1779 = vmatpush.msra.mxu0 %v721
        %1780 = vmatpush.msra.mxu0 %v718
        %1781 = vmatpush.msra.mxu0 %v715
        %1782 = vmatpush.msra.mxu0 %v712
        %1783 = vmatpush.msra.mxu0 %v709
        %1784 = vmatpush.msra.mxu0 %v706
        %1785 = vmatpush.msra.mxu0 %v703
        %1786 = vmatpush.msra.mxu0 %v700
        %1787 = vmatpush.msra.mxu0 %v697
        %1788 = vmatpush.msra.mxu0 %v694
        %1789 = vmatpush.msra.mxu0 %v691
        %1790 = vmatpush.msra.mxu0 %v688
        %1791 = vmatpush.msra.mxu0 %v685
        %1792 = vmatpush.msra.mxu0 %v682
        %1793 = vmatpush.msra.mxu0 %v679
        %1794 = vmatmul.f32.gmra.mxu0 %v265
        %v1795 = vpop.f32.mrf.mxu0
        %v1796 = vadd.f32 %v1767, %v1795
        %1797 = vmatmul.f32.gmra.mxu0 %v275
        %v1798 = vpop.f32.mrf.mxu0
        %v1799 = vadd.f32 %v1770, %v1798
        %1800 = vmatmul.f32.gmra.mxu0 %v285
        %v1801 = vpop.f32.mrf.mxu0
        %v1802 = vadd.f32 %v1773, %v1801
        %1803 = vmatmul.f32.gmra.mxu0 %v295
        %v1804 = vpop.f32.mrf.mxu0
        %v1805 = vadd.f32 %v1776, %v1804
        %1806 = vdwg.mxu0
        %1807 = vmatpush.msra.mxu0 %v772
        %1808 = vmatpush.msra.mxu0 %v769
        %1809 = vmatpush.msra.mxu0 %v766
        %1810 = vmatpush.msra.mxu0 %v763
        %1811 = vmatpush.msra.mxu0 %v760
        %1812 = vmatpush.msra.mxu0 %v757
        %1813 = vmatpush.msra.mxu0 %v754
        %1814 = vmatpush.msra.mxu0 %v751
        %1815 = vmatpush.msra.mxu0 %v748
        %1816 = vmatpush.msra.mxu0 %v745
        %1817 = vmatpush.msra.mxu0 %v742
        %1818 = vmatpush.msra.mxu0 %v739
        %1819 = vmatpush.msra.mxu0 %v736
        %1820 = vmatpush.msra.mxu0 %v733
        %1821 = vmatpush.msra.mxu0 %v730
        %1822 = vmatpush.msra.mxu0 %v727
        %1823 = vmatmul.f32.gmra.mxu0 %v266
        %v1824 = vpop.f32.mrf.mxu0
        %v1825 = vadd.f32 %v1796, %v1824
        %1826 = vmatmul.f32.gmra.mxu0 %v276
        %v1827 = vpop.f32.mrf.mxu0
        %v1828 = vadd.f32 %v1799, %v1827
        %1829 = vmatmul.f32.gmra.mxu0 %v286
        %v1830 = vpop.f32.mrf.mxu0
        %v1831 = vadd.f32 %v1802, %v1830
        %1832 = vmatmul.f32.gmra.mxu0 %v296
        %v1833 = vpop.f32.mrf.mxu0
        %v1834 = vadd.f32 %v1805, %v1833
        %1835 = vdwg.mxu0
        %1836 = vmatpush.msra.mxu0 %v820
        %1837 = vmatpush.msra.mxu0 %v817
        %1838 = vmatpush.msra.mxu0 %v814
        %1839 = vmatpush.msra.mxu0 %v811
        %1840 = vmatpush.msra.mxu0 %v808
        %1841 = vmatpush.msra.mxu0 %v805
        %1842 = vmatpush.msra.mxu0 %v802
        %1843 = vmatpush.msra.mxu0 %v799
        %1844 = vmatpush.msra.mxu0 %v796
        %1845 = vmatpush.msra.mxu0 %v793
        %1846 = vmatpush.msra.mxu0 %v790
        %1847 = vmatpush.msra.mxu0 %v787
        %1848 = vmatpush.msra.mxu0 %v784
        %1849 = vmatpush.msra.mxu0 %v781
        %1850 = vmatpush.msra.mxu0 %v778
        %1851 = vmatpush.msra.mxu0 %v775
        %1852 = vmatmul.f32.gmra.mxu0 %v267
        %v1853 = vpop.f32.mrf.mxu0
        %v1854 = vadd.f32 %v1825, %v1853
        %1855 = vmatmul.f32.gmra.mxu0 %v277
        %v1856 = vpop.f32.mrf.mxu0
        %v1857 = vadd.f32 %v1828, %v1856
        %1858 = vmatmul.f32.gmra.mxu0 %v287
        %v1859 = vpop.f32.mrf.mxu0
        %v1860 = vadd.f32 %v1831, %v1859
        %1861 = vmatmul.f32.gmra.mxu0 %v297
        %v1862 = vpop.f32.mrf.mxu0
        %v1863 = vadd.f32 %v1834, %v1862
        %1864 = vdwg.mxu0
        %1865 = vmatpush.msra.mxu0 %v868
        %1866 = vmatpush.msra.mxu0 %v865
        %1867 = vmatpush.msra.mxu0 %v862
        %1868 = vmatpush.msra.mxu0 %v859
        %1869 = vmatpush.msra.mxu0 %v856
        %1870 = vmatpush.msra.mxu0 %v853
        %1871 = vmatpush.msra.mxu0 %v850
        %1872 = vmatpush.msra.mxu0 %v847
        %1873 = vmatpush.msra.mxu0 %v844
        %1874 = vmatpush.msra.mxu0 %v841
        %1875 = vmatpush.msra.mxu0 %v838
        %1876 = vmatpush.msra.mxu0 %v835
        %1877 = vmatpush.msra.mxu0 %v832
        %1878 = vmatpush.msra.mxu0 %v829
        %1879 = vmatpush.msra.mxu0 %v826
        %1880 = vmatpush.msra.mxu0 %v823
        %1881 = vmatmul.f32.gmra.mxu0 %v268
        %v1882 = vpop.f32.mrf.mxu0
        %v1883 = vadd.f32 %v1854, %v1882
        %1884 = vmatmul.f32.gmra.mxu0 %v278
        %v1885 = vpop.f32.mrf.mxu0
        %v1886 = vadd.f32 %v1857, %v1885
        %1887 = vmatmul.f32.gmra.mxu0 %v288
        %v1888 = vpop.f32.mrf.mxu0
        %v1889 = vadd.f32 %v1860, %v1888
        %1890 = vmatmul.f32.gmra.mxu0 %v298
        %v1891 = vpop.f32.mrf.mxu0
        %v1892 = vadd.f32 %v1863, %v1891
        %1893 = vdwg.mxu0
        %1894 = vmatpush.msra.mxu0 %v916
        %1895 = vmatpush.msra.mxu0 %v913
        %1896 = vmatpush.msra.mxu0 %v910
        %1897 = vmatpush.msra.mxu0 %v907
        %1898 = vmatpush.msra.mxu0 %v904
        %1899 = vmatpush.msra.mxu0 %v901
        %1900 = vmatpush.msra.mxu0 %v898
        %1901 = vmatpush.msra.mxu0 %v895
        %1902 = vmatpush.msra.mxu0 %v892
        %1903 = vmatpush.msra.mxu0 %v889
        %1904 = vmatpush.msra.mxu0 %v886
        %1905 = vmatpush.msra.mxu0 %v883
        %1906 = vmatpush.msra.mxu0 %v880
        %1907 = vmatpush.msra.mxu0 %v877
        %1908 = vmatpush.msra.mxu0 %v874
        %1909 = vmatpush.msra.mxu0 %v871
        %1910 = vmatmul.f32.gmra.mxu0 %v269
        %v1911 = vpop.f32.mrf.mxu0
        %v1912 = vadd.f32 %v1883, %v1911
        %1913 = vmatmul.f32.gmra.mxu0 %v279
        %v1914 = vpop.f32.mrf.mxu0
        %v1915 = vadd.f32 %v1886, %v1914
        %1916 = vmatmul.f32.gmra.mxu0 %v289
        %v1917 = vpop.f32.mrf.mxu0
        %v1918 = vadd.f32 %v1889, %v1917
        %1919 = vmatmul.f32.gmra.mxu0 %v299
        %v1920 = vpop.f32.mrf.mxu0
        %v1921 = vadd.f32 %v1892, %v1920
        %1922 = vdwg.mxu0
        %1923 = vmatpush.msra.mxu0 %v964
        %1924 = vmatpush.msra.mxu0 %v961
        %1925 = vmatpush.msra.mxu0 %v958
        %1926 = vmatpush.msra.mxu0 %v955
        %1927 = vmatpush.msra.mxu0 %v952
        %1928 = vmatpush.msra.mxu0 %v949
        %1929 = vmatpush.msra.mxu0 %v946
        %1930 = vmatpush.msra.mxu0 %v943
        %1931 = vmatpush.msra.mxu0 %v940
        %1932 = vmatpush.msra.mxu0 %v937
        %1933 = vmatpush.msra.mxu0 %v934
        %1934 = vmatpush.msra.mxu0 %v931
        %1935 = vmatpush.msra.mxu0 %v928
        %1936 = vmatpush.msra.mxu0 %v925
        %1937 = vmatpush.msra.mxu0 %v922
        %1938 = vmatpush.msra.mxu0 %v919
        %1939 = vmatmul.f32.gmra.mxu0 %v270
        %v1940 = vpop.f32.mrf.mxu0
        %v1941 = vadd.f32 %v1912, %v1940
        %1942 = vmatmul.f32.gmra.mxu0 %v280
        %v1943 = vpop.f32.mrf.mxu0
        %v1944 = vadd.f32 %v1915, %v1943
        %1945 = vmatmul.f32.gmra.mxu0 %v290
        %v1946 = vpop.f32.mrf.mxu0
        %v1947 = vadd.f32 %v1918, %v1946
        %1948 = vmatmul.f32.gmra.mxu0 %v300
        %v1949 = vpop.f32.mrf.mxu0
        %v1950 = vadd.f32 %v1921, %v1949
        %1951 = vdwg.mxu0
        %1952 = vmatpush.msra.mxu0 %v1012
        %1953 = vmatpush.msra.mxu0 %v1009
        %1954 = vmatpush.msra.mxu0 %v1006
        %1955 = vmatpush.msra.mxu0 %v1003
        %1956 = vmatpush.msra.mxu0 %v1000
        %1957 = vmatpush.msra.mxu0 %v997
        %1958 = vmatpush.msra.mxu0 %v994
        %1959 = vmatpush.msra.mxu0 %v991
        %1960 = vmatpush.msra.mxu0 %v988
        %1961 = vmatpush.msra.mxu0 %v985
        %1962 = vmatpush.msra.mxu0 %v982
        %1963 = vmatpush.msra.mxu0 %v979
        %1964 = vmatpush.msra.mxu0 %v976
        %1965 = vmatpush.msra.mxu0 %v973
        %1966 = vmatpush.msra.mxu0 %v970
        %1967 = vmatpush.msra.mxu0 %v967
        %1968 = vmatmul.f32.gmra.mxu0 %v271
        %v1969 = vpop.f32.mrf.mxu0
        %v1970 = vadd.f32 %v1941, %v1969
        %1971 = vmatmul.f32.gmra.mxu0 %v281
        %v1972 = vpop.f32.mrf.mxu0
        %v1973 = vadd.f32 %v1944, %v1972
        %1974 = vmatmul.f32.gmra.mxu0 %v291
        %v1975 = vpop.f32.mrf.mxu0
        %v1976 = vadd.f32 %v1947, %v1975
        %1977 = vmatmul.f32.gmra.mxu0 %v301
        %v1978 = vpop.f32.mrf.mxu0
        %v1979 = vadd.f32 %v1950, %v1978
        %1980 = vdwg.mxu0
        %1981 = vmatpush.msra.mxu0 %v1060
        %1982 = vmatpush.msra.mxu0 %v1057
        %1983 = vmatpush.msra.mxu0 %v1054
        %1984 = vmatpush.msra.mxu0 %v1051
        %1985 = vmatpush.msra.mxu0 %v1048
        %1986 = vmatpush.msra.mxu0 %v1045
        %1987 = vmatpush.msra.mxu0 %v1042
        %1988 = vmatpush.msra.mxu0 %v1039
        %1989 = vmatpush.msra.mxu0 %v1036
        %1990 = vmatpush.msra.mxu0 %v1033
        %1991 = vmatpush.msra.mxu0 %v1030
        %1992 = vmatpush.msra.mxu0 %v1027
        %1993 = vmatpush.msra.mxu0 %v1024
        %1994 = vmatpush.msra.mxu0 %v1021
        %1995 = vmatpush.msra.mxu0 %v1018
        %1996 = vmatpush.msra.mxu0 %v1015
        %1997 = vmatmul.f32.gmra.mxu0 %v272
        %v1998 = vpop.f32.mrf.mxu0
        %v1999 = vadd.f32 %v1970, %v1998
        %2000 = vmatmul.f32.gmra.mxu0 %v282
        %v2001 = vpop.f32.mrf.mxu0
        %v2002 = vadd.f32 %v1973, %v2001
        %2003 = vmatmul.f32.gmra.mxu0 %v292
        %v2004 = vpop.f32.mrf.mxu0
        %v2005 = vadd.f32 %v1976, %v2004
        %2006 = vmatmul.f32.gmra.mxu0 %v302
        %v2007 = vpop.f32.mrf.mxu0
        %v2008 = vadd.f32 %v1979, %v2007
        %2009 = vdwg.mxu0
        %2010 = vmatpush.msra.mxu0 %v1108
        %2011 = vmatpush.msra.mxu0 %v1105
        %2012 = vmatpush.msra.mxu0 %v1102
        %2013 = vmatpush.msra.mxu0 %v1099
        %2014 = vmatpush.msra.mxu0 %v1096
        %2015 = vmatpush.msra.mxu0 %v1093
        %2016 = vmatpush.msra.mxu0 %v1090
        %2017 = vmatpush.msra.mxu0 %v1087
        %2018 = vmatpush.msra.mxu0 %v1084
        %2019 = vmatpush.msra.mxu0 %v1081
        %2020 = vmatpush.msra.mxu0 %v1078
        %2021 = vmatpush.msra.mxu0 %v1075
        %2022 = vmatpush.msra.mxu0 %v1072
        %2023 = vmatpush.msra.mxu0 %v1069
        %2024 = vmatpush.msra.mxu0 %v1066
        %2025 = vmatpush.msra.mxu0 %v1063
        %2026 = vmatmul.f32.gmra.mxu0 %v273
        %v2027 = vpop.f32.mrf.mxu0
        %v2028 = vadd.f32 %v1999, %v2027
        %2029 = vmatmul.f32.gmra.mxu0 %v283
        %v2030 = vpop.f32.mrf.mxu0
        %v2031 = vadd.f32 %v2002, %v2030
        %2032 = vmatmul.f32.gmra.mxu0 %v293
        %v2033 = vpop.f32.mrf.mxu0
        %v2034 = vadd.f32 %v2005, %v2033
        %2035 = vmatmul.f32.gmra.mxu0 %v303
        %v2036 = vpop.f32.mrf.mxu0
        %v2037 = vadd.f32 %v2008, %v2036
        %2038 = vdwg.mxu0
        %2039 = vmatpush.msra.mxu0 %v1316
        %2040 = vmatpush.msra.mxu0 %v1313
        %2041 = vmatpush.msra.mxu0 %v1310
        %2042 = vmatpush.msra.mxu0 %v1307
        %2043 = vmatpush.msra.mxu0 %v1304
        %2044 = vmatpush.msra.mxu0 %v1301
        %2045 = vmatpush.msra.mxu0 %v1298
        %2046 = vmatpush.msra.mxu0 %v1295
        %2047 = vmatpush.msra.mxu0 %v1292
        %2048 = vmatpush.msra.mxu0 %v1289
        %2049 = vmatpush.msra.mxu0 %v1286
        %2050 = vmatpush.msra.mxu0 %v1283
        %2051 = vmatpush.msra.mxu0 %v1280
        %2052 = vmatpush.msra.mxu0 %v1277
        %2053 = vmatpush.msra.mxu0 %v1274
        %2054 = vmatpush.msra.mxu0 %v1271
        %2055 = vmatmul.f32.gmra.mxu0 %v264
        %v2056 = vpop.f32.mrf.mxu0
        %v2057 = vadd.f32 0.0, %v2056
        %2058 = vmatmul.f32.gmra.mxu0 %v274
        %v2059 = vpop.f32.mrf.mxu0
        %v2060 = vadd.f32 0.0, %v2059
        %2061 = vmatmul.f32.gmra.mxu0 %v284
        %v2062 = vpop.f32.mrf.mxu0
        %v2063 = vadd.f32 0.0, %v2062
        %2064 = vmatmul.f32.gmra.mxu0 %v294
        %v2065 = vpop.f32.mrf.mxu0
        %v2066 = vadd.f32 0.0, %v2065
        %2067 = vdwg.mxu0
        %2068 = vmatpush.msra.mxu0 %v1364
        %2069 = vmatpush.msra.mxu0 %v1361
        %2070 = vmatpush.msra.mxu0 %v1358
        %2071 = vmatpush.msra.mxu0 %v1355
        %2072 = vmatpush.msra.mxu0 %v1352
        %2073 = vmatpush.msra.mxu0 %v1349
        %2074 = vmatpush.msra.mxu0 %v1346
        %2075 = vmatpush.msra.mxu0 %v1343
        %2076 = vmatpush.msra.mxu0 %v1340
        %2077 = vmatpush.msra.mxu0 %v1337
        %2078 = vmatpush.msra.mxu0 %v1334
        %2079 = vmatpush.msra.mxu0 %v1331
        %2080 = vmatpush.msra.mxu0 %v1328
        %2081 = vmatpush.msra.mxu0 %v1325
        %2082 = vmatpush.msra.mxu0 %v1322
        %2083 = vmatpush.msra.mxu0 %v1319
        %2084 = vmatmul.f32.gmra.mxu0 %v265
        %v2085 = vpop.f32.mrf.mxu0
        %v2086 = vadd.f32 %v2057, %v2085
        %2087 = vmatmul.f32.gmra.mxu0 %v275
        %v2088 = vpop.f32.mrf.mxu0
        %v2089 = vadd.f32 %v2060, %v2088
        %2090 = vmatmul.f32.gmra.mxu0 %v285
        %v2091 = vpop.f32.mrf.mxu0
        %v2092 = vadd.f32 %v2063, %v2091
        %2093 = vmatmul.f32.gmra.mxu0 %v295
        %v2094 = vpop.f32.mrf.mxu0
        %v2095 = vadd.f32 %v2066, %v2094
        %2096 = vdwg.mxu0
        %2097 = vmatpush.msra.mxu0 %v1412
        %2098 = vmatpush.msra.mxu0 %v1409
        %2099 = vmatpush.msra.mxu0 %v1406
        %2100 = vmatpush.msra.mxu0 %v1403
        %2101 = vmatpush.msra.mxu0 %v1400
        %2102 = vmatpush.msra.mxu0 %v1397
        %2103 = vmatpush.msra.mxu0 %v1394
        %2104 = vmatpush.msra.mxu0 %v1391
        %2105 = vmatpush.msra.mxu0 %v1388
        %2106 = vmatpush.msra.mxu0 %v1385
        %2107 = vmatpush.msra.mxu0 %v1382
        %2108 = vmatpush.msra.mxu0 %v1379
        %2109 = vmatpush.msra.mxu0 %v1376
        %2110 = vmatpush.msra.mxu0 %v1373
        %2111 = vmatpush.msra.mxu0 %v1370
        %2112 = vmatpush.msra.mxu0 %v1367
        %2113 = vmatmul.f32.gmra.mxu0 %v266
        %v2114 = vpop.f32.mrf.mxu0
        %v2115 = vadd.f32 %v2086, %v2114
        %2116 = vmatmul.f32.gmra.mxu0 %v276
        %v2117 = vpop.f32.mrf.mxu0
        %v2118 = vadd.f32 %v2089, %v2117
        %2119 = vmatmul.f32.gmra.mxu0 %v286
        %v2120 = vpop.f32.mrf.mxu0
        %v2121 = vadd.f32 %v2092, %v2120
        %2122 = vmatmul.f32.gmra.mxu0 %v296
        %v2123 = vpop.f32.mrf.mxu0
        %v2124 = vadd.f32 %v2095, %v2123
        %2125 = vdwg.mxu0
        %2126 = vmatpush.msra.mxu0 %v1460
        %2127 = vmatpush.msra.mxu0 %v1457
        %2128 = vmatpush.msra.mxu0 %v1454
        %2129 = vmatpush.msra.mxu0 %v1451
        %2130 = vmatpush.msra.mxu0 %v1448
        %2131 = vmatpush.msra.mxu0 %v1445
        %2132 = vmatpush.msra.mxu0 %v1442
        %2133 = vmatpush.msra.mxu0 %v1439
        %2134 = vmatpush.msra.mxu0 %v1436
        %2135 = vmatpush.msra.mxu0 %v1433
        %2136 = vmatpush.msra.mxu0 %v1430
        %2137 = vmatpush.msra.mxu0 %v1427
        %2138 = vmatpush.msra.mxu0 %v1424
        %2139 = vmatpush.msra.mxu0 %v1421
        %2140 = vmatpush.msra.mxu0 %v1418
        %2141 = vmatpush.msra.mxu0 %v1415
        %2142 = vmatmul.f32.gmra.mxu0 %v267
        %v2143 = vpop.f32.mrf.mxu0
        %v2144 = vadd.f32 %v2115, %v2143
        %2145 = vmatmul.f32.gmra.mxu0 %v277
        %v2146 = vpop.f32.mrf.mxu0
        %v2147 = vadd.f32 %v2118, %v2146
        %2148 = vmatmul.f32.gmra.mxu0 %v287
        %v2149 = vpop.f32.mrf.mxu0
        %v2150 = vadd.f32 %v2121, %v2149
        %2151 = vmatmul.f32.gmra.mxu0 %v297
        %v2152 = vpop.f32.mrf.mxu0
        %v2153 = vadd.f32 %v2124, %v2152
        %2154 = vdwg.mxu0
        %2155 = vmatpush.msra.mxu0 %v1508
        %2156 = vmatpush.msra.mxu0 %v1505
        %2157 = vmatpush.msra.mxu0 %v1502
        %2158 = vmatpush.msra.mxu0 %v1499
        %2159 = vmatpush.msra.mxu0 %v1496
        %2160 = vmatpush.msra.mxu0 %v1493
        %2161 = vmatpush.msra.mxu0 %v1490
        %2162 = vmatpush.msra.mxu0 %v1487
        %2163 = vmatpush.msra.mxu0 %v1484
        %2164 = vmatpush.msra.mxu0 %v1481
        %2165 = vmatpush.msra.mxu0 %v1478
        %2166 = vmatpush.msra.mxu0 %v1475
        %2167 = vmatpush.msra.mxu0 %v1472
        %2168 = vmatpush.msra.mxu0 %v1469
        %2169 = vmatpush.msra.mxu0 %v1466
        %2170 = vmatpush.msra.mxu0 %v1463
        %2171 = vmatmul.f32.gmra.mxu0 %v268
        %v2172 = vpop.f32.mrf.mxu0
        %v2173 = vadd.f32 %v2144, %v2172
        %2174 = vmatmul.f32.gmra.mxu0 %v278
        %v2175 = vpop.f32.mrf.mxu0
        %v2176 = vadd.f32 %v2147, %v2175
        %2177 = vmatmul.f32.gmra.mxu0 %v288
        %v2178 = vpop.f32.mrf.mxu0
        %v2179 = vadd.f32 %v2150, %v2178
        %2180 = vmatmul.f32.gmra.mxu0 %v298
        %v2181 = vpop.f32.mrf.mxu0
        %v2182 = vadd.f32 %v2153, %v2181
        %2183 = vdwg.mxu0
        %2184 = vmatpush.msra.mxu0 %v1556
        %2185 = vmatpush.msra.mxu0 %v1553
        %2186 = vmatpush.msra.mxu0 %v1550
        %2187 = vmatpush.msra.mxu0 %v1547
        %2188 = vmatpush.msra.mxu0 %v1544
        %2189 = vmatpush.msra.mxu0 %v1541
        %2190 = vmatpush.msra.mxu0 %v1538
        %2191 = vmatpush.msra.mxu0 %v1535
        %2192 = vmatpush.msra.mxu0 %v1532
        %2193 = vmatpush.msra.mxu0 %v1529
        %2194 = vmatpush.msra.mxu0 %v1526
        %2195 = vmatpush.msra.mxu0 %v1523
        %2196 = vmatpush.msra.mxu0 %v1520
        %2197 = vmatpush.msra.mxu0 %v1517
        %2198 = vmatpush.msra.mxu0 %v1514
        %2199 = vmatpush.msra.mxu0 %v1511
        %2200 = vmatmul.f32.gmra.mxu0 %v269
        %v2201 = vpop.f32.mrf.mxu0
        %v2202 = vadd.f32 %v2173, %v2201
        %2203 = vmatmul.f32.gmra.mxu0 %v279
        %v2204 = vpop.f32.mrf.mxu0
        %v2205 = vadd.f32 %v2176, %v2204
        %2206 = vmatmul.f32.gmra.mxu0 %v289
        %v2207 = vpop.f32.mrf.mxu0
        %v2208 = vadd.f32 %v2179, %v2207
        %2209 = vmatmul.f32.gmra.mxu0 %v299
        %v2210 = vpop.f32.mrf.mxu0
        %v2211 = vadd.f32 %v2182, %v2210
        %2212 = vdwg.mxu0
        %2213 = vmatpush.msra.mxu0 %v1604
        %2214 = vmatpush.msra.mxu0 %v1601
        %2215 = vmatpush.msra.mxu0 %v1598
        %2216 = vmatpush.msra.mxu0 %v1595
        %2217 = vmatpush.msra.mxu0 %v1592
        %2218 = vmatpush.msra.mxu0 %v1589
        %2219 = vmatpush.msra.mxu0 %v1586
        %2220 = vmatpush.msra.mxu0 %v1583
        %2221 = vmatpush.msra.mxu0 %v1580
        %2222 = vmatpush.msra.mxu0 %v1577
        %2223 = vmatpush.msra.mxu0 %v1574
        %2224 = vmatpush.msra.mxu0 %v1571
        %2225 = vmatpush.msra.mxu0 %v1568
        %2226 = vmatpush.msra.mxu0 %v1565
        %2227 = vmatpush.msra.mxu0 %v1562
        %2228 = vmatpush.msra.mxu0 %v1559
        %2229 = vmatmul.f32.gmra.mxu0 %v270
        %v2230 = vpop.f32.mrf.mxu0
        %v2231 = vadd.f32 %v2202, %v2230
        %2232 = vmatmul.f32.gmra.mxu0 %v280
        %v2233 = vpop.f32.mrf.mxu0
        %v2234 = vadd.f32 %v2205, %v2233
        %2235 = vmatmul.f32.gmra.mxu0 %v290
        %v2236 = vpop.f32.mrf.mxu0
        %v2237 = vadd.f32 %v2208, %v2236
        %2238 = vmatmul.f32.gmra.mxu0 %v300
        %v2239 = vpop.f32.mrf.mxu0
        %v2240 = vadd.f32 %v2211, %v2239
        %2241 = vdwg.mxu0
        %2242 = vmatpush.msra.mxu0 %v1652
        %2243 = vmatpush.msra.mxu0 %v1649
        %2244 = vmatpush.msra.mxu0 %v1646
        %2245 = vmatpush.msra.mxu0 %v1643
        %2246 = vmatpush.msra.mxu0 %v1640
        %2247 = vmatpush.msra.mxu0 %v1637
        %2248 = vmatpush.msra.mxu0 %v1634
        %2249 = vmatpush.msra.mxu0 %v1631
        %2250 = vmatpush.msra.mxu0 %v1628
        %2251 = vmatpush.msra.mxu0 %v1625
        %2252 = vmatpush.msra.mxu0 %v1622
        %2253 = vmatpush.msra.mxu0 %v1619
        %2254 = vmatpush.msra.mxu0 %v1616
        %2255 = vmatpush.msra.mxu0 %v1613
        %2256 = vmatpush.msra.mxu0 %v1610
        %2257 = vmatpush.msra.mxu0 %v1607
        %2258 = vmatmul.f32.gmra.mxu0 %v271
        %v2259 = vpop.f32.mrf.mxu0
        %v2260 = vadd.f32 %v2231, %v2259
        %2261 = vmatmul.f32.gmra.mxu0 %v281
        %v2262 = vpop.f32.mrf.mxu0
        %v2263 = vadd.f32 %v2234, %v2262
        %2264 = vmatmul.f32.gmra.mxu0 %v291
        %v2265 = vpop.f32.mrf.mxu0
        %v2266 = vadd.f32 %v2237, %v2265
        %2267 = vmatmul.f32.gmra.mxu0 %v301
        %v2268 = vpop.f32.mrf.mxu0
        %v2269 = vadd.f32 %v2240, %v2268
        %2270 = vdwg.mxu0
        %2271 = vmatpush.msra.mxu0 %v1700
        %2272 = vmatpush.msra.mxu0 %v1697
        %2273 = vmatpush.msra.mxu0 %v1694
        %2274 = vmatpush.msra.mxu0 %v1691
        %2275 = vmatpush.msra.mxu0 %v1688
        %2276 = vmatpush.msra.mxu0 %v1685
        %2277 = vmatpush.msra.mxu0 %v1682
        %2278 = vmatpush.msra.mxu0 %v1679
        %2279 = vmatpush.msra.mxu0 %v1676
        %2280 = vmatpush.msra.mxu0 %v1673
        %2281 = vmatpush.msra.mxu0 %v1670
        %2282 = vmatpush.msra.mxu0 %v1667
        %2283 = vmatpush.msra.mxu0 %v1664
        %2284 = vmatpush.msra.mxu0 %v1661
        %2285 = vmatpush.msra.mxu0 %v1658
        %2286 = vmatpush.msra.mxu0 %v1655
        %2287 = vmatmul.f32.gmra.mxu0 %v272
        %v2288 = vpop.f32.mrf.mxu0
        %v2289 = vadd.f32 %v2260, %v2288
        %2290 = vmatmul.f32.gmra.mxu0 %v282
        %v2291 = vpop.f32.mrf.mxu0
        %v2292 = vadd.f32 %v2263, %v2291
        %2293 = vmatmul.f32.gmra.mxu0 %v292
        %v2294 = vpop.f32.mrf.mxu0
        %v2295 = vadd.f32 %v2266, %v2294
        %2296 = vmatmul.f32.gmra.mxu0 %v302
        %v2297 = vpop.f32.mrf.mxu0
        %v2298 = vadd.f32 %v2269, %v2297
        %2299 = vdwg.mxu0
        %2300 = vmatpush.msra.mxu0 %v1748
        %2301 = vmatpush.msra.mxu0 %v1745
        %2302 = vmatpush.msra.mxu0 %v1742
        %2303 = vmatpush.msra.mxu0 %v1739
        %2304 = vmatpush.msra.mxu0 %v1736
        %2305 = vmatpush.msra.mxu0 %v1733
        %2306 = vmatpush.msra.mxu0 %v1730
        %2307 = vmatpush.msra.mxu0 %v1727
        %2308 = vmatpush.msra.mxu0 %v1724
        %2309 = vmatpush.msra.mxu0 %v1721
        %2310 = vmatpush.msra.mxu0 %v1718
        %2311 = vmatpush.msra.mxu0 %v1715
        %2312 = vmatpush.msra.mxu0 %v1712
        %2313 = vmatpush.msra.mxu0 %v1709
        %2314 = vmatpush.msra.mxu0 %v1706
        %2315 = vmatpush.msra.mxu0 %v1703
        %2316 = vmatmul.f32.gmra.mxu0 %v273
        %v2317 = vpop.f32.mrf.mxu0
        %v2318 = vadd.f32 %v2289, %v2317
        %2319 = vmatmul.f32.gmra.mxu0 %v283
        %v2320 = vpop.f32.mrf.mxu0
        %v2321 = vadd.f32 %v2292, %v2320
        %2322 = vmatmul.f32.gmra.mxu0 %v293
        %v2323 = vpop.f32.mrf.mxu0
        %v2324 = vadd.f32 %v2295, %v2323
        %2325 = vmatmul.f32.gmra.mxu0 %v303
        %v2326 = vpop.f32.mrf.mxu0
        %v2327 = vadd.f32 %v2298, %v2326
        %2328 = vdwg.mxu0
        %v2329 = vmul.f32 %v2028, 0.000390625
        %v2330 = vmul.f32 %v2031, 0.000390625
        %v2331 = vmul.f32 %v2034, 0.000390625
        %v2332 = vmul.f32 %v2037, 0.000390625
        %v2333 = vmul.f32 %v2318, 0.000390625
        %v2334 = vmul.f32 %v2321, 0.000390625
        %v2335 = vmul.f32 %v2324, 0.000390625
        %v2336 = vmul.f32 %v2327, 0.000390625
        %v2337 = vmul.f32 %v2329, %v2329
        %v2338 = vmul.f32 %v2330, %v2330
        %v2339 = vmul.f32 %v2331, %v2331
        %v2340 = vmul.f32 %v2332, %v2332
        %v2341 = vsub.f32 %v2333, %v2337
        %v2342 = vsub.f32 %v2334, %v2338
        %v2343 = vsub.f32 %v2335, %v2339
        %v2344 = vsub.f32 %v2336, %v2340
        %v2345 = vmax.f32 %v2341, 0.0
        %v2346 = vmax.f32 %v2342, 0.0
        %v2347 = vmax.f32 %v2343, 0.0
        %v2348 = vmax.f32 %v2344, 0.0
        %v2349 = vadd.f32 %v2345, 1e-05
        %v2350 = vadd.f32 %v2346, 1e-05
        %v2351 = vadd.f32 %v2347, 1e-05
        %v2352 = vadd.f32 %v2348, 1e-05
        %v2353 = vrsqrt.pop %v2349
        %v2354 = vmul.f32 %v2353, %v2349
        %v2355 = vmul.f32 %v2354, %v2353
        %v2356 = vmul.f32 0.5, %v2355
        %v2357 = vsub.f32 1.5, %v2356
        %v2358 = vmul.f32 %v2353, %v2357
        %vm2359 = vweird.f32 %v2349
        %vm2360 = vweird.f32 %v2353
        %vm2361 = vmor %vm2359, %vm2360
        %v2362 = vsel %vm2361, %v2353, %v2358
        %v2363 = vrsqrt.pop %v2350
        %v2364 = vmul.f32 %v2363, %v2350
        %v2365 = vmul.f32 %v2364, %v2363
        %v2366 = vmul.f32 0.5, %v2365
        %v2367 = vsub.f32 1.5, %v2366
        %v2368 = vmul.f32 %v2363, %v2367
        %vm2369 = vweird.f32 %v2350
        %vm2370 = vweird.f32 %v2363
        %vm2371 = vmor %vm2369, %vm2370
        %v2372 = vsel %vm2371, %v2363, %v2368
        %v2373 = vrsqrt.pop %v2351
        %v2374 = vmul.f32 %v2373, %v2351
        %v2375 = vmul.f32 %v2374, %v2373
        %v2376 = vmul.f32 0.5, %v2375
        %v2377 = vsub.f32 1.5, %v2376
        %v2378 = vmul.f32 %v2373, %v2377
        %vm2379 = vweird.f32 %v2351
        %vm2380 = vweird.f32 %v2373
        %vm2381 = vmor %vm2379, %vm2380
        %v2382 = vsel %vm2381, %v2373, %v2378
        %v2383 = vrsqrt.pop %v2352
        %v2384 = vmul.f32 %v2383, %v2352
        %v2385 = vmul.f32 %v2384, %v2383
        %v2386 = vmul.f32 0.5, %v2385
        %v2387 = vsub.f32 1.5, %v2386
        %v2388 = vmul.f32 %v2383, %v2387
        %vm2389 = vweird.f32 %v2352
        %vm2390 = vweird.f32 %v2383
        %vm2391 = vmor %vm2389, %vm2390
        %v2392 = vsel %vm2391, %v2383, %v2388
        %v2433 = vunpack.c.l.b16 %v224
        %v2434 = vunpack.c.h.b16 %v224
        %v2435 = vunpack.c.l.b16 %v225
        %v2436 = vunpack.c.h.b16 %v225
        %v2437 = vunpack.c.l.b16 %v226
        %v2438 = vunpack.c.h.b16 %v226
        %v2439 = vunpack.c.l.b16 %v227
        %v2440 = vunpack.c.h.b16 %v227
        %v2441 = vunpack.c.l.b16 %v228
        %v2442 = vunpack.c.h.b16 %v228
        %v2443 = vunpack.c.l.b16 %v229
        %v2444 = vunpack.c.h.b16 %v229
        %v2445 = vunpack.c.l.b16 %v230
        %v2446 = vunpack.c.h.b16 %v230
        %v2447 = vunpack.c.l.b16 %v231
        %v2448 = vunpack.c.h.b16 %v231
        %v2449 = vunpack.c.l.b16 %v232
        %v2450 = vunpack.c.h.b16 %v232
        %v2451 = vunpack.c.l.b16 %v233
        %v2452 = vunpack.c.h.b16 %v233
        %v2453 = vunpack.c.l.b16 %v234
        %v2454 = vunpack.c.h.b16 %v234
        %v2455 = vunpack.c.l.b16 %v235
        %v2456 = vunpack.c.h.b16 %v235
        %v2457 = vunpack.c.l.b16 %v236
        %v2458 = vunpack.c.h.b16 %v236
        %v2459 = vunpack.c.l.b16 %v237
        %v2460 = vunpack.c.h.b16 %v237
        %v2461 = vunpack.c.l.b16 %v238
        %v2462 = vunpack.c.h.b16 %v238
        %v2463 = vunpack.c.l.b16 %v239
        %v2464 = vunpack.c.h.b16 %v239
        %v2465 = vunpack.c.l.b16 %v240
        %v2466 = vunpack.c.h.b16 %v240
        %v2467 = vunpack.c.l.b16 %v241
        %v2468 = vunpack.c.h.b16 %v241
        %v2469 = vunpack.c.l.b16 %v242
        %v2470 = vunpack.c.h.b16 %v242
        %v2471 = vunpack.c.l.b16 %v243
        %v2472 = vunpack.c.h.b16 %v243
        %v2473 = vunpack.c.l.b16 %v244
        %v2474 = vunpack.c.h.b16 %v244
        %v2475 = vunpack.c.l.b16 %v245
        %v2476 = vunpack.c.h.b16 %v245
        %v2477 = vunpack.c.l.b16 %v246
        %v2478 = vunpack.c.h.b16 %v246
        %v2479 = vunpack.c.l.b16 %v247
        %v2480 = vunpack.c.h.b16 %v247
        %v2481 = vunpack.c.l.b16 %v248
        %v2482 = vunpack.c.h.b16 %v248
        %v2483 = vunpack.c.l.b16 %v249
        %v2484 = vunpack.c.h.b16 %v249
        %v2485 = vunpack.c.l.b16 %v250
        %v2486 = vunpack.c.h.b16 %v250
        %v2487 = vunpack.c.l.b16 %v251
        %v2488 = vunpack.c.h.b16 %v251
        %v2489 = vunpack.c.l.b16 %v252
        %v2490 = vunpack.c.h.b16 %v252
        %v2491 = vunpack.c.l.b16 %v253
        %v2492 = vunpack.c.h.b16 %v253
        %v2493 = vunpack.c.l.b16 %v254
        %v2494 = vunpack.c.h.b16 %v254
        %v2495 = vunpack.c.l.b16 %v255
        %v2496 = vunpack.c.h.b16 %v255
        %v2497 = vunpack.c.l.b16 %v256
        %v2498 = vunpack.c.h.b16 %v256
        %v2499 = vunpack.c.l.b16 %v257
        %v2500 = vunpack.c.h.b16 %v257
        %v2501 = vunpack.c.l.b16 %v258
        %v2502 = vunpack.c.h.b16 %v258
        %v2503 = vunpack.c.l.b16 %v259
        %v2504 = vunpack.c.h.b16 %v259
        %v2505 = vunpack.c.l.b16 %v260
        %v2506 = vunpack.c.h.b16 %v260
        %v2507 = vunpack.c.l.b16 %v261
        %v2508 = vunpack.c.h.b16 %v261
        %v2509 = vunpack.c.l.b16 %v262
        %v2510 = vunpack.c.h.b16 %v262
        %v2511 = vunpack.c.l.b16 %v263
        %v2512 = vunpack.c.h.b16 %v263
        %v2513 = vpack.c.b16 %v2443, %v2433
        %v2514 = vpack.c.b16 %v2444, %v2434
        %v2515 = vpack.c.b16 %v2445, %v2435
        %v2516 = vpack.c.b16 %v2446, %v2436
        %v2517 = vpack.c.b16 %v2447, %v2437
        %v2518 = vpack.c.b16 %v2448, %v2438
        %v2519 = vpack.c.b16 %v2449, %v2439
        %v2520 = vpack.c.b16 %v2450, %v2440
        %v2521 = vpack.c.b16 %v2451, %v2441
        %v2522 = vpack.c.b16 %v2452, %v2442
        %v2523 = vpack.c.b16 %v2463, %v2453
        %v2524 = vpack.c.b16 %v2464, %v2454
        %v2525 = vpack.c.b16 %v2465, %v2455
        %v2526 = vpack.c.b16 %v2466, %v2456
        %v2527 = vpack.c.b16 %v2467, %v2457
        %v2528 = vpack.c.b16 %v2468, %v2458
        %v2529 = vpack.c.b16 %v2469, %v2459
        %v2530 = vpack.c.b16 %v2470, %v2460
        %v2531 = vpack.c.b16 %v2471, %v2461
        %v2532 = vpack.c.b16 %v2472, %v2462
        %v2533 = vpack.c.b16 %v2483, %v2473
        %v2534 = vpack.c.b16 %v2484, %v2474
        %v2535 = vpack.c.b16 %v2485, %v2475
        %v2536 = vpack.c.b16 %v2486, %v2476
        %v2537 = vpack.c.b16 %v2487, %v2477
        %v2538 = vpack.c.b16 %v2488, %v2478
        %v2539 = vpack.c.b16 %v2489, %v2479
        %v2540 = vpack.c.b16 %v2490, %v2480
        %v2541 = vpack.c.b16 %v2491, %v2481
        %v2542 = vpack.c.b16 %v2492, %v2482
        %v2543 = vpack.c.b16 %v2503, %v2493
        %v2544 = vpack.c.b16 %v2504, %v2494
        %v2545 = vpack.c.b16 %v2505, %v2495
        %v2546 = vpack.c.b16 %v2506, %v2496
        %v2547 = vpack.c.b16 %v2507, %v2497
        %v2548 = vpack.c.b16 %v2508, %v2498
        %v2549 = vpack.c.b16 %v2509, %v2499
        %v2550 = vpack.c.b16 %v2510, %v2500
        %v2551 = vpack.c.b16 %v2511, %v2501
        %v2552 = vpack.c.b16 %v2512, %v2502
        %v2753 = vunpack.c.l.b16 %v308
        %v2754 = vunpack.c.l.b16 %v309
        %v2755 = vunpack.c.l.b16 %v310
        %v2756 = vunpack.c.l.b16 %v311
        %v2757 = vunpack.c.l.b16 %v312
        %v2758 = vunpack.c.l.b16 %v313
        %v2759 = vunpack.c.l.b16 %v314
        %v2760 = vunpack.c.l.b16 %v315
        %v2761 = vunpack.c.l.b16 %v316
        %v2762 = vunpack.c.l.b16 %v317
        %v2763 = vunpack.c.l.b16 %v318
        %v2764 = vunpack.c.l.b16 %v319
        %v2765 = vunpack.c.l.b16 %v320
        %v2766 = vunpack.c.l.b16 %v321
        %v2767 = vunpack.c.l.b16 %v322
        %v2768 = vunpack.c.l.b16 %v323
        %v2769 = vunpack.c.l.b16 %v324
        %v2770 = vunpack.c.l.b16 %v325
        %v2771 = vunpack.c.l.b16 %v326
        %v2772 = vunpack.c.l.b16 %v327
        %v2773 = vunpack.c.l.b16 %v328
        %v2774 = vunpack.c.l.b16 %v329
        %v2775 = vunpack.c.l.b16 %v330
        %v2776 = vunpack.c.l.b16 %v331
        %v2777 = vunpack.c.l.b16 %v332
        %v2778 = vunpack.c.l.b16 %v333
        %v2779 = vunpack.c.l.b16 %v334
        %v2780 = vunpack.c.l.b16 %v335
        %v2781 = vunpack.c.l.b16 %v336
        %v2782 = vunpack.c.l.b16 %v337
        %v2783 = vunpack.c.l.b16 %v338
        %v2784 = vunpack.c.l.b16 %v339
        %v2785 = vunpack.c.l.b16 %v340
        %v2786 = vunpack.c.l.b16 %v341
        %v2787 = vunpack.c.l.b16 %v342
        %v2788 = vunpack.c.l.b16 %v343
        %v2789 = vunpack.c.l.b16 %v344
        %v2790 = vunpack.c.l.b16 %v345
        %v2791 = vunpack.c.l.b16 %v346
        %v2792 = vunpack.c.l.b16 %v347
        %v2793 = vunpack.c.l.b16 %v348
        %v2794 = vunpack.c.l.b16 %v349
        %v2795 = vunpack.c.l.b16 %v350
        %v2796 = vunpack.c.l.b16 %v351
        %v2797 = vunpack.c.l.b16 %v352
        %v2798 = vunpack.c.l.b16 %v353
        %v2799 = vunpack.c.l.b16 %v354
        %v2800 = vunpack.c.l.b16 %v355
        %v2801 = vunpack.c.l.b16 %v356
        %v2802 = vunpack.c.l.b16 %v357
        %v2803 = vunpack.c.l.b16 %v358
        %v2804 = vunpack.c.l.b16 %v359
        %v2805 = vunpack.c.l.b16 %v360
        %v2806 = vunpack.c.l.b16 %v361
        %v2807 = vunpack.c.l.b16 %v362
        %v2808 = vunpack.c.l.b16 %v363
        %v2809 = vunpack.c.l.b16 %v364
        %v2810 = vunpack.c.l.b16 %v365
        %v2811 = vunpack.c.l.b16 %v366
        %v2812 = vunpack.c.l.b16 %v367
        %v2813 = vunpack.c.l.b16 %v368
        %v2814 = vunpack.c.l.b16 %v369
        %v2815 = vunpack.c.l.b16 %v370
        %v2816 = vunpack.c.l.b16 %v371
        %v2817 = vunpack.c.l.b16 %v372
        %v2818 = vunpack.c.l.b16 %v373
        %v2819 = vunpack.c.l.b16 %v374
        %v2820 = vunpack.c.l.b16 %v375
        %v2821 = vunpack.c.l.b16 %v376
        %v2822 = vunpack.c.l.b16 %v377
        %v2823 = vunpack.c.l.b16 %v378
        %v2824 = vunpack.c.l.b16 %v379
        %v2825 = vunpack.c.l.b16 %v380
        %v2826 = vunpack.c.l.b16 %v381
        %v2827 = vunpack.c.l.b16 %v382
        %v2828 = vunpack.c.l.b16 %v383
        %v2829 = vunpack.c.l.b16 %v384
        %v2830 = vunpack.c.l.b16 %v385
        %v2831 = vunpack.c.l.b16 %v386
        %v2832 = vunpack.c.l.b16 %v387
        %v2833 = vunpack.c.l.b16 %v388
        %v2834 = vunpack.c.l.b16 %v389
        %v2835 = vunpack.c.l.b16 %v390
        %v2836 = vunpack.c.l.b16 %v391
        %v2837 = vunpack.c.l.b16 %v392
        %v2838 = vunpack.c.l.b16 %v393
        %v2839 = vunpack.c.l.b16 %v394
        %v2840 = vunpack.c.l.b16 %v395
        %v2841 = vunpack.c.l.b16 %v396
        %v2842 = vunpack.c.l.b16 %v397
        %v2843 = vunpack.c.l.b16 %v398
        %v2844 = vunpack.c.l.b16 %v399
        %v2845 = vunpack.c.l.b16 %v400
        %v2846 = vunpack.c.l.b16 %v401
        %v2847 = vunpack.c.l.b16 %v402
        %v2848 = vunpack.c.l.b16 %v403
        %v2849 = vunpack.c.l.b16 %v404
        %v2850 = vunpack.c.l.b16 %v405
        %v2851 = vunpack.c.l.b16 %v406
        %v2852 = vunpack.c.l.b16 %v407
        %v2853 = vunpack.c.l.b16 %v408
        %v2854 = vunpack.c.l.b16 %v409
        %v2855 = vunpack.c.l.b16 %v410
        %v2856 = vunpack.c.l.b16 %v411
        %v2857 = vunpack.c.l.b16 %v412
        %v2858 = vunpack.c.l.b16 %v413
        %v2859 = vunpack.c.l.b16 %v414
        %v2860 = vunpack.c.l.b16 %v415
        %v2861 = vunpack.c.l.b16 %v416
        %v2862 = vunpack.c.l.b16 %v417
        %v2863 = vunpack.c.l.b16 %v418
        %v2864 = vunpack.c.l.b16 %v419
        %v2865 = vunpack.c.l.b16 %v420
        %v2866 = vunpack.c.l.b16 %v421
        %v2867 = vunpack.c.l.b16 %v422
        %v2868 = vunpack.c.l.b16 %v423
        %v2869 = vunpack.c.l.b16 %v424
        %v2870 = vunpack.c.l.b16 %v425
        %v2871 = vunpack.c.l.b16 %v426
        %v2872 = vunpack.c.l.b16 %v427
        %v2873 = vunpack.c.l.b16 %v428
        %v2874 = vunpack.c.l.b16 %v429
        %v2875 = vunpack.c.l.b16 %v430
        %v2876 = vunpack.c.l.b16 %v431
        %v2877 = vunpack.c.l.b16 %v432
        %v2878 = vunpack.c.l.b16 %v433
        %v2879 = vunpack.c.l.b16 %v434
        %v2880 = vunpack.c.l.b16 %v435
        %v2881 = vunpack.c.l.b16 %v436
        %v2882 = vunpack.c.l.b16 %v437
        %v2883 = vunpack.c.l.b16 %v438
        %v2884 = vunpack.c.l.b16 %v439
        %v2885 = vunpack.c.l.b16 %v440
        %v2886 = vunpack.c.l.b16 %v441
        %v2887 = vunpack.c.l.b16 %v442
        %v2888 = vunpack.c.l.b16 %v443
        %v2889 = vunpack.c.l.b16 %v444
        %v2890 = vunpack.c.l.b16 %v445
        %v2891 = vunpack.c.l.b16 %v446
        %v2892 = vunpack.c.l.b16 %v447
        %v2893 = vunpack.c.l.b16 %v448
        %v2894 = vunpack.c.l.b16 %v449
        %v2895 = vunpack.c.l.b16 %v450
        %v2896 = vunpack.c.l.b16 %v451
        %v2897 = vunpack.c.l.b16 %v452
        %v2898 = vunpack.c.l.b16 %v453
        %v2899 = vunpack.c.l.b16 %v454
        %v2900 = vunpack.c.l.b16 %v455
        %v2901 = vunpack.c.l.b16 %v456
        %v2902 = vunpack.c.l.b16 %v457
        %v2903 = vunpack.c.l.b16 %v458
        %v2904 = vunpack.c.l.b16 %v459
        %v2905 = vunpack.c.l.b16 %v460
        %v2906 = vunpack.c.l.b16 %v461
        %v2907 = vunpack.c.l.b16 %v462
        %v2908 = vunpack.c.l.b16 %v463
        %v2909 = vunpack.c.l.b16 %v464
        %v2910 = vunpack.c.l.b16 %v465
        %v2911 = vunpack.c.l.b16 %v466
        %v2912 = vunpack.c.l.b16 %v467
        %v2913 = vpack.c.b16 %v2754, %v2753
        %v2914 = vpack.c.b16 %v2756, %v2755
        %v2915 = vpack.c.b16 %v2758, %v2757
        %v2916 = vpack.c.b16 %v2760, %v2759
        %v2917 = vpack.c.b16 %v2762, %v2761
        %v2918 = vpack.c.b16 %v2764, %v2763
        %v2919 = vpack.c.b16 %v2766, %v2765
        %v2920 = vpack.c.b16 %v2768, %v2767
        %v2921 = vpack.c.b16 %v2770, %v2769
        %v2922 = vpack.c.b16 %v2772, %v2771
        %v2923 = vpack.c.b16 %v2774, %v2773
        %v2924 = vpack.c.b16 %v2776, %v2775
        %v2925 = vpack.c.b16 %v2778, %v2777
        %v2926 = vpack.c.b16 %v2780, %v2779
        %v2927 = vpack.c.b16 %v2782, %v2781
        %v2928 = vpack.c.b16 %v2784, %v2783
        %v2929 = vpack.c.b16 %v2786, %v2785
        %v2930 = vpack.c.b16 %v2788, %v2787
        %v2931 = vpack.c.b16 %v2790, %v2789
        %v2932 = vpack.c.b16 %v2792, %v2791
        %v2933 = vpack.c.b16 %v2794, %v2793
        %v2934 = vpack.c.b16 %v2796, %v2795
        %v2935 = vpack.c.b16 %v2798, %v2797
        %v2936 = vpack.c.b16 %v2800, %v2799
        %v2937 = vpack.c.b16 %v2802, %v2801
        %v2938 = vpack.c.b16 %v2804, %v2803
        %v2939 = vpack.c.b16 %v2806, %v2805
        %v2940 = vpack.c.b16 %v2808, %v2807
        %v2941 = vpack.c.b16 %v2810, %v2809
        %v2942 = vpack.c.b16 %v2812, %v2811
        %v2943 = vpack.c.b16 %v2814, %v2813
        %v2944 = vpack.c.b16 %v2816, %v2815
        %v2945 = vpack.c.b16 %v2818, %v2817
        %v2946 = vpack.c.b16 %v2820, %v2819
        %v2947 = vpack.c.b16 %v2822, %v2821
        %v2948 = vpack.c.b16 %v2824, %v2823
        %v2949 = vpack.c.b16 %v2826, %v2825
        %v2950 = vpack.c.b16 %v2828, %v2827
        %v2951 = vpack.c.b16 %v2830, %v2829
        %v2952 = vpack.c.b16 %v2832, %v2831
        %v2953 = vpack.c.b16 %v2834, %v2833
        %v2954 = vpack.c.b16 %v2836, %v2835
        %v2955 = vpack.c.b16 %v2838, %v2837
        %v2956 = vpack.c.b16 %v2840, %v2839
        %v2957 = vpack.c.b16 %v2842, %v2841
        %v2958 = vpack.c.b16 %v2844, %v2843
        %v2959 = vpack.c.b16 %v2846, %v2845
        %v2960 = vpack.c.b16 %v2848, %v2847
        %v2961 = vpack.c.b16 %v2850, %v2849
        %v2962 = vpack.c.b16 %v2852, %v2851
        %v2963 = vpack.c.b16 %v2854, %v2853
        %v2964 = vpack.c.b16 %v2856, %v2855
        %v2965 = vpack.c.b16 %v2858, %v2857
        %v2966 = vpack.c.b16 %v2860, %v2859
        %v2967 = vpack.c.b16 %v2862, %v2861
        %v2968 = vpack.c.b16 %v2864, %v2863
        %v2969 = vpack.c.b16 %v2866, %v2865
        %v2970 = vpack.c.b16 %v2868, %v2867
        %v2971 = vpack.c.b16 %v2870, %v2869
        %v2972 = vpack.c.b16 %v2872, %v2871
        %v2973 = vpack.c.b16 %v2874, %v2873
        %v2974 = vpack.c.b16 %v2876, %v2875
        %v2975 = vpack.c.b16 %v2878, %v2877
        %v2976 = vpack.c.b16 %v2880, %v2879
        %v2977 = vpack.c.b16 %v2882, %v2881
        %v2978 = vpack.c.b16 %v2884, %v2883
        %v2979 = vpack.c.b16 %v2886, %v2885
        %v2980 = vpack.c.b16 %v2888, %v2887
        %v2981 = vpack.c.b16 %v2890, %v2889
        %v2982 = vpack.c.b16 %v2892, %v2891
        %v2983 = vpack.c.b16 %v2894, %v2893
        %v2984 = vpack.c.b16 %v2896, %v2895
        %v2985 = vpack.c.b16 %v2898, %v2897
        %v2986 = vpack.c.b16 %v2900, %v2899
        %v2987 = vpack.c.b16 %v2902, %v2901
        %v2988 = vpack.c.b16 %v2904, %v2903
        %v2989 = vpack.c.b16 %v2906, %v2905
        %v2990 = vpack.c.b16 %v2908, %v2907
        %v2991 = vpack.c.b16 %v2910, %v2909
        %v2992 = vpack.c.b16 %v2912, %v2911
        %3073 = vmatpush.bf16.msra.mxu0 %v2920
        %3074 = vmatpush.bf16.msra.mxu0 %v2919
        %3075 = vmatpush.bf16.msra.mxu0 %v2918
        %3076 = vmatpush.bf16.msra.mxu0 %v2917
        %3077 = vmatpush.bf16.msra.mxu0 %v2916
        %3078 = vmatpush.bf16.msra.mxu0 %v2915
        %3079 = vmatpush.bf16.msra.mxu0 %v2914
        %3080 = vmatpush.bf16.msra.mxu0 %v2913
        %3081 = vmatmul.bf16.gmra.mxu0 %v2513
        %v3082 = vpop.f32.mrf.mxu0
        %v3083 = vadd.f32 0.0, %v3082
        %v3084 = vpop.f32.mrf.mxu0
        %v3085 = vadd.f32 0.0, %v3084
        %3086 = vmatmul.bf16.gmra.mxu0 %v2523
        %v3087 = vpop.f32.mrf.mxu0
        %v3088 = vadd.f32 0.0, %v3087
        %v3089 = vpop.f32.mrf.mxu0
        %v3090 = vadd.f32 0.0, %v3089
        %3091 = vmatmul.bf16.gmra.mxu0 %v2533
        %v3092 = vpop.f32.mrf.mxu0
        %v3093 = vadd.f32 0.0, %v3092
        %v3094 = vpop.f32.mrf.mxu0
        %v3095 = vadd.f32 0.0, %v3094
        %3096 = vmatmul.bf16.gmra.mxu0 %v2543
        %v3097 = vpop.f32.mrf.mxu0
        %v3098 = vadd.f32 0.0, %v3097
        %v3099 = vpop.f32.mrf.mxu0
        %v3100 = vadd.f32 0.0, %v3099
        %3101 = vdwg.mxu0
        %3102 = vmatpush.bf16.msra.mxu0 %v2928
        %3103 = vmatpush.bf16.msra.mxu0 %v2927
        %3104 = vmatpush.bf16.msra.mxu0 %v2926
        %3105 = vmatpush.bf16.msra.mxu0 %v2925
        %3106 = vmatpush.bf16.msra.mxu0 %v2924
        %3107 = vmatpush.bf16.msra.mxu0 %v2923
        %3108 = vmatpush.bf16.msra.mxu0 %v2922
        %3109 = vmatpush.bf16.msra.mxu0 %v2921
        %3110 = vmatmul.bf16.gmra.mxu0 %v2514
        %v3111 = vpop.f32.mrf.mxu0
        %v3112 = vadd.f32 %v3083, %v3111
        %v3113 = vpop.f32.mrf.mxu0
        %v3114 = vadd.f32 %v3085, %v3113
        %3115 = vmatmul.bf16.gmra.mxu0 %v2524
        %v3116 = vpop.f32.mrf.mxu0
        %v3117 = vadd.f32 %v3088, %v3116
        %v3118 = vpop.f32.mrf.mxu0
        %v3119 = vadd.f32 %v3090, %v3118
        %3120 = vmatmul.bf16.gmra.mxu0 %v2534
        %v3121 = vpop.f32.mrf.mxu0
        %v3122 = vadd.f32 %v3093, %v3121
        %v3123 = vpop.f32.mrf.mxu0
        %v3124 = vadd.f32 %v3095, %v3123
        %3125 = vmatmul.bf16.gmra.mxu0 %v2544
        %v3126 = vpop.f32.mrf.mxu0
        %v3127 = vadd.f32 %v3098, %v3126
        %v3128 = vpop.f32.mrf.mxu0
        %v3129 = vadd.f32 %v3100, %v3128
        %3130 = vdwg.mxu0
        %3131 = vmatpush.bf16.msra.mxu0 %v2936
        %3132 = vmatpush.bf16.msra.mxu0 %v2935
        %3133 = vmatpush.bf16.msra.mxu0 %v2934
        %3134 = vmatpush.bf16.msra.mxu0 %v2933
        %3135 = vmatpush.bf16.msra.mxu0 %v2932
        %3136 = vmatpush.bf16.msra.mxu0 %v2931
        %3137 = vmatpush.bf16.msra.mxu0 %v2930
        %3138 = vmatpush.bf16.msra.mxu0 %v2929
        %3139 = vmatmul.bf16.gmra.mxu0 %v2515
        %v3140 = vpop.f32.mrf.mxu0
        %v3141 = vadd.f32 %v3112, %v3140
        %v3142 = vpop.f32.mrf.mxu0
        %v3143 = vadd.f32 %v3114, %v3142
        %3144 = vmatmul.bf16.gmra.mxu0 %v2525
        %v3145 = vpop.f32.mrf.mxu0
        %v3146 = vadd.f32 %v3117, %v3145
        %v3147 = vpop.f32.mrf.mxu0
        %v3148 = vadd.f32 %v3119, %v3147
        %3149 = vmatmul.bf16.gmra.mxu0 %v2535
        %v3150 = vpop.f32.mrf.mxu0
        %v3151 = vadd.f32 %v3122, %v3150
        %v3152 = vpop.f32.mrf.mxu0
        %v3153 = vadd.f32 %v3124, %v3152
        %3154 = vmatmul.bf16.gmra.mxu0 %v2545
        %v3155 = vpop.f32.mrf.mxu0
        %v3156 = vadd.f32 %v3127, %v3155
        %v3157 = vpop.f32.mrf.mxu0
        %v3158 = vadd.f32 %v3129, %v3157
        %3159 = vdwg.mxu0
        %3160 = vmatpush.bf16.msra.mxu0 %v2944
        %3161 = vmatpush.bf16.msra.mxu0 %v2943
        %3162 = vmatpush.bf16.msra.mxu0 %v2942
        %3163 = vmatpush.bf16.msra.mxu0 %v2941
        %3164 = vmatpush.bf16.msra.mxu0 %v2940
        %3165 = vmatpush.bf16.msra.mxu0 %v2939
        %3166 = vmatpush.bf16.msra.mxu0 %v2938
        %3167 = vmatpush.bf16.msra.mxu0 %v2937
        %3168 = vmatmul.bf16.gmra.mxu0 %v2516
        %v3169 = vpop.f32.mrf.mxu0
        %v3170 = vadd.f32 %v3141, %v3169
        %v3171 = vpop.f32.mrf.mxu0
        %v3172 = vadd.f32 %v3143, %v3171
        %3173 = vmatmul.bf16.gmra.mxu0 %v2526
        %v3174 = vpop.f32.mrf.mxu0
        %v3175 = vadd.f32 %v3146, %v3174
        %v3176 = vpop.f32.mrf.mxu0
        %v3177 = vadd.f32 %v3148, %v3176
        %3178 = vmatmul.bf16.gmra.mxu0 %v2536
        %v3179 = vpop.f32.mrf.mxu0
        %v3180 = vadd.f32 %v3151, %v3179
        %v3181 = vpop.f32.mrf.mxu0
        %v3182 = vadd.f32 %v3153, %v3181
        %3183 = vmatmul.bf16.gmra.mxu0 %v2546
        %v3184 = vpop.f32.mrf.mxu0
        %v3185 = vadd.f32 %v3156, %v3184
        %v3186 = vpop.f32.mrf.mxu0
        %v3187 = vadd.f32 %v3158, %v3186
        %3188 = vdwg.mxu0
        %3189 = vmatpush.bf16.msra.mxu0 %v2952
        %3190 = vmatpush.bf16.msra.mxu0 %v2951
        %3191 = vmatpush.bf16.msra.mxu0 %v2950
        %3192 = vmatpush.bf16.msra.mxu0 %v2949
        %3193 = vmatpush.bf16.msra.mxu0 %v2948
        %3194 = vmatpush.bf16.msra.mxu0 %v2947
        %3195 = vmatpush.bf16.msra.mxu0 %v2946
        %3196 = vmatpush.bf16.msra.mxu0 %v2945
        %3197 = vmatmul.bf16.gmra.mxu0 %v2517
        %v3198 = vpop.f32.mrf.mxu0
        %v3199 = vadd.f32 %v3170, %v3198
        %v3200 = vpop.f32.mrf.mxu0
        %v3201 = vadd.f32 %v3172, %v3200
        %3202 = vmatmul.bf16.gmra.mxu0 %v2527
        %v3203 = vpop.f32.mrf.mxu0
        %v3204 = vadd.f32 %v3175, %v3203
        %v3205 = vpop.f32.mrf.mxu0
        %v3206 = vadd.f32 %v3177, %v3205
        %3207 = vmatmul.bf16.gmra.mxu0 %v2537
        %v3208 = vpop.f32.mrf.mxu0
        %v3209 = vadd.f32 %v3180, %v3208
        %v3210 = vpop.f32.mrf.mxu0
        %v3211 = vadd.f32 %v3182, %v3210
        %3212 = vmatmul.bf16.gmra.mxu0 %v2547
        %v3213 = vpop.f32.mrf.mxu0
        %v3214 = vadd.f32 %v3185, %v3213
        %v3215 = vpop.f32.mrf.mxu0
        %v3216 = vadd.f32 %v3187, %v3215
        %3217 = vdwg.mxu0
        %3218 = vmatpush.bf16.msra.mxu0 %v2960
        %3219 = vmatpush.bf16.msra.mxu0 %v2959
        %3220 = vmatpush.bf16.msra.mxu0 %v2958
        %3221 = vmatpush.bf16.msra.mxu0 %v2957
        %3222 = vmatpush.bf16.msra.mxu0 %v2956
        %3223 = vmatpush.bf16.msra.mxu0 %v2955
        %3224 = vmatpush.bf16.msra.mxu0 %v2954
        %3225 = vmatpush.bf16.msra.mxu0 %v2953
        %3226 = vmatmul.bf16.gmra.mxu0 %v2518
        %v3227 = vpop.f32.mrf.mxu0
        %v3228 = vadd.f32 %v3199, %v3227
        %v3229 = vpop.f32.mrf.mxu0
        %v3230 = vadd.f32 %v3201, %v3229
        %3231 = vmatmul.bf16.gmra.mxu0 %v2528
        %v3232 = vpop.f32.mrf.mxu0
        %v3233 = vadd.f32 %v3204, %v3232
        %v3234 = vpop.f32.mrf.mxu0
        %v3235 = vadd.f32 %v3206, %v3234
        %3236 = vmatmul.bf16.gmra.mxu0 %v2538
        %v3237 = vpop.f32.mrf.mxu0
        %v3238 = vadd.f32 %v3209, %v3237
        %v3239 = vpop.f32.mrf.mxu0
        %v3240 = vadd.f32 %v3211, %v3239
        %3241 = vmatmul.bf16.gmra.mxu0 %v2548
        %v3242 = vpop.f32.mrf.mxu0
        %v3243 = vadd.f32 %v3214, %v3242
        %v3244 = vpop.f32.mrf.mxu0
        %v3245 = vadd.f32 %v3216, %v3244
        %3246 = vdwg.mxu0
        %3247 = vmatpush.bf16.msra.mxu0 %v2968
        %3248 = vmatpush.bf16.msra.mxu0 %v2967
        %3249 = vmatpush.bf16.msra.mxu0 %v2966
        %3250 = vmatpush.bf16.msra.mxu0 %v2965
        %3251 = vmatpush.bf16.msra.mxu0 %v2964
        %3252 = vmatpush.bf16.msra.mxu0 %v2963
        %3253 = vmatpush.bf16.msra.mxu0 %v2962
        %3254 = vmatpush.bf16.msra.mxu0 %v2961
        %3255 = vmatmul.bf16.gmra.mxu0 %v2519
        %v3256 = vpop.f32.mrf.mxu0
        %v3257 = vadd.f32 %v3228, %v3256
        %v3258 = vpop.f32.mrf.mxu0
        %v3259 = vadd.f32 %v3230, %v3258
        %3260 = vmatmul.bf16.gmra.mxu0 %v2529
        %v3261 = vpop.f32.mrf.mxu0
        %v3262 = vadd.f32 %v3233, %v3261
        %v3263 = vpop.f32.mrf.mxu0
        %v3264 = vadd.f32 %v3235, %v3263
        %3265 = vmatmul.bf16.gmra.mxu0 %v2539
        %v3266 = vpop.f32.mrf.mxu0
        %v3267 = vadd.f32 %v3238, %v3266
        %v3268 = vpop.f32.mrf.mxu0
        %v3269 = vadd.f32 %v3240, %v3268
        %3270 = vmatmul.bf16.gmra.mxu0 %v2549
        %v3271 = vpop.f32.mrf.mxu0
        %v3272 = vadd.f32 %v3243, %v3271
        %v3273 = vpop.f32.mrf.mxu0
        %v3274 = vadd.f32 %v3245, %v3273
        %3275 = vdwg.mxu0
        %3276 = vmatpush.bf16.msra.mxu0 %v2976
        %3277 = vmatpush.bf16.msra.mxu0 %v2975
        %3278 = vmatpush.bf16.msra.mxu0 %v2974
        %3279 = vmatpush.bf16.msra.mxu0 %v2973
        %3280 = vmatpush.bf16.msra.mxu0 %v2972
        %3281 = vmatpush.bf16.msra.mxu0 %v2971
        %3282 = vmatpush.bf16.msra.mxu0 %v2970
        %3283 = vmatpush.bf16.msra.mxu0 %v2969
        %3284 = vmatmul.bf16.gmra.mxu0 %v2520
        %v3285 = vpop.f32.mrf.mxu0
        %v3286 = vadd.f32 %v3257, %v3285
        %v3287 = vpop.f32.mrf.mxu0
        %v3288 = vadd.f32 %v3259, %v3287
        %3289 = vmatmul.bf16.gmra.mxu0 %v2530
        %v3290 = vpop.f32.mrf.mxu0
        %v3291 = vadd.f32 %v3262, %v3290
        %v3292 = vpop.f32.mrf.mxu0
        %v3293 = vadd.f32 %v3264, %v3292
        %3294 = vmatmul.bf16.gmra.mxu0 %v2540
        %v3295 = vpop.f32.mrf.mxu0
        %v3296 = vadd.f32 %v3267, %v3295
        %v3297 = vpop.f32.mrf.mxu0
        %v3298 = vadd.f32 %v3269, %v3297
        %3299 = vmatmul.bf16.gmra.mxu0 %v2550
        %v3300 = vpop.f32.mrf.mxu0
        %v3301 = vadd.f32 %v3272, %v3300
        %v3302 = vpop.f32.mrf.mxu0
        %v3303 = vadd.f32 %v3274, %v3302
        %3304 = vdwg.mxu0
        %3305 = vmatpush.bf16.msra.mxu0 %v2984
        %3306 = vmatpush.bf16.msra.mxu0 %v2983
        %3307 = vmatpush.bf16.msra.mxu0 %v2982
        %3308 = vmatpush.bf16.msra.mxu0 %v2981
        %3309 = vmatpush.bf16.msra.mxu0 %v2980
        %3310 = vmatpush.bf16.msra.mxu0 %v2979
        %3311 = vmatpush.bf16.msra.mxu0 %v2978
        %3312 = vmatpush.bf16.msra.mxu0 %v2977
        %3313 = vmatmul.bf16.gmra.mxu0 %v2521
        %v3314 = vpop.f32.mrf.mxu0
        %v3315 = vadd.f32 %v3286, %v3314
        %v3316 = vpop.f32.mrf.mxu0
        %v3317 = vadd.f32 %v3288, %v3316
        %3318 = vmatmul.bf16.gmra.mxu0 %v2531
        %v3319 = vpop.f32.mrf.mxu0
        %v3320 = vadd.f32 %v3291, %v3319
        %v3321 = vpop.f32.mrf.mxu0
        %v3322 = vadd.f32 %v3293, %v3321
        %3323 = vmatmul.bf16.gmra.mxu0 %v2541
        %v3324 = vpop.f32.mrf.mxu0
        %v3325 = vadd.f32 %v3296, %v3324
        %v3326 = vpop.f32.mrf.mxu0
        %v3327 = vadd.f32 %v3298, %v3326
        %3328 = vmatmul.bf16.gmra.mxu0 %v2551
        %v3329 = vpop.f32.mrf.mxu0
        %v3330 = vadd.f32 %v3301, %v3329
        %v3331 = vpop.f32.mrf.mxu0
        %v3332 = vadd.f32 %v3303, %v3331
        %3333 = vdwg.mxu0
        %3334 = vmatpush.bf16.msra.mxu0 %v2992
        %3335 = vmatpush.bf16.msra.mxu0 %v2991
        %3336 = vmatpush.bf16.msra.mxu0 %v2990
        %3337 = vmatpush.bf16.msra.mxu0 %v2989
        %3338 = vmatpush.bf16.msra.mxu0 %v2988
        %3339 = vmatpush.bf16.msra.mxu0 %v2987
        %3340 = vmatpush.bf16.msra.mxu0 %v2986
        %3341 = vmatpush.bf16.msra.mxu0 %v2985
        %3342 = vmatmul.bf16.gmra.mxu0 %v2522
        %v3343 = vpop.f32.mrf.mxu0
        %v3344 = vadd.f32 %v3315, %v3343
        %v3345 = vpop.f32.mrf.mxu0
        %v3346 = vadd.f32 %v3317, %v3345
        %3347 = vmatmul.bf16.gmra.mxu0 %v2532
        %v3348 = vpop.f32.mrf.mxu0
        %v3349 = vadd.f32 %v3320, %v3348
        %v3350 = vpop.f32.mrf.mxu0
        %v3351 = vadd.f32 %v3322, %v3350
        %3352 = vmatmul.bf16.gmra.mxu0 %v2542
        %v3353 = vpop.f32.mrf.mxu0
        %v3354 = vadd.f32 %v3325, %v3353
        %v3355 = vpop.f32.mrf.mxu0
        %v3356 = vadd.f32 %v3327, %v3355
        %3357 = vmatmul.bf16.gmra.mxu0 %v2552
        %v3358 = vpop.f32.mrf.mxu0
        %v3359 = vadd.f32 %v3330, %v3358
        %v3360 = vpop.f32.mrf.mxu0
        %v3361 = vadd.f32 %v3332, %v3360
        %3362 = vdwg.mxu0
        %v3363 = vadd.f32 %v3344, %v3354
        %v3364 = vadd.f32 %v3346, %v3356
        %v3365 = vadd.f32 %v3349, %v3359
        %v3366 = vadd.f32 %v3351, %v3361
        %3368 = vset.pattern.permute.xlu0 0
        %3369 = vperm.xlu0 %3368, %v2362
        %v3370 = vpop.permute.xlu0 %3369
        %3373 = vset.pattern.permute.xlu0 0
        %3374 = vperm.xlu0 %3373, %v2372
        %v3375 = vpop.permute.xlu0 %3374
        %3378 = vset.pattern.permute.xlu0 0
        %3379 = vperm.xlu0 %3378, %v2382
        %v3380 = vpop.permute.xlu0 %3379
        %3383 = vset.pattern.permute.xlu0 0
        %3384 = vperm.xlu0 %3383, %v2392
        %v3385 = vpop.permute.xlu0 %3384
        %v3387 = vmul.f32 %v3370, %v3363
        %v3388 = vmul.f32 %v3375, %v3364
        %v3389 = vmul.f32 %v3380, %v3365
        %v3390 = vmul.f32 %v3385, %v3366
        %v3391 = vsel %vm628, %v3387, 0.0
        %v3392 = vsel %vm628, %v3388, 0.0
        %v3393 = vadd.f32 %v3391, %v3392
        %v3394 = vsel %vm628, %v3389, 0.0
        %v3395 = vadd.f32 %v3393, %v3394
        %v3396 = vsel %vm628, %v3390, 0.0
        %v3397 = vadd.f32 %v3395, %v3396
        %v3398 = vrot.slane %v3397, 4
        %v3399 = vadd.f32 %v3397, %v3398
        %v3400 = vrot.slane %v3399, 2
        %v3401 = vadd.f32 %v3399, %v3400
        %v3402 = vrot.slane %v3401, 1
        %v3403 = vadd.f32 %v3401, %v3402
        %v3404 = vmul.f32 %v2362, %v2329
        %v3405 = vmul.f32 %v2372, %v2330
        %v3406 = vmul.f32 %v2382, %v2331
        %v3407 = vmul.f32 %v2392, %v2332
        %v3408 = vmul.f32 %v3404, %v304
        %v3409 = vmul.f32 %v3405, %v305
        %v3410 = vmul.f32 %v3406, %v306
        %v3411 = vmul.f32 %v3407, %v307
        %vm3412 = vcmask 7168
        %v3413 = vsel %vm3412, %v3408, 0.0
        %v3414 = vsel %vm3412, %v3409, 0.0
        %v3415 = vadd.f32 %v3413, %v3414
        %v3416 = vsel %vm3412, %v3410, 0.0
        %v3417 = vadd.f32 %v3415, %v3416
        %v3418 = vsel %vm3412, %v3411, 0.0
        %v3419 = vadd.f32 %v3417, %v3418
        %3420 = vadd.xlane.f32.xlu0 %v3419
        %v3421 = vpop.xlane.xlu0 %3420
        %v3422 = vrot.slane %v3421, 4
        %v3423 = vadd.f32 %v3421, %v3422
        %v3424 = vrot.slane %v3423, 2
        %v3425 = vadd.f32 %v3423, %v3424
        %v3426 = vrot.slane %v3425, 1
        %v3427 = vadd.f32 %v3425, %v3426
        %s3428 = vtos %v3427
        %s3429 = ssub.f32 %s223, %s3428
        %v3430 = vstv %s3429
        %v3431 = vadd.f32 %v3403, %v3430
        %vm3432 = vcmask 516096
        %3433 = vst.msk [vmem:[%s217] sm:$0x1] %vm3432, %v3431
        %s3434 = sand.u32 %s138, 1
        %s3435 = scalar_lea.sflag [#allocation4], %s3434
        %s3436 = sand.u32 %s138, 1
        %s3437 = scalar_lea.vmem [#allocation3], %s3436
        // Predicated region
        $region41: #{tpu_custom_call.1} parent=39 // pred_check
          %p3438 = pneg %p148
        $region42: #{tpu_custom_call.1} parent=39 // pred_check_branch
          %3440 = sbr.rel (%p3438) target = $region44
        $region43: #{tpu_custom_call.1} parent=39 // pred_region
          %3442 = vsyncadd %s3435, 0
          %s3443 = scalar_lea.hbm %s5, %s20
          %s3445 = sshll.u32 %s3437, 4
          %s3446 = int_to_ptr.vmem [resolvable:$true] %s3445
          %s3447 = sshll.u32 %s3443, 4
          %s3448 = int_to_ptr.hbm [resolvable:$true] %s3447
          %3450 = dma.vmem_to_hbm [thread:$0]  %s3446, 16, %s3448, %s3435
        $region44: #{tpu_custom_call.1} parent=39 // pred_fallthru
          _
      $region40: #{tpu_custom_call.1} parent=5 // pred_fallthru
        _
      %p3451 = scmp.le.s32.totalorder 2, %s15
      // Predicated region
      $region45: #{tpu_custom_call.1} parent=5 // pred_check
        %p3452 = pneg %p3451
      $region46: #{tpu_custom_call.1} parent=5 // pred_check_branch
        %3454 = sbr.rel (%p3452) target = $region48
      $region47: #{tpu_custom_call.1} parent=5 // pred_region
        %s3455 = ssub.s32 %s15, 2
        // Predicated region
        $region49: #{tpu_custom_call.1} parent=47 // pred_check
          %p3456 = pneg %p154
        $region50: #{tpu_custom_call.1} parent=47 // pred_check_branch
          %3458 = sbr.rel (%p3456) target = $region52
        $region51: #{tpu_custom_call.1} parent=47 // pred_region
          %s3459 = sand.u32 %s139, 1
          %s3460 = scalar_lea.sflag [#allocation4], %s3459
          %s3461 = sand.u32 %s139, 1
          %s3462 = scalar_lea.vmem [#allocation3], %s3461
          %3464 = dma.done %s3460, 16
        $region52: #{tpu_custom_call.1} parent=47 // pred_fallthru
          _
      $region48: #{tpu_custom_call.1} parent=5 // pred_fallthru
        _
    $region6: #{tpu_custom_call.1} parent=1 // loop_footer
      %s19 = sadd.s32 1, %s15
    $region7: #{tpu_custom_call.1} parent=1 // loop_footer_branch
      %14 = sbr.rel target = $region3
    $region8: #{tpu_custom_call.1} parent=1 // loop_exit
      _
    %3465 = vsyncpa [#allocation4], 1
    %s3466 = scalar_lea.sflag [#allocation4], 1
    %3467 = vsyncpa %s3466, 1

</llo_original>
